<compile_context>
chip_gen: v5e
topology: v5e:2x2
jax: 0.10.0
libtpu: 0.0.40
codegen_flags: <defaults>
</compile_context>

<pallas_src>
import jax
import jax.numpy as jnp
from jax.experimental import pallas as pl
from jax.experimental.pallas import tpu as pltpu


def _choose_block(total, preferred, multiple):
    """Largest block <= preferred that divides `total` and is a multiple of
    `multiple`; falls back to the full extent (always legal for a BlockSpec)."""
    if total <= preferred:
        return total
    for b in range(preferred, multiple - 1, -1):
        if total % b == 0 and b % multiple == 0:
            return b
    return total


def _encode_and_normalize(h_pre, b1b, w2q, w2k, b2qb, b2kb):
    """Shared epilogue: bias + ReLU + layer-2 (q & k halves) + L2 normalize.

    h_pre: (tm, 2H) f32 pre-activation of the packed layer-1 (no bias yet).
    Returns (zq, zk), each (tm, dim) f32, row-normalized.
    """
    H = w2q.shape[0]
    h = jnp.maximum(h_pre + b1b, 0.0).astype(w2q.dtype)          # bias + ReLU, bf16
    zq = jnp.dot(h[:, :H], w2q, preferred_element_type=jnp.float32) + b2qb
    zk = jnp.dot(h[:, H:], w2k, preferred_element_type=jnp.float32) + b2kb
    # F.normalize(dim=1): x / max(||x||_2, 1e-12) == x * rsqrt(max(ss, 1e-24))
    inv_q = jax.lax.rsqrt(jnp.maximum(jnp.sum(zq * zq, axis=-1, keepdims=True), 1e-24))
    inv_k = jax.lax.rsqrt(jnp.maximum(jnp.sum(zk * zk, axis=-1, keepdims=True), 1e-24))
    return zq * inv_q, zk * inv_k


def moco_single_pass_kernel(xq_ref, xk_ref, xa_ref, w1_ref, b1_ref,
                            w2q_ref, w2k_ref, b2q_ref, b2k_ref, out_ref):
    """Grid = (batch tiles,) ['parallel'].  Full D_in reduction in one pass;
    w1's block index is constant so it is DMA'd once for the whole call."""
    tm = xq_ref.shape[0]
    H2 = w1_ref.shape[1]
    dim = w2q_ref.shape[1]

    w1 = w1_ref[...]                               # (D_in, 2H) bf16, VMEM-resident
    w2q = w2q_ref[...]
    w2k = w2k_ref[...]
    # Hoist bias broadcasts out of the unrolled 3-view loop (no CSE of broadcast).
    b1b = jnp.broadcast_to(b1_ref[...], (tm, H2))
    b2qb = jnp.broadcast_to(b2q_ref[...], (tm, dim))
    b2kb = jnp.broadcast_to(b2k_ref[...], (tm, dim))

    for v, x_ref in enumerate((xq_ref, xk_ref, xa_ref)):
        h = jnp.dot(x_ref[...], w1, preferred_element_type=jnp.float32)  # bf16 x bf16 -> f32
        zq, zk = _encode_and_normalize(h, b1b, w2q, w2k, b2qb, b2kb)
        out_ref[v, :, :dim] = zq.astype(out_ref.dtype)
        out_ref[v, :, dim:] = zk.astype(out_ref.dtype)


def moco_ktiled_kernel(xq_ref, xk_ref, xa_ref, w1_ref, b1_ref,
                       w2q_ref, w2k_ref, b2q_ref, b2k_ref, out_ref, acc_ref):
    """Fallback for very large D_in.
    Grid = (batch tiles ['parallel'], D_in reduction tiles ['arbitrary'])."""
    kk = pl.program_id(1)

    @pl.when(kk == 0)
    def _init():
        acc_ref[...] = jnp.zeros_like(acc_ref)

    w1 = w1_ref[...]                               # (tk, 2H) bf16
    for v, x_ref in enumerate((xq_ref, xk_ref, xa_ref)):
        acc_ref[v, :, :] += jnp.dot(x_ref[...], w1, preferred_element_type=jnp.float32)

    @pl.when(kk == pl.num_programs(1) - 1)
    def _finalize():
        tm = xq_ref.shape[0]
        H2 = w1_ref.shape[1]
        dim = w2q_ref.shape[1]
        w2q = w2q_ref[...]
        w2k = w2k_ref[...]
        b1b = jnp.broadcast_to(b1_ref[...], (tm, H2))
        b2qb = jnp.broadcast_to(b2q_ref[...], (tm, dim))
        b2kb = jnp.broadcast_to(b2k_ref[...], (tm, dim))
        for v in range(3):
            zq, zk = _encode_and_normalize(acc_ref[v, :, :], b1b, w2q, w2k, b2qb, b2kb)
            out_ref[v, :, :dim] = zq.astype(out_ref.dtype)
            out_ref[v, :, dim:] = zk.astype(out_ref.dtype)


def moco_forward_fused(xq, xk, xa, w1p, b1p, w2q, w2k, b2q, b2k,
                       *, tm=None, tk=None):
    """xq/xk/xa: [B, D_in] bf16.  w1p: [D_in, 2H] bf16 (q|k packed).
    w2q/w2k: [H, dim] bf16.  b1p: [1, 2H] f32.  b2q/b2k: [1, dim] f32.
    Returns a single packed output [3, B, 2*dim] f32:
      out[v, :, :dim]  = normalized query-encoder features of view v
      out[v, :, dim:]  = normalized key-encoder   features of view v
    """
    B, D_in = xq.shape
    H2 = w1p.shape[1]            # 2 * hidden
    H = H2 // 2
    dim = w2q.shape[1]
    dim2 = 2 * dim

    # Batch tile: big tiles amortize per-step overhead, but keep >= 2 tiles when
    # B allows so both v7x TensorCores get work ('parallel' axis).
    if tm is None:
        if B >= 16:
            tm = _choose_block(B, min(512, max(8, B // 2)), 8)
        else:
            tm = B
    n_m = pl.cdiv(B, tm)

    w1_bytes = D_in * H2 * jnp.dtype(w1p.dtype).itemsize
    single_pass = (tk is None) and (w1_bytes <= 12 * 2 ** 20)

    out_sd = jax.ShapeDtypeStruct((3, B, dim2), jnp.float32)
    xdt = jnp.dtype(xq.dtype).itemsize
    wdt = jnp.dtype(w1p.dtype).itemsize

    if single_pass:
        tk_eff = D_in
        grid = (n_m,)
        dims = ("parallel",)
        kernel = moco_single_pass_kernel
        in_specs = [
            pl.BlockSpec((tm, D_in), lambda i: (i, 0)),      # im_q (bf16)
            pl.BlockSpec((tm, D_in), lambda i: (i, 0)),      # im_k
            pl.BlockSpec((tm, D_in), lambda i: (i, 0)),      # im_a
            pl.BlockSpec((D_in, H2), lambda i: (0, 0)),      # packed w1 (constant block)
            pl.BlockSpec((1, H2), lambda i: (0, 0)),         # packed b1
            pl.BlockSpec((H, dim), lambda i: (0, 0)),        # w2_q
            pl.BlockSpec((H, dim), lambda i: (0, 0)),        # w2_k
            pl.BlockSpec((1, dim), lambda i: (0, 0)),        # b2_q
            pl.BlockSpec((1, dim), lambda i: (0, 0)),        # b2_k
        ]
        out_specs = pl.BlockSpec((3, tm, dim2), lambda i: (0, i, 0))
        scratch_shapes = []
    else:
        tk_eff = tk if tk is not None else _choose_block(D_in, 2048, 128)
        n_k = pl.cdiv(D_in, tk_eff)
        grid = (n_m, n_k)
        dims = ("parallel", "arbitrary")
        kernel = moco_ktiled_kernel
        in_specs = [
            pl.BlockSpec((tm, tk_eff), lambda i, k: (i, k)),
            pl.BlockSpec((tm, tk_eff), lambda i, k: (i, k)),
            pl.BlockSpec((tm, tk_eff), lambda i, k: (i, k)),
            pl.BlockSpec((tk_eff, H2), lambda i, k: (k, 0)),
            pl.BlockSpec((1, H2), lambda i, k: (0, 0)),
            pl.BlockSpec((H, dim), lambda i, k: (0, 0)),
            pl.BlockSpec((H, dim), lambda i, k: (0, 0)),
            pl.BlockSpec((1, dim), lambda i, k: (0, 0)),
            pl.BlockSpec((1, dim), lambda i, k: (0, 0)),
        ]
        out_specs = pl.BlockSpec((3, tm, dim2), lambda i, k: (0, i, 0))
        scratch_shapes = [pltpu.VMEM((3, tm, H2), jnp.float32)]

    # VMEM budget (double-buffered inputs/outputs + weights + accumulators),
    # with headroom; clamped <= 40 MiB so it is safe on v7x's 64 MiB VMEM.
    est = (3 * 2 * tm * tk_eff * xdt        # three bf16 input views, double-buffered
           + 2 * tk_eff * H2 * wdt          # packed w1 tile
           + 2 * H2 * 4                     # packed b1
           + 2 * 2 * H * dim * wdt          # w2_q + w2_k
           + 2 * 2 * dim * 4                # b2_q + b2_k
           + 2 * 3 * tm * dim2 * 4          # packed output
           + 3 * tm * H2 * 4)               # accumulator / live hidden
    vmem_limit = int(min(40 * 2 ** 20, max(32 * 2 ** 20, 2 * est)))

    return pl.pallas_call(
        kernel,
        out_shape=out_sd,
        grid_spec=pltpu.PrefetchScalarGridSpec(
            num_scalar_prefetch=0,
            grid=grid,
            in_specs=in_specs,
            out_specs=out_specs,
            scratch_shapes=scratch_shapes,
        ),
        compiler_params=pltpu.CompilerParams(
            dimension_semantics=dims,
            vmem_limit_bytes=vmem_limit,
        ),
    )(xq, xk, xa, w1p, b1p, w2q, w2k, b2q, b2k)


class MoCoPallas:
    """MoCo with 2-layer MLP encoders; forward reproduces (q1, q2, q3, k1, k2, k3)."""

    def __init__(self, key, in_dim, hidden, dim=128, K=512, m=0.999,
                 param_dtype=jnp.bfloat16):
        kw1, kb1, kw2, kb2, kq = jax.random.split(key, 5)
        s1 = 1.0 / jnp.sqrt(jnp.float32(in_dim))
        s2 = 1.0 / jnp.sqrt(jnp.float32(hidden))
        # Query-encoder parameters (PyTorch nn.Linear-style uniform init), f32 masters.
        q_w1 = jax.random.uniform(kw1, (in_dim, hidden), jnp.float32, -s1, s1)
        q_b1 = jax.random.uniform(kb1, (1, hidden), jnp.float32, -s1, s1)
        q_w2 = jax.random.uniform(kw2, (hidden, dim), jnp.float32, -s2, s2)
        q_b2 = jax.random.uniform(kb2, (1, dim), jnp.float32, -s2, s2)
        # Key encoder: copied from query encoder (param_k.data.copy_(param_q.data)).
        k_w1, k_b1, k_w2, k_b2 = q_w1, q_b1, q_w2, q_b2

        # Pack layer 1 side-by-side (q|k) so one MXU pass feeds both encoders;
        # layer 2 stays as two real (H, dim) weights (no zero-padded block-diag).
        self.w1_packed = jnp.concatenate([q_w1, k_w1], axis=1).astype(param_dtype)
        self.b1_packed = jnp.concatenate([q_b1, k_b1], axis=1)              # f32
        self.w2_q = q_w2.astype(param_dtype)
        self.w2_k = k_w2.astype(param_dtype)
        self.b2_q = q_b2                                                    # f32
        self.b2_k = k_b2                                                    # f32

        # Queue buffer: randn(2, dim, K) normalized along dim=1 (unused in forward).
        queue = jax.random.normal(kq, (2, dim, K), jnp.float32)
        self.queue = queue / jnp.maximum(
            jnp.sqrt(jnp.sum(queue * queue, axis=1, keepdims=True)), 1e-12)
        self.queue_ptr = jnp.zeros((1,), jnp.int32)
        self.m = m
        self.K = K
        self.dim = dim
        self.hidden = hidden
        # TODO(synk): momentum_update_key_encoder / dequeue_and_enqueue / update_tau
        # are training-step state mutations outside forward; not kernelized.

    def forward(self, im_q, im_k, im_a):
        B = im_q.shape[0]
        # Row-major flatten (== torch .view(B, -1)) + single bf16 cast in the wrapper;
        # the kernel streams bf16 inputs (halves the dominant HBM traffic).
        prep = lambda x: x.reshape(B, -1).astype(jnp.bfloat16)
        out = moco_forward_fused(
            prep(im_q), prep(im_k), prep(im_a),
            self.w1_packed, self.b1_packed,
            self.w2_q, self.w2_k, self.b2_q, self.b2_k)
        d = self.dim
        q1, q2, q3 = out[0, :, :d], out[1, :, :d], out[2, :, :d]
        # Key branch runs under torch.no_grad() in PyTorch.
        k1, k2, k3 = (jax.lax.stop_gradient(out[v, :, d:]) for v in range(3))
        return q1, q2, q3, k1, k2, k3


if __name__ == "__main__":
    # Small shapes consistent with the module: batch=2, channels=4, spatial=16.
    B, C, Hsp, Wsp = 2, 4, 16, 16
    hidden, dim, K = 256, 128, 512
    in_dim = C * Hsp * Wsp

    root = jax.random.PRNGKey(0)
    k_model, k_q, k_k, k_a = jax.random.split(root, 4)

    model = MoCoPallas(k_model, in_dim=in_dim, hidden=hidden, dim=dim, K=K)

    im_q = jax.random.normal(k_q, (B, C, Hsp, Wsp), jnp.float32)
    im_k = jax.random.normal(k_k, (B, C, Hsp, Wsp), jnp.float32)
    im_a = jax.random.normal(k_a, (B, C, Hsp, Wsp), jnp.float32)

    outs = model.forward(im_q, im_k, im_a)
    outs = jax.block_until_ready(outs)

    # Sanity: six [B, dim] outputs, unit-norm rows, k == q (weights are copies).
    assert all(o.shape == (B, dim) for o in outs)
    norms = jnp.linalg.norm(outs[0], axis=1)
    assert bool(jnp.all(jnp.abs(norms - 1.0) < 1e-4))
    assert bool(jnp.allclose(outs[0], outs[3], atol=1e-5))

    print("KERNEL_OK")
</pallas_src>

<mosaic_0001>
module attributes {stable_mosaic.version = 11 : i64} {
  func.func @moco_single_pass_kernel(%arg0: i32, %arg1: memref<2x1024xbf16, #tpu.memory_space<vmem>>, %arg2: memref<2x1024xbf16, #tpu.memory_space<vmem>>, %arg3: memref<2x1024xbf16, #tpu.memory_space<vmem>>, %arg4: memref<1024x512xbf16, #tpu.memory_space<vmem>>, %arg5: memref<1x512xf32, #tpu.memory_space<vmem>>, %arg6: memref<256x128xbf16, #tpu.memory_space<vmem>>, %arg7: memref<256x128xbf16, #tpu.memory_space<vmem>>, %arg8: memref<1x128xf32, #tpu.memory_space<vmem>>, %arg9: memref<1x128xf32, #tpu.memory_space<vmem>>, %arg10: memref<3x2x256xf32, #tpu.memory_space<vmem>>) attributes {dimension_semantics = [#tpu.dimension_semantics<parallel>], iteration_bounds = array<i64: 1>, scalar_prefetch = 0 : i64, scratch_operands = 0 : i64, tpu.core_type = #tpu.core_type<tc>, window_params = [{transform_indices = @transform_0, window_bounds = array<i64: 2, 1024>}, {transform_indices = @transform_1, window_bounds = array<i64: 2, 1024>}, {transform_indices = @transform_2, window_bounds = array<i64: 2, 1024>}, {pipeline_mode = #tpu.pipeline_mode<synchronous>, transform_indices = @transform_3, window_bounds = array<i64: 1024, 512>}, {pipeline_mode = #tpu.pipeline_mode<synchronous>, transform_indices = @transform_4, window_bounds = array<i64: 1, 512>}, {pipeline_mode = #tpu.pipeline_mode<synchronous>, transform_indices = @transform_5, window_bounds = array<i64: 256, 128>}, {pipeline_mode = #tpu.pipeline_mode<synchronous>, transform_indices = @transform_6, window_bounds = array<i64: 256, 128>}, {pipeline_mode = #tpu.pipeline_mode<synchronous>, transform_indices = @transform_7, window_bounds = array<i64: 1, 128>}, {pipeline_mode = #tpu.pipeline_mode<synchronous>, transform_indices = @transform_8, window_bounds = array<i64: 1, 128>}, {transform_indices = @transform_9, window_bounds = array<i64: 3, 2, 256>}]} {
    %c0 = arith.constant 0 : index
    %c0_0 = arith.constant 0 : index
    %0 = vector.load %arg4[%c0, %c0_0] : memref<1024x512xbf16, #tpu.memory_space<vmem>>, vector<1024x512xbf16>
    %c0_1 = arith.constant 0 : index
    %c0_2 = arith.constant 0 : index
    %1 = vector.load %arg6[%c0_1, %c0_2] : memref<256x128xbf16, #tpu.memory_space<vmem>>, vector<256x128xbf16>
    %c0_3 = arith.constant 0 : index
    %c0_4 = arith.constant 0 : index
    %2 = vector.load %arg7[%c0_3, %c0_4] : memref<256x128xbf16, #tpu.memory_space<vmem>>, vector<256x128xbf16>
    %c0_5 = arith.constant 0 : index
    %c0_6 = arith.constant 0 : index
    %3 = vector.load %arg5[%c0_5, %c0_6] : memref<1x512xf32, #tpu.memory_space<vmem>>, vector<1x512xf32>
    %4 = vector.shape_cast %3 : vector<1x512xf32> to vector<1x512xf32>
    %5 = vector.broadcast %4 : vector<1x512xf32> to vector<2x512xf32>
    %c0_7 = arith.constant 0 : index
    %c0_8 = arith.constant 0 : index
    %6 = vector.load %arg8[%c0_7, %c0_8] : memref<1x128xf32, #tpu.memory_space<vmem>>, vector<1x128xf32>
    %7 = vector.shape_cast %6 : vector<1x128xf32> to vector<1x128xf32>
    %8 = vector.broadcast %7 : vector<1x128xf32> to vector<2x128xf32>
    %c0_9 = arith.constant 0 : index
    %c0_10 = arith.constant 0 : index
    %9 = vector.load %arg9[%c0_9, %c0_10] : memref<1x128xf32, #tpu.memory_space<vmem>>, vector<1x128xf32>
    %10 = vector.shape_cast %9 : vector<1x128xf32> to vector<1x128xf32>
    %11 = vector.broadcast %10 : vector<1x128xf32> to vector<2x128xf32>
    %c0_11 = arith.constant 0 : index
    %c0_12 = arith.constant 0 : index
    %12 = vector.load %arg1[%c0_11, %c0_12] : memref<2x1024xbf16, #tpu.memory_space<vmem>>, vector<2x1024xbf16>
    %cst = arith.constant dense<0.000000e+00> : vector<2x512xf32>
    %13 = tpu.matmul %12, %0, %cst {dimension_numbers = #tpu.dot_dimension_numbers<[1], [0], [0], [1], [0, 0, 1, 1], [], []>} : vector<2x1024xbf16>, vector<1024x512xbf16>, vector<2x512xf32> -> vector<2x512xf32>
    %14 = arith.addf %13, %5 : vector<2x512xf32>
    %cst_13 = arith.constant 0.000000e+00 : f32
    %15 = vector.broadcast %cst_13 : f32 to vector<2x512xf32>
    %16 = arith.maximumf %14, %15 : vector<2x512xf32>
    %17 = arith.truncf %16 : vector<2x512xf32> to vector<2x512xbf16>
    %18 = vector.extract_strided_slice %17 {offsets = [0, 0], sizes = [2, 256], strides = [1, 1]} : vector<2x512xbf16> to vector<2x256xbf16>
    %cst_14 = arith.constant dense<0.000000e+00> : vector<2x128xf32>
    %19 = tpu.matmul %18, %1, %cst_14 {dimension_numbers = #tpu.dot_dimension_numbers<[1], [0], [0], [1], [0, 0, 1, 1], [], []>} : vector<2x256xbf16>, vector<256x128xbf16>, vector<2x128xf32> -> vector<2x128xf32>
    %20 = arith.addf %19, %8 : vector<2x128xf32>
    %21 = vector.extract_strided_slice %17 {offsets = [0, 256], sizes = [2, 256], strides = [1, 1]} : vector<2x512xbf16> to vector<2x256xbf16>
    %cst_15 = arith.constant dense<0.000000e+00> : vector<2x128xf32>
    %22 = tpu.matmul %21, %2, %cst_15 {dimension_numbers = #tpu.dot_dimension_numbers<[1], [0], [0], [1], [0, 0, 1, 1], [], []>} : vector<2x256xbf16>, vector<256x128xbf16>, vector<2x128xf32> -> vector<2x128xf32>
    %23 = arith.addf %22, %11 : vector<2x128xf32>
    %24 = arith.mulf %20, %20 : vector<2x128xf32>
    %cst_16 = arith.constant dense<0.000000e+00> : vector<2xf32>
    %25 = vector.multi_reduction <add>, %24, %cst_16 [1] : vector<2x128xf32> to vector<2xf32>
    %26 = vector.shape_cast %25 : vector<2xf32> to vector<2x1xf32>
    %cst_17 = arith.constant 1.000000e-24 : f32
    %27 = vector.broadcast %cst_17 : f32 to vector<2x1xf32>
    %28 = arith.maximumf %26, %27 : vector<2x1xf32>
    %29 = math.rsqrt %28 : vector<2x1xf32>
    %30 = arith.mulf %23, %23 : vector<2x128xf32>
    %cst_18 = arith.constant dense<0.000000e+00> : vector<2xf32>
    %31 = vector.multi_reduction <add>, %30, %cst_18 [1] : vector<2x128xf32> to vector<2xf32>
    %32 = vector.shape_cast %31 : vector<2xf32> to vector<2x1xf32>
    %cst_19 = arith.constant 1.000000e-24 : f32
    %33 = vector.broadcast %cst_19 : f32 to vector<2x1xf32>
    %34 = arith.maximumf %32, %33 : vector<2x1xf32>
    %35 = math.rsqrt %34 : vector<2x1xf32>
    %36 = vector.broadcast %29 : vector<2x1xf32> to vector<2x128xf32>
    %37 = arith.mulf %20, %36 : vector<2x128xf32>
    %38 = vector.broadcast %35 : vector<2x1xf32> to vector<2x128xf32>
    %39 = arith.mulf %23, %38 : vector<2x128xf32>
    %c0_20 = arith.constant 0 : index
    %c0_21 = arith.constant 0 : index
    %c0_22 = arith.constant 0 : index
    %40 = vector.load %arg10[%c0_20, %c0_21, %c0_22] : memref<3x2x256xf32, #tpu.memory_space<vmem>>, vector<1x2x128xf32>
    %41 = vector.shape_cast %40 : vector<1x2x128xf32> to vector<2x128xf32>
    %42 = vector.shape_cast %37 : vector<2x128xf32> to vector<1x2x128xf32>
    tpu.vector_store %arg10[%c0_20, %c0_21, %c0_22], %42 {strides = array<i32>} : memref<3x2x256xf32, #tpu.memory_space<vmem>>, vector<1x2x128xf32>,
    %c0_23 = arith.constant 0 : index
    %c0_24 = arith.constant 0 : index
    %c128 = arith.constant 128 : index
    %43 = vector.load %arg10[%c0_23, %c0_24, %c128] : memref<3x2x256xf32, #tpu.memory_space<vmem>>, vector<1x2x128xf32>
    %44 = vector.shape_cast %43 : vector<1x2x128xf32> to vector<2x128xf32>
    %45 = vector.shape_cast %39 : vector<2x128xf32> to vector<1x2x128xf32>
    tpu.vector_store %arg10[%c0_23, %c0_24, %c128], %45 {strides = array<i32>} : memref<3x2x256xf32, #tpu.memory_space<vmem>>, vector<1x2x128xf32>,
    %c0_25 = arith.constant 0 : index
    %c0_26 = arith.constant 0 : index
    %46 = vector.load %arg2[%c0_25, %c0_26] : memref<2x1024xbf16, #tpu.memory_space<vmem>>, vector<2x1024xbf16>
    %cst_27 = arith.constant dense<0.000000e+00> : vector<2x512xf32>
    %47 = tpu.matmul %46, %0, %cst_27 {dimension_numbers = #tpu.dot_dimension_numbers<[1], [0], [0], [1], [0, 0, 1, 1], [], []>} : vector<2x1024xbf16>, vector<1024x512xbf16>, vector<2x512xf32> -> vector<2x512xf32>
    %48 = arith.addf %47, %5 : vector<2x512xf32>
    %cst_28 = arith.constant 0.000000e+00 : f32
    %49 = vector.broadcast %cst_28 : f32 to vector<2x512xf32>
    %50 = arith.maximumf %48, %49 : vector<2x512xf32>
    %51 = arith.truncf %50 : vector<2x512xf32> to vector<2x512xbf16>
    %52 = vector.extract_strided_slice %51 {offsets = [0, 0], sizes = [2, 256], strides = [1, 1]} : vector<2x512xbf16> to vector<2x256xbf16>
    %cst_29 = arith.constant dense<0.000000e+00> : vector<2x128xf32>
    %53 = tpu.matmul %52, %1, %cst_29 {dimension_numbers = #tpu.dot_dimension_numbers<[1], [0], [0], [1], [0, 0, 1, 1], [], []>} : vector<2x256xbf16>, vector<256x128xbf16>, vector<2x128xf32> -> vector<2x128xf32>
    %54 = arith.addf %53, %8 : vector<2x128xf32>
    %55 = vector.extract_strided_slice %51 {offsets = [0, 256], sizes = [2, 256], strides = [1, 1]} : vector<2x512xbf16> to vector<2x256xbf16>
    %cst_30 = arith.constant dense<0.000000e+00> : vector<2x128xf32>
    %56 = tpu.matmul %55, %2, %cst_30 {dimension_numbers = #tpu.dot_dimension_numbers<[1], [0], [0], [1], [0, 0, 1, 1], [], []>} : vector<2x256xbf16>, vector<256x128xbf16>, vector<2x128xf32> -> vector<2x128xf32>
    %57 = arith.addf %56, %11 : vector<2x128xf32>
    %58 = arith.mulf %54, %54 : vector<2x128xf32>
    %cst_31 = arith.constant dense<0.000000e+00> : vector<2xf32>
    %59 = vector.multi_reduction <add>, %58, %cst_31 [1] : vector<2x128xf32> to vector<2xf32>
    %60 = vector.shape_cast %59 : vector<2xf32> to vector<2x1xf32>
    %cst_32 = arith.constant 1.000000e-24 : f32
    %61 = vector.broadcast %cst_32 : f32 to vector<2x1xf32>
    %62 = arith.maximumf %60, %61 : vector<2x1xf32>
    %63 = math.rsqrt %62 : vector<2x1xf32>
    %64 = arith.mulf %57, %57 : vector<2x128xf32>
    %cst_33 = arith.constant dense<0.000000e+00> : vector<2xf32>
    %65 = vector.multi_reduction <add>, %64, %cst_33 [1] : vector<2x128xf32> to vector<2xf32>
    %66 = vector.shape_cast %65 : vector<2xf32> to vector<2x1xf32>
    %cst_34 = arith.constant 1.000000e-24 : f32
    %67 = vector.broadcast %cst_34 : f32 to vector<2x1xf32>
    %68 = arith.maximumf %66, %67 : vector<2x1xf32>
    %69 = math.rsqrt %68 : vector<2x1xf32>
    %70 = vector.broadcast %63 : vector<2x1xf32> to vector<2x128xf32>
    %71 = arith.mulf %54, %70 : vector<2x128xf32>
    %72 = vector.broadcast %69 : vector<2x1xf32> to vector<2x128xf32>
    %73 = arith.mulf %57, %72 : vector<2x128xf32>
    %c1 = arith.constant 1 : index
    %c0_35 = arith.constant 0 : index
    %c0_36 = arith.constant 0 : index
    %74 = vector.load %arg10[%c1, %c0_35, %c0_36] : memref<3x2x256xf32, #tpu.memory_space<vmem>>, vector<1x2x128xf32>
    %75 = vector.shape_cast %74 : vector<1x2x128xf32> to vector<2x128xf32>
    %76 = vector.shape_cast %71 : vector<2x128xf32> to vector<1x2x128xf32>
    tpu.vector_store %arg10[%c1, %c0_35, %c0_36], %76 {strides = array<i32>} : memref<3x2x256xf32, #tpu.memory_space<vmem>>, vector<1x2x128xf32>,
    %c1_37 = arith.constant 1 : index
    %c0_38 = arith.constant 0 : index
    %c128_39 = arith.constant 128 : index
    %77 = vector.load %arg10[%c1_37, %c0_38, %c128_39] : memref<3x2x256xf32, #tpu.memory_space<vmem>>, vector<1x2x128xf32>
    %78 = vector.shape_cast %77 : vector<1x2x128xf32> to vector<2x128xf32>
    %79 = vector.shape_cast %73 : vector<2x128xf32> to vector<1x2x128xf32>
    tpu.vector_store %arg10[%c1_37, %c0_38, %c128_39], %79 {strides = array<i32>} : memref<3x2x256xf32, #tpu.memory_space<vmem>>, vector<1x2x128xf32>,
    %c0_40 = arith.constant 0 : index
    %c0_41 = arith.constant 0 : index
    %80 = vector.load %arg3[%c0_40, %c0_41] : memref<2x1024xbf16, #tpu.memory_space<vmem>>, vector<2x1024xbf16>
    %cst_42 = arith.constant dense<0.000000e+00> : vector<2x512xf32>
    %81 = tpu.matmul %80, %0, %cst_42 {dimension_numbers = #tpu.dot_dimension_numbers<[1], [0], [0], [1], [0, 0, 1, 1], [], []>} : vector<2x1024xbf16>, vector<1024x512xbf16>, vector<2x512xf32> -> vector<2x512xf32>
    %82 = arith.addf %81, %5 : vector<2x512xf32>
    %cst_43 = arith.constant 0.000000e+00 : f32
    %83 = vector.broadcast %cst_43 : f32 to vector<2x512xf32>
    %84 = arith.maximumf %82, %83 : vector<2x512xf32>
    %85 = arith.truncf %84 : vector<2x512xf32> to vector<2x512xbf16>
    %86 = vector.extract_strided_slice %85 {offsets = [0, 0], sizes = [2, 256], strides = [1, 1]} : vector<2x512xbf16> to vector<2x256xbf16>
    %cst_44 = arith.constant dense<0.000000e+00> : vector<2x128xf32>
    %87 = tpu.matmul %86, %1, %cst_44 {dimension_numbers = #tpu.dot_dimension_numbers<[1], [0], [0], [1], [0, 0, 1, 1], [], []>} : vector<2x256xbf16>, vector<256x128xbf16>, vector<2x128xf32> -> vector<2x128xf32>
    %88 = arith.addf %87, %8 : vector<2x128xf32>
    %89 = vector.extract_strided_slice %85 {offsets = [0, 256], sizes = [2, 256], strides = [1, 1]} : vector<2x512xbf16> to vector<2x256xbf16>
    %cst_45 = arith.constant dense<0.000000e+00> : vector<2x128xf32>
    %90 = tpu.matmul %89, %2, %cst_45 {dimension_numbers = #tpu.dot_dimension_numbers<[1], [0], [0], [1], [0, 0, 1, 1], [], []>} : vector<2x256xbf16>, vector<256x128xbf16>, vector<2x128xf32> -> vector<2x128xf32>
    %91 = arith.addf %90, %11 : vector<2x128xf32>
    %92 = arith.mulf %88, %88 : vector<2x128xf32>
    %cst_46 = arith.constant dense<0.000000e+00> : vector<2xf32>
    %93 = vector.multi_reduction <add>, %92, %cst_46 [1] : vector<2x128xf32> to vector<2xf32>
    %94 = vector.shape_cast %93 : vector<2xf32> to vector<2x1xf32>
    %cst_47 = arith.constant 1.000000e-24 : f32
    %95 = vector.broadcast %cst_47 : f32 to vector<2x1xf32>
    %96 = arith.maximumf %94, %95 : vector<2x1xf32>
    %97 = math.rsqrt %96 : vector<2x1xf32>
    %98 = arith.mulf %91, %91 : vector<2x128xf32>
    %cst_48 = arith.constant dense<0.000000e+00> : vector<2xf32>
    %99 = vector.multi_reduction <add>, %98, %cst_48 [1] : vector<2x128xf32> to vector<2xf32>
    %100 = vector.shape_cast %99 : vector<2xf32> to vector<2x1xf32>
    %cst_49 = arith.constant 1.000000e-24 : f32
    %101 = vector.broadcast %cst_49 : f32 to vector<2x1xf32>
    %102 = arith.maximumf %100, %101 : vector<2x1xf32>
    %103 = math.rsqrt %102 : vector<2x1xf32>
    %104 = vector.broadcast %97 : vector<2x1xf32> to vector<2x128xf32>
    %105 = arith.mulf %88, %104 : vector<2x128xf32>
    %106 = vector.broadcast %103 : vector<2x1xf32> to vector<2x128xf32>
    %107 = arith.mulf %91, %106 : vector<2x128xf32>
    %c2 = arith.constant 2 : index
    %c0_50 = arith.constant 0 : index
    %c0_51 = arith.constant 0 : index
    %108 = vector.load %arg10[%c2, %c0_50, %c0_51] : memref<3x2x256xf32, #tpu.memory_space<vmem>>, vector<1x2x128xf32>
    %109 = vector.shape_cast %108 : vector<1x2x128xf32> to vector<2x128xf32>
    %110 = vector.shape_cast %105 : vector<2x128xf32> to vector<1x2x128xf32>
    tpu.vector_store %arg10[%c2, %c0_50, %c0_51], %110 {strides = array<i32>} : memref<3x2x256xf32, #tpu.memory_space<vmem>>, vector<1x2x128xf32>,
    %c2_52 = arith.constant 2 : index
    %c0_53 = arith.constant 0 : index
    %c128_54 = arith.constant 128 : index
    %111 = vector.load %arg10[%c2_52, %c0_53, %c128_54] : memref<3x2x256xf32, #tpu.memory_space<vmem>>, vector<1x2x128xf32>
    %112 = vector.shape_cast %111 : vector<1x2x128xf32> to vector<2x128xf32>
    %113 = vector.shape_cast %107 : vector<2x128xf32> to vector<1x2x128xf32>
    tpu.vector_store %arg10[%c2_52, %c0_53, %c128_54], %113 {strides = array<i32>} : memref<3x2x256xf32, #tpu.memory_space<vmem>>, vector<1x2x128xf32>,
    return
  }
  func.func @transform_0(%arg0: i32) -> (i32, i32) {
    %c0_i32 = arith.constant 0 : i32
    %c0_i32_0 = arith.constant 0 : i32
    return %arg0, %c0_i32 : i32, i32
  }
  func.func @transform_1(%arg0: i32) -> (i32, i32) {
    %c0_i32 = arith.constant 0 : i32
    %c0_i32_0 = arith.constant 0 : i32
    return %arg0, %c0_i32 : i32, i32
  }
  func.func @transform_2(%arg0: i32) -> (i32, i32) {
    %c0_i32 = arith.constant 0 : i32
    %c0_i32_0 = arith.constant 0 : i32
    return %arg0, %c0_i32 : i32, i32
  }
  func.func @transform_3(%arg0: i32) -> (i32, i32) {
    %c0_i32 = arith.constant 0 : i32
    %c0_i32_0 = arith.constant 0 : i32
    %c0_i32_1 = arith.constant 0 : i32
    return %c0_i32, %c0_i32_0 : i32, i32
  }
  func.func @transform_4(%arg0: i32) -> (i32, i32) {
    %c0_i32 = arith.constant 0 : i32
    %c0_i32_0 = arith.constant 0 : i32
    %c0_i32_1 = arith.constant 0 : i32
    return %c0_i32, %c0_i32_0 : i32, i32
  }
  func.func @transform_5(%arg0: i32) -> (i32, i32) {
    %c0_i32 = arith.constant 0 : i32
    %c0_i32_0 = arith.constant 0 : i32
    %c0_i32_1 = arith.constant 0 : i32
    return %c0_i32, %c0_i32_0 : i32, i32
  }
  func.func @transform_6(%arg0: i32) -> (i32, i32) {
    %c0_i32 = arith.constant 0 : i32
    %c0_i32_0 = arith.constant 0 : i32
    %c0_i32_1 = arith.constant 0 : i32
    return %c0_i32, %c0_i32_0 : i32, i32
  }
  func.func @transform_7(%arg0: i32) -> (i32, i32) {
    %c0_i32 = arith.constant 0 : i32
    %c0_i32_0 = arith.constant 0 : i32
    %c0_i32_1 = arith.constant 0 : i32
    return %c0_i32, %c0_i32_0 : i32, i32
  }
  func.func @transform_8(%arg0: i32) -> (i32, i32) {
    %c0_i32 = arith.constant 0 : i32
    %c0_i32_0 = arith.constant 0 : i32
    %c0_i32_1 = arith.constant 0 : i32
    return %c0_i32, %c0_i32_0 : i32, i32
  }
  func.func @transform_9(%arg0: i32) -> (i32, i32, i32) {
    %c0_i32 = arith.constant 0 : i32
    %c0_i32_0 = arith.constant 0 : i32
    %c0_i32_1 = arith.constant 0 : i32
    return %c0_i32, %arg0, %c0_i32_0 : i32, i32, i32
  }
}

</mosaic_0001>

<llo_original>
// kernel: tpu_custom_call.1
$region0: #{tpu_custom_call.1}
  #allocation0 [shape = 'u32[]', space=smem, size = 0x4, offset = 0x4, fixed_abs, tag = 'smem constant byte address 0x4 - core index']
  #allocation1 [shape = 'u32[72,128]{1,0:T(1,128)}', space=vmem, size = 0x9000, scoped, tag = 'internal scratch']
  %s0 = inlined_call_operand.hbm [shape: bf16[2,1024], index: 0, kind: input, shape index: {}]
  %s1 = inlined_call_operand.hbm [shape: bf16[2,1024], index: 1, kind: input, shape index: {}]
  %s2 = inlined_call_operand.hbm [shape: bf16[2,1024], index: 2, kind: input, shape index: {}]
  %s3 = inlined_call_operand.hbm [shape: bf16[1024,512], index: 3, kind: input, shape index: {}]
  %s4 = inlined_call_operand.hbm [shape: f32[1,512], index: 4, kind: input, shape index: {}]
  %s5 = inlined_call_operand.hbm [shape: bf16[256,128], index: 5, kind: input, shape index: {}]
  %s6 = inlined_call_operand.hbm [shape: bf16[256,128], index: 6, kind: input, shape index: {}]
  %s7 = inlined_call_operand.vmem [shape: f32[1,128], index: 7, kind: input, shape index: {}]
  %s8 = inlined_call_operand.vmem [shape: f32[1,128], index: 8, kind: input, shape index: {}]
  %s9 = inlined_call_operand.hbm [shape: f32[3,2,256], index: 9, kind: output, shape index: {}]
  %s10 = sld [smem:[#allocation0]]
  $region74: #{tpu_custom_call.1} parent=0
    _
  %s12 = ssub.s32 1, %s10
  %s13 = scalar_select 0, %s12, %s10
  $region1: #{tpu_custom_call.1} parent=0
    #allocation2 [shape = 'u8[4096]{0}', space=vmem, size = 0x1000, scoped, tag = 'input window, operand 0, single buffered']
    #allocation3 [shape = 's32[1]{0}', space=sflag, size = 0x4, scoped, tag = 'scoped memory for tpu_custom_call.1']
    #allocation4 [shape = 's32[1]{0}', space=sflag, size = 0x4, scoped, tag = 'scoped memory for tpu_custom_call.1']
    #allocation5 [shape = 'u8[4096]{0}', space=vmem, size = 0x1000, scoped, tag = 'input window, operand 1, single buffered']
    #allocation6 [shape = 's32[1]{0}', space=sflag, size = 0x4, scoped, tag = 'scoped memory for tpu_custom_call.1']
    #allocation7 [shape = 'u8[4096]{0}', space=vmem, size = 0x1000, scoped, tag = 'input window, operand 2, single buffered']
    #allocation8 [shape = 'u8[1048576]{0}', space=vmem, size = 0x100000, scoped, tag = 'input window, operand 3, single buffered']
    #allocation9 [shape = 's32[1]{0}', space=sflag, size = 0x4, scoped, tag = 'scoped memory for tpu_custom_call.1']
    #allocation10 [shape = 'u8[2048]{0}', space=vmem, size = 0x800, scoped, tag = 'input window, operand 4, single buffered']
    #allocation11 [shape = 'u8[65536]{0}', space=vmem, size = 0x10000, scoped, tag = 'input window, operand 5, single buffered']
    #allocation12 [shape = 's32[1]{0}', space=sflag, size = 0x4, scoped, tag = 'scoped memory for tpu_custom_call.1']
    #allocation13 [shape = 'u8[65536]{0}', space=vmem, size = 0x10000, scoped, tag = 'input window, operand 6, single buffered']
    #allocation14 [shape = 'u8[6144]{0}', space=vmem, size = 0x1800, scoped, tag = 'output window, operand 0, single buffered']
    %14 = vsyncpa [#allocation3], 0
    %15 = vsyncpa [#allocation6], 0
    %16 = vsyncpa [#allocation9], 0
    %17 = vsyncpa [#allocation12], 0
    %18 = vsyncpa [#allocation4], 0
    // Predicated region
    $region2: #{tpu_custom_call.1} parent=1 // pred_check
      _
    $region3: #{tpu_custom_call.1} parent=1 // pred_check_branch
      %20 = sbr.rel (0) target = $region5
    $region4: #{tpu_custom_call.1} parent=1 // pred_region
      %22 = vsyncadd [#allocation3], 0
      %s24 = sshll.u32 %s0, 4
      %s25 = int_to_ptr.hbm [resolvable:$true] %s24
      %s26 = sshll.u32 [#allocation2], 4
      %s27 = int_to_ptr.vmem [resolvable:$true] %s26
      %29 = dma.hbm_to_vmem [thread:$0]  %s25, 128, %s27, [#allocation3]
    $region5: #{tpu_custom_call.1} parent=1 // pred_fallthru
      _
    // Predicated region
    $region6: #{tpu_custom_call.1} parent=1 // pred_check
      _
    $region7: #{tpu_custom_call.1} parent=1 // pred_check_branch
      %31 = sbr.rel (0) target = $region9
    $region8: #{tpu_custom_call.1} parent=1 // pred_region
      %33 = vsyncadd [#allocation6], 0
      %s35 = sshll.u32 %s1, 4
      %s36 = int_to_ptr.hbm [resolvable:$true] %s35
      %s37 = sshll.u32 [#allocation5], 4
      %s38 = int_to_ptr.vmem [resolvable:$true] %s37
      %40 = dma.hbm_to_vmem [thread:$0]  %s36, 128, %s38, [#allocation6]
    $region9: #{tpu_custom_call.1} parent=1 // pred_fallthru
      _
    // Predicated region
    $region10: #{tpu_custom_call.1} parent=1 // pred_check
      _
    $region11: #{tpu_custom_call.1} parent=1 // pred_check_branch
      %42 = sbr.rel (0) target = $region13
    $region12: #{tpu_custom_call.1} parent=1 // pred_region
      %44 = vsyncadd [#allocation6], 0
      %s46 = sshll.u32 %s2, 4
      %s47 = int_to_ptr.hbm [resolvable:$true] %s46
      %s48 = sshll.u32 [#allocation7], 4
      %s49 = int_to_ptr.vmem [resolvable:$true] %s48
      %51 = dma.hbm_to_vmem [thread:$0]  %s47, 128, %s49, [#allocation6]
    $region13: #{tpu_custom_call.1} parent=1 // pred_fallthru
      _
    // Predicated region
    $region14: #{tpu_custom_call.1} parent=1 // pred_check
      _
    $region15: #{tpu_custom_call.1} parent=1 // pred_check_branch
      %53 = sbr.rel (0) target = $region17
    $region16: #{tpu_custom_call.1} parent=1 // pred_region
      %55 = vsyncadd [#allocation9], 0
      %s56 = sshll.u32 %s3, 4
      %s57 = int_to_ptr.hbm [resolvable:$true] %s56
      %s58 = sshll.u32 [#allocation8], 4
      %s59 = int_to_ptr.vmem [resolvable:$true] %s58
      %64 = dma.hbm_to_vmem [thread:$0]  %s57, 32768, %s59, [#allocation9], 256, 256, 16
    $region17: #{tpu_custom_call.1} parent=1 // pred_fallthru
      _
    // Predicated region
    $region18: #{tpu_custom_call.1} parent=1 // pred_check
      _
    $region19: #{tpu_custom_call.1} parent=1 // pred_check_branch
      %66 = sbr.rel (0) target = $region21
    $region20: #{tpu_custom_call.1} parent=1 // pred_region
      %68 = vsyncadd [#allocation9], 0
      %s70 = sshll.u32 %s4, 4
      %s71 = int_to_ptr.hbm [resolvable:$true] %s70
      %s72 = sshll.u32 [#allocation10], 4
      %s73 = int_to_ptr.vmem [resolvable:$true] %s72
      %75 = dma.hbm_to_vmem [thread:$0]  %s71, 64, %s73, [#allocation9]
    $region21: #{tpu_custom_call.1} parent=1 // pred_fallthru
      _
    // Predicated region
    $region22: #{tpu_custom_call.1} parent=1 // pred_check
      _
    $region23: #{tpu_custom_call.1} parent=1 // pred_check_branch
      %77 = sbr.rel (0) target = $region25
    $region24: #{tpu_custom_call.1} parent=1 // pred_region
      %79 = vsyncadd [#allocation12], 0
      %s80 = sshll.u32 %s5, 4
      %s81 = int_to_ptr.hbm [resolvable:$true] %s80
      %s82 = sshll.u32 [#allocation11], 4
      %s83 = int_to_ptr.vmem [resolvable:$true] %s82
      %88 = dma.hbm_to_vmem [thread:$0]  %s81, 2048, %s83, [#allocation12], 64, 64, 4
    $region25: #{tpu_custom_call.1} parent=1 // pred_fallthru
      _
    // Predicated region
    $region26: #{tpu_custom_call.1} parent=1 // pred_check
      _
    $region27: #{tpu_custom_call.1} parent=1 // pred_check_branch
      %90 = sbr.rel (0) target = $region29
    $region28: #{tpu_custom_call.1} parent=1 // pred_region
      %92 = vsyncadd [#allocation12], 0
      %s93 = sshll.u32 %s6, 4
      %s94 = int_to_ptr.hbm [resolvable:$true] %s93
      %s95 = sshll.u32 [#allocation13], 4
      %s96 = int_to_ptr.vmem [resolvable:$true] %s95
      %101 = dma.hbm_to_vmem [thread:$0]  %s94, 2048, %s96, [#allocation12], 64, 64, 4
    $region29: #{tpu_custom_call.1} parent=1 // pred_fallthru
      _
    // Predicated region
    $region30: #{tpu_custom_call.1} parent=1 // pred_check
      _
    $region31: #{tpu_custom_call.1} parent=1 // pred_check_branch
      %103 = sbr.rel (0) target = $region33
    $region32: #{tpu_custom_call.1} parent=1 // pred_region
      _
    $region33: #{tpu_custom_call.1} parent=1 // pred_fallthru
      _
    // Predicated region
    $region34: #{tpu_custom_call.1} parent=1 // pred_check
      _
    $region35: #{tpu_custom_call.1} parent=1 // pred_check_branch
      %105 = sbr.rel (0) target = $region37
    $region36: #{tpu_custom_call.1} parent=1 // pred_region
      _
    $region37: #{tpu_custom_call.1} parent=1 // pred_fallthru
      _
    // Predicated region
    $region38: #{tpu_custom_call.1} parent=1 // pred_check
      _
    $region39: #{tpu_custom_call.1} parent=1 // pred_check_branch
      %107 = sbr.rel (0) target = $region41
    $region40: #{tpu_custom_call.1} parent=1 // pred_region
      %109 = dma.done [#allocation3], 128
    $region41: #{tpu_custom_call.1} parent=1 // pred_fallthru
      _
    // Predicated region
    $region42: #{tpu_custom_call.1} parent=1 // pred_check
      _
    $region43: #{tpu_custom_call.1} parent=1 // pred_check_branch
      %111 = sbr.rel (0) target = $region45
    $region44: #{tpu_custom_call.1} parent=1 // pred_region
      %113 = dma.done [#allocation6], 128
    $region45: #{tpu_custom_call.1} parent=1 // pred_fallthru
      _
    // Predicated region
    $region46: #{tpu_custom_call.1} parent=1 // pred_check
      _
    $region47: #{tpu_custom_call.1} parent=1 // pred_check_branch
      %115 = sbr.rel (0) target = $region49
    $region48: #{tpu_custom_call.1} parent=1 // pred_region
      %117 = dma.done [#allocation6], 128
    $region49: #{tpu_custom_call.1} parent=1 // pred_fallthru
      _
    // Predicated region
    $region50: #{tpu_custom_call.1} parent=1 // pred_check
      _
    $region51: #{tpu_custom_call.1} parent=1 // pred_check_branch
      %119 = sbr.rel (0) target = $region53
    $region52: #{tpu_custom_call.1} parent=1 // pred_region
      %121 = dma.done [#allocation9], 32768
    $region53: #{tpu_custom_call.1} parent=1 // pred_fallthru
      _
    // Predicated region
    $region54: #{tpu_custom_call.1} parent=1 // pred_check
      _
    $region55: #{tpu_custom_call.1} parent=1 // pred_check_branch
      %123 = sbr.rel (0) target = $region57
    $region56: #{tpu_custom_call.1} parent=1 // pred_region
      %125 = dma.done [#allocation9], 64
    $region57: #{tpu_custom_call.1} parent=1 // pred_fallthru
      _
    // Predicated region
    $region58: #{tpu_custom_call.1} parent=1 // pred_check
      _
    $region59: #{tpu_custom_call.1} parent=1 // pred_check_branch
      %127 = sbr.rel (0) target = $region61
    $region60: #{tpu_custom_call.1} parent=1 // pred_region
      %129 = dma.done [#allocation12], 2048
    $region61: #{tpu_custom_call.1} parent=1 // pred_fallthru
      _
    // Predicated region
    $region62: #{tpu_custom_call.1} parent=1 // pred_check
      _
    $region63: #{tpu_custom_call.1} parent=1 // pred_check_branch
      %131 = sbr.rel (0) target = $region65
    $region64: #{tpu_custom_call.1} parent=1 // pred_region
      %133 = dma.done [#allocation12], 2048
    $region65: #{tpu_custom_call.1} parent=1 // pred_fallthru
      _
    %v134 = vld [vmem:[#allocation8] sm:$0xff]
    %v135 = vld [vmem:[#allocation8 + $0x8] sm:$0xff]
    %v136 = vld [vmem:[#allocation8 + $0x10] sm:$0xff]
    %v137 = vld [vmem:[#allocation8 + $0x18] sm:$0xff]
    %v138 = vld [vmem:[#allocation8 + $0x20] sm:$0xff]
    %v139 = vld [vmem:[#allocation8 + $0x28] sm:$0xff]
    %v140 = vld [vmem:[#allocation8 + $0x30] sm:$0xff]
    %v141 = vld [vmem:[#allocation8 + $0x38] sm:$0xff]
    %v142 = vld [vmem:[#allocation8 + $0x40] sm:$0xff]
    %v143 = vld [vmem:[#allocation8 + $0x48] sm:$0xff]
    %v144 = vld [vmem:[#allocation8 + $0x50] sm:$0xff]
    %v145 = vld [vmem:[#allocation8 + $0x58] sm:$0xff]
    %v146 = vld [vmem:[#allocation8 + $0x60] sm:$0xff]
    %v147 = vld [vmem:[#allocation8 + $0x68] sm:$0xff]
    %v148 = vld [vmem:[#allocation8 + $0x70] sm:$0xff]
    %v149 = vld [vmem:[#allocation8 + $0x78] sm:$0xff]
    %v150 = vld [vmem:[#allocation8 + $0x80] sm:$0xff]
    %v151 = vld [vmem:[#allocation8 + $0x88] sm:$0xff]
    %v152 = vld [vmem:[#allocation8 + $0x90] sm:$0xff]
    %v153 = vld [vmem:[#allocation8 + $0x98] sm:$0xff]
    %v154 = vld [vmem:[#allocation8 + $0xa0] sm:$0xff]
    %v155 = vld [vmem:[#allocation8 + $0xa8] sm:$0xff]
    %v156 = vld [vmem:[#allocation8 + $0xb0] sm:$0xff]
    %v157 = vld [vmem:[#allocation8 + $0xb8] sm:$0xff]
    %v158 = vld [vmem:[#allocation8 + $0xc0] sm:$0xff]
    %v159 = vld [vmem:[#allocation8 + $0xc8] sm:$0xff]
    %v160 = vld [vmem:[#allocation8 + $0xd0] sm:$0xff]
    %v161 = vld [vmem:[#allocation8 + $0xd8] sm:$0xff]
    %v162 = vld [vmem:[#allocation8 + $0xe0] sm:$0xff]
    %v163 = vld [vmem:[#allocation8 + $0xe8] sm:$0xff]
    %v164 = vld [vmem:[#allocation8 + $0xf0] sm:$0xff]
    %v165 = vld [vmem:[#allocation8 + $0xf8] sm:$0xff]
    %v166 = vld [vmem:[#allocation8 + $0x100] sm:$0xff]
    %v167 = vld [vmem:[#allocation8 + $0x108] sm:$0xff]
    %v168 = vld [vmem:[#allocation8 + $0x110] sm:$0xff]
    %v169 = vld [vmem:[#allocation8 + $0x118] sm:$0xff]
    %v170 = vld [vmem:[#allocation8 + $0x120] sm:$0xff]
    %v171 = vld [vmem:[#allocation8 + $0x128] sm:$0xff]
    %v172 = vld [vmem:[#allocation8 + $0x130] sm:$0xff]
    %v173 = vld [vmem:[#allocation8 + $0x138] sm:$0xff]
    %v174 = vld [vmem:[#allocation8 + $0x140] sm:$0xff]
    %v175 = vld [vmem:[#allocation8 + $0x148] sm:$0xff]
    %v176 = vld [vmem:[#allocation8 + $0x150] sm:$0xff]
    %v177 = vld [vmem:[#allocation8 + $0x158] sm:$0xff]
    %v178 = vld [vmem:[#allocation8 + $0x160] sm:$0xff]
    %v179 = vld [vmem:[#allocation8 + $0x168] sm:$0xff]
    %v180 = vld [vmem:[#allocation8 + $0x170] sm:$0xff]
    %v181 = vld [vmem:[#allocation8 + $0x178] sm:$0xff]
    %v182 = vld [vmem:[#allocation8 + $0x180] sm:$0xff]
    %v183 = vld [vmem:[#allocation8 + $0x188] sm:$0xff]
    %v184 = vld [vmem:[#allocation8 + $0x190] sm:$0xff]
    %v185 = vld [vmem:[#allocation8 + $0x198] sm:$0xff]
    %v186 = vld [vmem:[#allocation8 + $0x1a0] sm:$0xff]
    %v187 = vld [vmem:[#allocation8 + $0x1a8] sm:$0xff]
    %v188 = vld [vmem:[#allocation8 + $0x1b0] sm:$0xff]
    %v189 = vld [vmem:[#allocation8 + $0x1b8] sm:$0xff]
    %v190 = vld [vmem:[#allocation8 + $0x1c0] sm:$0xff]
    %v191 = vld [vmem:[#allocation8 + $0x1c8] sm:$0xff]
    %v192 = vld [vmem:[#allocation8 + $0x1d0] sm:$0xff]
    %v193 = vld [vmem:[#allocation8 + $0x1d8] sm:$0xff]
    %v194 = vld [vmem:[#allocation8 + $0x1e0] sm:$0xff]
    %v195 = vld [vmem:[#allocation8 + $0x1e8] sm:$0xff]
    %v196 = vld [vmem:[#allocation8 + $0x1f0] sm:$0xff]
    %v197 = vld [vmem:[#allocation8 + $0x1f8] sm:$0xff]
    %v198 = vld [vmem:[#allocation8 + $0x200] sm:$0xff]
    %v199 = vld [vmem:[#allocation8 + $0x208] sm:$0xff]
    %v200 = vld [vmem:[#allocation8 + $0x210] sm:$0xff]
    %v201 = vld [vmem:[#allocation8 + $0x218] sm:$0xff]
    %v202 = vld [vmem:[#allocation8 + $0x220] sm:$0xff]
    %v203 = vld [vmem:[#allocation8 + $0x228] sm:$0xff]
    %v204 = vld [vmem:[#allocation8 + $0x230] sm:$0xff]
    %v205 = vld [vmem:[#allocation8 + $0x238] sm:$0xff]
    %v206 = vld [vmem:[#allocation8 + $0x240] sm:$0xff]
    %v207 = vld [vmem:[#allocation8 + $0x248] sm:$0xff]
    %v208 = vld [vmem:[#allocation8 + $0x250] sm:$0xff]
    %v209 = vld [vmem:[#allocation8 + $0x258] sm:$0xff]
    %v210 = vld [vmem:[#allocation8 + $0x260] sm:$0xff]
    %v211 = vld [vmem:[#allocation8 + $0x268] sm:$0xff]
    %v212 = vld [vmem:[#allocation8 + $0x270] sm:$0xff]
    %v213 = vld [vmem:[#allocation8 + $0x278] sm:$0xff]
    %v214 = vld [vmem:[#allocation8 + $0x280] sm:$0xff]
    %v215 = vld [vmem:[#allocation8 + $0x288] sm:$0xff]
    %v216 = vld [vmem:[#allocation8 + $0x290] sm:$0xff]
    %v217 = vld [vmem:[#allocation8 + $0x298] sm:$0xff]
    %v218 = vld [vmem:[#allocation8 + $0x2a0] sm:$0xff]
    %v219 = vld [vmem:[#allocation8 + $0x2a8] sm:$0xff]
    %v220 = vld [vmem:[#allocation8 + $0x2b0] sm:$0xff]
    %v221 = vld [vmem:[#allocation8 + $0x2b8] sm:$0xff]
    %v222 = vld [vmem:[#allocation8 + $0x2c0] sm:$0xff]
    %v223 = vld [vmem:[#allocation8 + $0x2c8] sm:$0xff]
    %v224 = vld [vmem:[#allocation8 + $0x2d0] sm:$0xff]
    %v225 = vld [vmem:[#allocation8 + $0x2d8] sm:$0xff]
    %v226 = vld [vmem:[#allocation8 + $0x2e0] sm:$0xff]
    %v227 = vld [vmem:[#allocation8 + $0x2e8] sm:$0xff]
    %v228 = vld [vmem:[#allocation8 + $0x2f0] sm:$0xff]
    %v229 = vld [vmem:[#allocation8 + $0x2f8] sm:$0xff]
    %v230 = vld [vmem:[#allocation8 + $0x300] sm:$0xff]
    %v231 = vld [vmem:[#allocation8 + $0x308] sm:$0xff]
    %v232 = vld [vmem:[#allocation8 + $0x310] sm:$0xff]
    %v233 = vld [vmem:[#allocation8 + $0x318] sm:$0xff]
    %v234 = vld [vmem:[#allocation8 + $0x320] sm:$0xff]
    %v235 = vld [vmem:[#allocation8 + $0x328] sm:$0xff]
    %v236 = vld [vmem:[#allocation8 + $0x330] sm:$0xff]
    %v237 = vld [vmem:[#allocation8 + $0x338] sm:$0xff]
    %v238 = vld [vmem:[#allocation8 + $0x340] sm:$0xff]
    %v239 = vld [vmem:[#allocation8 + $0x348] sm:$0xff]
    %v240 = vld [vmem:[#allocation8 + $0x350] sm:$0xff]
    %v241 = vld [vmem:[#allocation8 + $0x358] sm:$0xff]
    %v242 = vld [vmem:[#allocation8 + $0x360] sm:$0xff]
    %v243 = vld [vmem:[#allocation8 + $0x368] sm:$0xff]
    %v244 = vld [vmem:[#allocation8 + $0x370] sm:$0xff]
    %v245 = vld [vmem:[#allocation8 + $0x378] sm:$0xff]
    %v246 = vld [vmem:[#allocation8 + $0x380] sm:$0xff]
    %v247 = vld [vmem:[#allocation8 + $0x388] sm:$0xff]
    %v248 = vld [vmem:[#allocation8 + $0x390] sm:$0xff]
    %v249 = vld [vmem:[#allocation8 + $0x398] sm:$0xff]
    %v250 = vld [vmem:[#allocation8 + $0x3a0] sm:$0xff]
    %v251 = vld [vmem:[#allocation8 + $0x3a8] sm:$0xff]
    %v252 = vld [vmem:[#allocation8 + $0x3b0] sm:$0xff]
    %v253 = vld [vmem:[#allocation8 + $0x3b8] sm:$0xff]
    %v254 = vld [vmem:[#allocation8 + $0x3c0] sm:$0xff]
    %v255 = vld [vmem:[#allocation8 + $0x3c8] sm:$0xff]
    %v256 = vld [vmem:[#allocation8 + $0x3d0] sm:$0xff]
    %v257 = vld [vmem:[#allocation8 + $0x3d8] sm:$0xff]
    %v258 = vld [vmem:[#allocation8 + $0x3e0] sm:$0xff]
    %v259 = vld [vmem:[#allocation8 + $0x3e8] sm:$0xff]
    %v260 = vld [vmem:[#allocation8 + $0x3f0] sm:$0xff]
    %v261 = vld [vmem:[#allocation8 + $0x3f8] sm:$0xff]
    %v262 = vld [vmem:[#allocation8 + $0x400] sm:$0xff]
    %v263 = vld [vmem:[#allocation8 + $0x408] sm:$0xff]
    %v264 = vld [vmem:[#allocation8 + $0x410] sm:$0xff]
    %v265 = vld [vmem:[#allocation8 + $0x418] sm:$0xff]
    %v266 = vld [vmem:[#allocation8 + $0x420] sm:$0xff]
    %v267 = vld [vmem:[#allocation8 + $0x428] sm:$0xff]
    %v268 = vld [vmem:[#allocation8 + $0x430] sm:$0xff]
    %v269 = vld [vmem:[#allocation8 + $0x438] sm:$0xff]
    %v270 = vld [vmem:[#allocation8 + $0x440] sm:$0xff]
    %v271 = vld [vmem:[#allocation8 + $0x448] sm:$0xff]
    %v272 = vld [vmem:[#allocation8 + $0x450] sm:$0xff]
    %v273 = vld [vmem:[#allocation8 + $0x458] sm:$0xff]
    %v274 = vld [vmem:[#allocation8 + $0x460] sm:$0xff]
    %v275 = vld [vmem:[#allocation8 + $0x468] sm:$0xff]
    %v276 = vld [vmem:[#allocation8 + $0x470] sm:$0xff]
    %v277 = vld [vmem:[#allocation8 + $0x478] sm:$0xff]
    %v278 = vld [vmem:[#allocation8 + $0x480] sm:$0xff]
    %v279 = vld [vmem:[#allocation8 + $0x488] sm:$0xff]
    %v280 = vld [vmem:[#allocation8 + $0x490] sm:$0xff]
    %v281 = vld [vmem:[#allocation8 + $0x498] sm:$0xff]
    %v282 = vld [vmem:[#allocation8 + $0x4a0] sm:$0xff]
    %v283 = vld [vmem:[#allocation8 + $0x4a8] sm:$0xff]
    %v284 = vld [vmem:[#allocation8 + $0x4b0] sm:$0xff]
    %v285 = vld [vmem:[#allocation8 + $0x4b8] sm:$0xff]
    %v286 = vld [vmem:[#allocation8 + $0x4c0] sm:$0xff]
    %v287 = vld [vmem:[#allocation8 + $0x4c8] sm:$0xff]
    %v288 = vld [vmem:[#allocation8 + $0x4d0] sm:$0xff]
    %v289 = vld [vmem:[#allocation8 + $0x4d8] sm:$0xff]
    %v290 = vld [vmem:[#allocation8 + $0x4e0] sm:$0xff]
    %v291 = vld [vmem:[#allocation8 + $0x4e8] sm:$0xff]
    %v292 = vld [vmem:[#allocation8 + $0x4f0] sm:$0xff]
    %v293 = vld [vmem:[#allocation8 + $0x4f8] sm:$0xff]
    %v294 = vld [vmem:[#allocation8 + $0x500] sm:$0xff]
    %v295 = vld [vmem:[#allocation8 + $0x508] sm:$0xff]
    %v296 = vld [vmem:[#allocation8 + $0x510] sm:$0xff]
    %v297 = vld [vmem:[#allocation8 + $0x518] sm:$0xff]
    %v298 = vld [vmem:[#allocation8 + $0x520] sm:$0xff]
    %v299 = vld [vmem:[#allocation8 + $0x528] sm:$0xff]
    %v300 = vld [vmem:[#allocation8 + $0x530] sm:$0xff]
    %v301 = vld [vmem:[#allocation8 + $0x538] sm:$0xff]
    %v302 = vld [vmem:[#allocation8 + $0x540] sm:$0xff]
    %v303 = vld [vmem:[#allocation8 + $0x548] sm:$0xff]
    %v304 = vld [vmem:[#allocation8 + $0x550] sm:$0xff]
    %v305 = vld [vmem:[#allocation8 + $0x558] sm:$0xff]
    %v306 = vld [vmem:[#allocation8 + $0x560] sm:$0xff]
    %v307 = vld [vmem:[#allocation8 + $0x568] sm:$0xff]
    %v308 = vld [vmem:[#allocation8 + $0x570] sm:$0xff]
    %v309 = vld [vmem:[#allocation8 + $0x578] sm:$0xff]
    %v310 = vld [vmem:[#allocation8 + $0x580] sm:$0xff]
    %v311 = vld [vmem:[#allocation8 + $0x588] sm:$0xff]
    %v312 = vld [vmem:[#allocation8 + $0x590] sm:$0xff]
    %v313 = vld [vmem:[#allocation8 + $0x598] sm:$0xff]
    %v314 = vld [vmem:[#allocation8 + $0x5a0] sm:$0xff]
    %v315 = vld [vmem:[#allocation8 + $0x5a8] sm:$0xff]
    %v316 = vld [vmem:[#allocation8 + $0x5b0] sm:$0xff]
    %v317 = vld [vmem:[#allocation8 + $0x5b8] sm:$0xff]
    %v318 = vld [vmem:[#allocation8 + $0x5c0] sm:$0xff]
    %v319 = vld [vmem:[#allocation8 + $0x5c8] sm:$0xff]
    %v320 = vld [vmem:[#allocation8 + $0x5d0] sm:$0xff]
    %v321 = vld [vmem:[#allocation8 + $0x5d8] sm:$0xff]
    %v322 = vld [vmem:[#allocation8 + $0x5e0] sm:$0xff]
    %v323 = vld [vmem:[#allocation8 + $0x5e8] sm:$0xff]
    %v324 = vld [vmem:[#allocation8 + $0x5f0] sm:$0xff]
    %v325 = vld [vmem:[#allocation8 + $0x5f8] sm:$0xff]
    %v326 = vld [vmem:[#allocation8 + $0x600] sm:$0xff]
    %v327 = vld [vmem:[#allocation8 + $0x608] sm:$0xff]
    %v328 = vld [vmem:[#allocation8 + $0x610] sm:$0xff]
    %v329 = vld [vmem:[#allocation8 + $0x618] sm:$0xff]
    %v330 = vld [vmem:[#allocation8 + $0x620] sm:$0xff]
    %v331 = vld [vmem:[#allocation8 + $0x628] sm:$0xff]
    %v332 = vld [vmem:[#allocation8 + $0x630] sm:$0xff]
    %v333 = vld [vmem:[#allocation8 + $0x638] sm:$0xff]
    %v334 = vld [vmem:[#allocation8 + $0x640] sm:$0xff]
    %v335 = vld [vmem:[#allocation8 + $0x648] sm:$0xff]
    %v336 = vld [vmem:[#allocation8 + $0x650] sm:$0xff]
    %v337 = vld [vmem:[#allocation8 + $0x658] sm:$0xff]
    %v338 = vld [vmem:[#allocation8 + $0x660] sm:$0xff]
    %v339 = vld [vmem:[#allocation8 + $0x668] sm:$0xff]
    %v340 = vld [vmem:[#allocation8 + $0x670] sm:$0xff]
    %v341 = vld [vmem:[#allocation8 + $0x678] sm:$0xff]
    %v342 = vld [vmem:[#allocation8 + $0x680] sm:$0xff]
    %v343 = vld [vmem:[#allocation8 + $0x688] sm:$0xff]
    %v344 = vld [vmem:[#allocation8 + $0x690] sm:$0xff]
    %v345 = vld [vmem:[#allocation8 + $0x698] sm:$0xff]
    %v346 = vld [vmem:[#allocation8 + $0x6a0] sm:$0xff]
    %v347 = vld [vmem:[#allocation8 + $0x6a8] sm:$0xff]
    %v348 = vld [vmem:[#allocation8 + $0x6b0] sm:$0xff]
    %v349 = vld [vmem:[#allocation8 + $0x6b8] sm:$0xff]
    %v350 = vld [vmem:[#allocation8 + $0x6c0] sm:$0xff]
    %v351 = vld [vmem:[#allocation8 + $0x6c8] sm:$0xff]
    %v352 = vld [vmem:[#allocation8 + $0x6d0] sm:$0xff]
    %v353 = vld [vmem:[#allocation8 + $0x6d8] sm:$0xff]
    %v354 = vld [vmem:[#allocation8 + $0x6e0] sm:$0xff]
    %v355 = vld [vmem:[#allocation8 + $0x6e8] sm:$0xff]
    %v356 = vld [vmem:[#allocation8 + $0x6f0] sm:$0xff]
    %v357 = vld [vmem:[#allocation8 + $0x6f8] sm:$0xff]
    %v358 = vld [vmem:[#allocation8 + $0x700] sm:$0xff]
    %v359 = vld [vmem:[#allocation8 + $0x708] sm:$0xff]
    %v360 = vld [vmem:[#allocation8 + $0x710] sm:$0xff]
    %v361 = vld [vmem:[#allocation8 + $0x718] sm:$0xff]
    %v362 = vld [vmem:[#allocation8 + $0x720] sm:$0xff]
    %v363 = vld [vmem:[#allocation8 + $0x728] sm:$0xff]
    %v364 = vld [vmem:[#allocation8 + $0x730] sm:$0xff]
    %v365 = vld [vmem:[#allocation8 + $0x738] sm:$0xff]
    %v366 = vld [vmem:[#allocation8 + $0x740] sm:$0xff]
    %v367 = vld [vmem:[#allocation8 + $0x748] sm:$0xff]
    %v368 = vld [vmem:[#allocation8 + $0x750] sm:$0xff]
    %v369 = vld [vmem:[#allocation8 + $0x758] sm:$0xff]
    %v370 = vld [vmem:[#allocation8 + $0x760] sm:$0xff]
    %v371 = vld [vmem:[#allocation8 + $0x768] sm:$0xff]
    %v372 = vld [vmem:[#allocation8 + $0x770] sm:$0xff]
    %v373 = vld [vmem:[#allocation8 + $0x778] sm:$0xff]
    %v374 = vld [vmem:[#allocation8 + $0x780] sm:$0xff]
    %v375 = vld [vmem:[#allocation8 + $0x788] sm:$0xff]
    %v376 = vld [vmem:[#allocation8 + $0x790] sm:$0xff]
    %v377 = vld [vmem:[#allocation8 + $0x798] sm:$0xff]
    %v378 = vld [vmem:[#allocation8 + $0x7a0] sm:$0xff]
    %v379 = vld [vmem:[#allocation8 + $0x7a8] sm:$0xff]
    %v380 = vld [vmem:[#allocation8 + $0x7b0] sm:$0xff]
    %v381 = vld [vmem:[#allocation8 + $0x7b8] sm:$0xff]
    %v382 = vld [vmem:[#allocation8 + $0x7c0] sm:$0xff]
    %v383 = vld [vmem:[#allocation8 + $0x7c8] sm:$0xff]
    %v384 = vld [vmem:[#allocation8 + $0x7d0] sm:$0xff]
    %v385 = vld [vmem:[#allocation8 + $0x7d8] sm:$0xff]
    %v386 = vld [vmem:[#allocation8 + $0x7e0] sm:$0xff]
    %v387 = vld [vmem:[#allocation8 + $0x7e8] sm:$0xff]
    %v388 = vld [vmem:[#allocation8 + $0x7f0] sm:$0xff]
    %v389 = vld [vmem:[#allocation8 + $0x7f8] sm:$0xff]
    %v390 = vld [vmem:[#allocation11] sm:$0xf]
    %v391 = vld [vmem:[#allocation11 + $0x4] sm:$0xf]
    %v392 = vld [vmem:[#allocation11 + $0x8] sm:$0xf]
    %v393 = vld [vmem:[#allocation11 + $0xc] sm:$0xf]
    %v394 = vld [vmem:[#allocation11 + $0x10] sm:$0xf]
    %v395 = vld [vmem:[#allocation11 + $0x14] sm:$0xf]
    %v396 = vld [vmem:[#allocation11 + $0x18] sm:$0xf]
    %v397 = vld [vmem:[#allocation11 + $0x1c] sm:$0xf]
    %v398 = vld [vmem:[#allocation11 + $0x20] sm:$0xf]
    %v399 = vld [vmem:[#allocation11 + $0x24] sm:$0xf]
    %v400 = vld [vmem:[#allocation11 + $0x28] sm:$0xf]
    %v401 = vld [vmem:[#allocation11 + $0x2c] sm:$0xf]
    %v402 = vld [vmem:[#allocation11 + $0x30] sm:$0xf]
    %v403 = vld [vmem:[#allocation11 + $0x34] sm:$0xf]
    %v404 = vld [vmem:[#allocation11 + $0x38] sm:$0xf]
    %v405 = vld [vmem:[#allocation11 + $0x3c] sm:$0xf]
    %v406 = vld [vmem:[#allocation11 + $0x40] sm:$0xf]
    %v407 = vld [vmem:[#allocation11 + $0x44] sm:$0xf]
    %v408 = vld [vmem:[#allocation11 + $0x48] sm:$0xf]
    %v409 = vld [vmem:[#allocation11 + $0x4c] sm:$0xf]
    %v410 = vld [vmem:[#allocation11 + $0x50] sm:$0xf]
    %v411 = vld [vmem:[#allocation11 + $0x54] sm:$0xf]
    %v412 = vld [vmem:[#allocation11 + $0x58] sm:$0xf]
    %v413 = vld [vmem:[#allocation11 + $0x5c] sm:$0xf]
    %v414 = vld [vmem:[#allocation11 + $0x60] sm:$0xf]
    %v415 = vld [vmem:[#allocation11 + $0x64] sm:$0xf]
    %v416 = vld [vmem:[#allocation11 + $0x68] sm:$0xf]
    %v417 = vld [vmem:[#allocation11 + $0x6c] sm:$0xf]
    %v418 = vld [vmem:[#allocation11 + $0x70] sm:$0xf]
    %v419 = vld [vmem:[#allocation11 + $0x74] sm:$0xf]
    %v420 = vld [vmem:[#allocation11 + $0x78] sm:$0xf]
    %v421 = vld [vmem:[#allocation11 + $0x7c] sm:$0xf]
    %v422 = vld [vmem:[#allocation13] sm:$0xf]
    %v423 = vld [vmem:[#allocation13 + $0x4] sm:$0xf]
    %v424 = vld [vmem:[#allocation13 + $0x8] sm:$0xf]
    %v425 = vld [vmem:[#allocation13 + $0xc] sm:$0xf]
    %v426 = vld [vmem:[#allocation13 + $0x10] sm:$0xf]
    %v427 = vld [vmem:[#allocation13 + $0x14] sm:$0xf]
    %v428 = vld [vmem:[#allocation13 + $0x18] sm:$0xf]
    %v429 = vld [vmem:[#allocation13 + $0x1c] sm:$0xf]
    %v430 = vld [vmem:[#allocation13 + $0x20] sm:$0xf]
    %v431 = vld [vmem:[#allocation13 + $0x24] sm:$0xf]
    %v432 = vld [vmem:[#allocation13 + $0x28] sm:$0xf]
    %v433 = vld [vmem:[#allocation13 + $0x2c] sm:$0xf]
    %v434 = vld [vmem:[#allocation13 + $0x30] sm:$0xf]
    %v435 = vld [vmem:[#allocation13 + $0x34] sm:$0xf]
    %v436 = vld [vmem:[#allocation13 + $0x38] sm:$0xf]
    %v437 = vld [vmem:[#allocation13 + $0x3c] sm:$0xf]
    %v438 = vld [vmem:[#allocation13 + $0x40] sm:$0xf]
    %v439 = vld [vmem:[#allocation13 + $0x44] sm:$0xf]
    %v440 = vld [vmem:[#allocation13 + $0x48] sm:$0xf]
    %v441 = vld [vmem:[#allocation13 + $0x4c] sm:$0xf]
    %v442 = vld [vmem:[#allocation13 + $0x50] sm:$0xf]
    %v443 = vld [vmem:[#allocation13 + $0x54] sm:$0xf]
    %v444 = vld [vmem:[#allocation13 + $0x58] sm:$0xf]
    %v445 = vld [vmem:[#allocation13 + $0x5c] sm:$0xf]
    %v446 = vld [vmem:[#allocation13 + $0x60] sm:$0xf]
    %v447 = vld [vmem:[#allocation13 + $0x64] sm:$0xf]
    %v448 = vld [vmem:[#allocation13 + $0x68] sm:$0xf]
    %v449 = vld [vmem:[#allocation13 + $0x6c] sm:$0xf]
    %v450 = vld [vmem:[#allocation13 + $0x70] sm:$0xf]
    %v451 = vld [vmem:[#allocation13 + $0x74] sm:$0xf]
    %v452 = vld [vmem:[#allocation13 + $0x78] sm:$0xf]
    %v453 = vld [vmem:[#allocation13 + $0x7c] sm:$0xf]
    %v454 = vld [vmem:[#allocation10] sm:$0xf]
    %v456 = vperm.slane %v454, 0
    %v457 = vperm.slane %v454, 1
    %v458 = vperm.slane %v454, 2
    %v459 = vperm.slane %v454, 3
    %v464 = vld [vmem:[%s7] sm:$0x1]
    %v466 = vperm.slane %v464, 0
    %v468 = vld [vmem:[%s8] sm:$0x1]
    %v470 = vperm.slane %v468, 0
    %v472 = vld [vmem:[#allocation2] sm:$0xff]
    %474 = vst [vmem:[#allocation1] ss:$9 sm:$0xff] %v472
    %v475 = vld [vmem:[#allocation1] sm:$0xff]
    %v476 = vld [vmem:[#allocation1 + $0x9] sm:$0xff]
    %v477 = vld [vmem:[#allocation1 + $0x12] sm:$0xff]
    %v478 = vld [vmem:[#allocation1 + $0x1b] sm:$0xff]
    %v479 = vld [vmem:[#allocation1 + $0x24] sm:$0xff]
    %v480 = vld [vmem:[#allocation1 + $0x2d] sm:$0xff]
    %v481 = vld [vmem:[#allocation1 + $0x36] sm:$0xff]
    %v482 = vld [vmem:[#allocation1 + $0x3f] sm:$0xff]
    %v747 = vunpack.c.l.b16 %v134
    %v748 = vunpack.c.h.b16 %v134
    %v749 = vunpack.c.l.b16 %v135
    %v750 = vunpack.c.h.b16 %v135
    %v751 = vunpack.c.l.b16 %v136
    %v752 = vunpack.c.h.b16 %v136
    %v753 = vunpack.c.l.b16 %v137
    %v754 = vunpack.c.h.b16 %v137
    %v755 = vunpack.c.l.b16 %v138
    %v756 = vunpack.c.h.b16 %v138
    %v757 = vunpack.c.l.b16 %v139
    %v758 = vunpack.c.h.b16 %v139
    %v759 = vunpack.c.l.b16 %v140
    %v760 = vunpack.c.h.b16 %v140
    %v761 = vunpack.c.l.b16 %v141
    %v762 = vunpack.c.h.b16 %v141
    %v763 = vunpack.c.l.b16 %v142
    %v764 = vunpack.c.h.b16 %v142
    %v765 = vunpack.c.l.b16 %v143
    %v766 = vunpack.c.h.b16 %v143
    %v767 = vunpack.c.l.b16 %v144
    %v768 = vunpack.c.h.b16 %v144
    %v769 = vunpack.c.l.b16 %v145
    %v770 = vunpack.c.h.b16 %v145
    %v771 = vunpack.c.l.b16 %v146
    %v772 = vunpack.c.h.b16 %v146
    %v773 = vunpack.c.l.b16 %v147
    %v774 = vunpack.c.h.b16 %v147
    %v775 = vunpack.c.l.b16 %v148
    %v776 = vunpack.c.h.b16 %v148
    %v777 = vunpack.c.l.b16 %v149
    %v778 = vunpack.c.h.b16 %v149
    %v779 = vunpack.c.l.b16 %v150
    %v780 = vunpack.c.h.b16 %v150
    %v781 = vunpack.c.l.b16 %v151
    %v782 = vunpack.c.h.b16 %v151
    %v783 = vunpack.c.l.b16 %v152
    %v784 = vunpack.c.h.b16 %v152
    %v785 = vunpack.c.l.b16 %v153
    %v786 = vunpack.c.h.b16 %v153
    %v787 = vunpack.c.l.b16 %v154
    %v788 = vunpack.c.h.b16 %v154
    %v789 = vunpack.c.l.b16 %v155
    %v790 = vunpack.c.h.b16 %v155
    %v791 = vunpack.c.l.b16 %v156
    %v792 = vunpack.c.h.b16 %v156
    %v793 = vunpack.c.l.b16 %v157
    %v794 = vunpack.c.h.b16 %v157
    %v795 = vunpack.c.l.b16 %v158
    %v796 = vunpack.c.h.b16 %v158
    %v797 = vunpack.c.l.b16 %v159
    %v798 = vunpack.c.h.b16 %v159
    %v799 = vunpack.c.l.b16 %v160
    %v800 = vunpack.c.h.b16 %v160
    %v801 = vunpack.c.l.b16 %v161
    %v802 = vunpack.c.h.b16 %v161
    %v803 = vunpack.c.l.b16 %v162
    %v804 = vunpack.c.h.b16 %v162
    %v805 = vunpack.c.l.b16 %v163
    %v806 = vunpack.c.h.b16 %v163
    %v807 = vunpack.c.l.b16 %v164
    %v808 = vunpack.c.h.b16 %v164
    %v809 = vunpack.c.l.b16 %v165
    %v810 = vunpack.c.h.b16 %v165
    %v811 = vunpack.c.l.b16 %v166
    %v812 = vunpack.c.h.b16 %v166
    %v813 = vunpack.c.l.b16 %v167
    %v814 = vunpack.c.h.b16 %v167
    %v815 = vunpack.c.l.b16 %v168
    %v816 = vunpack.c.h.b16 %v168
    %v817 = vunpack.c.l.b16 %v169
    %v818 = vunpack.c.h.b16 %v169
    %v819 = vunpack.c.l.b16 %v170
    %v820 = vunpack.c.h.b16 %v170
    %v821 = vunpack.c.l.b16 %v171
    %v822 = vunpack.c.h.b16 %v171
    %v823 = vunpack.c.l.b16 %v172
    %v824 = vunpack.c.h.b16 %v172
    %v825 = vunpack.c.l.b16 %v173
    %v826 = vunpack.c.h.b16 %v173
    %v827 = vunpack.c.l.b16 %v174
    %v828 = vunpack.c.h.b16 %v174
    %v829 = vunpack.c.l.b16 %v175
    %v830 = vunpack.c.h.b16 %v175
    %v831 = vunpack.c.l.b16 %v176
    %v832 = vunpack.c.h.b16 %v176
    %v833 = vunpack.c.l.b16 %v177
    %v834 = vunpack.c.h.b16 %v177
    %v835 = vunpack.c.l.b16 %v178
    %v836 = vunpack.c.h.b16 %v178
    %v837 = vunpack.c.l.b16 %v179
    %v838 = vunpack.c.h.b16 %v179
    %v839 = vunpack.c.l.b16 %v180
    %v840 = vunpack.c.h.b16 %v180
    %v841 = vunpack.c.l.b16 %v181
    %v842 = vunpack.c.h.b16 %v181
    %v843 = vunpack.c.l.b16 %v182
    %v844 = vunpack.c.h.b16 %v182
    %v845 = vunpack.c.l.b16 %v183
    %v846 = vunpack.c.h.b16 %v183
    %v847 = vunpack.c.l.b16 %v184
    %v848 = vunpack.c.h.b16 %v184
    %v849 = vunpack.c.l.b16 %v185
    %v850 = vunpack.c.h.b16 %v185
    %v851 = vunpack.c.l.b16 %v186
    %v852 = vunpack.c.h.b16 %v186
    %v853 = vunpack.c.l.b16 %v187
    %v854 = vunpack.c.h.b16 %v187
    %v855 = vunpack.c.l.b16 %v188
    %v856 = vunpack.c.h.b16 %v188
    %v857 = vunpack.c.l.b16 %v189
    %v858 = vunpack.c.h.b16 %v189
    %v859 = vunpack.c.l.b16 %v190
    %v860 = vunpack.c.h.b16 %v190
    %v861 = vunpack.c.l.b16 %v191
    %v862 = vunpack.c.h.b16 %v191
    %v863 = vunpack.c.l.b16 %v192
    %v864 = vunpack.c.h.b16 %v192
    %v865 = vunpack.c.l.b16 %v193
    %v866 = vunpack.c.h.b16 %v193
    %v867 = vunpack.c.l.b16 %v194
    %v868 = vunpack.c.h.b16 %v194
    %v869 = vunpack.c.l.b16 %v195
    %v870 = vunpack.c.h.b16 %v195
    %v871 = vunpack.c.l.b16 %v196
    %v872 = vunpack.c.h.b16 %v196
    %v873 = vunpack.c.l.b16 %v197
    %v874 = vunpack.c.h.b16 %v197
    %v875 = vunpack.c.l.b16 %v198
    %v876 = vunpack.c.h.b16 %v198
    %v877 = vunpack.c.l.b16 %v199
    %v878 = vunpack.c.h.b16 %v199
    %v879 = vunpack.c.l.b16 %v200
    %v880 = vunpack.c.h.b16 %v200
    %v881 = vunpack.c.l.b16 %v201
    %v882 = vunpack.c.h.b16 %v201
    %v883 = vunpack.c.l.b16 %v202
    %v884 = vunpack.c.h.b16 %v202
    %v885 = vunpack.c.l.b16 %v203
    %v886 = vunpack.c.h.b16 %v203
    %v887 = vunpack.c.l.b16 %v204
    %v888 = vunpack.c.h.b16 %v204
    %v889 = vunpack.c.l.b16 %v205
    %v890 = vunpack.c.h.b16 %v205
    %v891 = vunpack.c.l.b16 %v206
    %v892 = vunpack.c.h.b16 %v206
    %v893 = vunpack.c.l.b16 %v207
    %v894 = vunpack.c.h.b16 %v207
    %v895 = vunpack.c.l.b16 %v208
    %v896 = vunpack.c.h.b16 %v208
    %v897 = vunpack.c.l.b16 %v209
    %v898 = vunpack.c.h.b16 %v209
    %v899 = vunpack.c.l.b16 %v210
    %v900 = vunpack.c.h.b16 %v210
    %v901 = vunpack.c.l.b16 %v211
    %v902 = vunpack.c.h.b16 %v211
    %v903 = vunpack.c.l.b16 %v212
    %v904 = vunpack.c.h.b16 %v212
    %v905 = vunpack.c.l.b16 %v213
    %v906 = vunpack.c.h.b16 %v213
    %v907 = vunpack.c.l.b16 %v214
    %v908 = vunpack.c.h.b16 %v214
    %v909 = vunpack.c.l.b16 %v215
    %v910 = vunpack.c.h.b16 %v215
    %v911 = vunpack.c.l.b16 %v216
    %v912 = vunpack.c.h.b16 %v216
    %v913 = vunpack.c.l.b16 %v217
    %v914 = vunpack.c.h.b16 %v217
    %v915 = vunpack.c.l.b16 %v218
    %v916 = vunpack.c.h.b16 %v218
    %v917 = vunpack.c.l.b16 %v219
    %v918 = vunpack.c.h.b16 %v219
    %v919 = vunpack.c.l.b16 %v220
    %v920 = vunpack.c.h.b16 %v220
    %v921 = vunpack.c.l.b16 %v221
    %v922 = vunpack.c.h.b16 %v221
    %v923 = vunpack.c.l.b16 %v222
    %v924 = vunpack.c.h.b16 %v222
    %v925 = vunpack.c.l.b16 %v223
    %v926 = vunpack.c.h.b16 %v223
    %v927 = vunpack.c.l.b16 %v224
    %v928 = vunpack.c.h.b16 %v224
    %v929 = vunpack.c.l.b16 %v225
    %v930 = vunpack.c.h.b16 %v225
    %v931 = vunpack.c.l.b16 %v226
    %v932 = vunpack.c.h.b16 %v226
    %v933 = vunpack.c.l.b16 %v227
    %v934 = vunpack.c.h.b16 %v227
    %v935 = vunpack.c.l.b16 %v228
    %v936 = vunpack.c.h.b16 %v228
    %v937 = vunpack.c.l.b16 %v229
    %v938 = vunpack.c.h.b16 %v229
    %v939 = vunpack.c.l.b16 %v230
    %v940 = vunpack.c.h.b16 %v230
    %v941 = vunpack.c.l.b16 %v231
    %v942 = vunpack.c.h.b16 %v231
    %v943 = vunpack.c.l.b16 %v232
    %v944 = vunpack.c.h.b16 %v232
    %v945 = vunpack.c.l.b16 %v233
    %v946 = vunpack.c.h.b16 %v233
    %v947 = vunpack.c.l.b16 %v234
    %v948 = vunpack.c.h.b16 %v234
    %v949 = vunpack.c.l.b16 %v235
    %v950 = vunpack.c.h.b16 %v235
    %v951 = vunpack.c.l.b16 %v236
    %v952 = vunpack.c.h.b16 %v236
    %v953 = vunpack.c.l.b16 %v237
    %v954 = vunpack.c.h.b16 %v237
    %v955 = vunpack.c.l.b16 %v238
    %v956 = vunpack.c.h.b16 %v238
    %v957 = vunpack.c.l.b16 %v239
    %v958 = vunpack.c.h.b16 %v239
    %v959 = vunpack.c.l.b16 %v240
    %v960 = vunpack.c.h.b16 %v240
    %v961 = vunpack.c.l.b16 %v241
    %v962 = vunpack.c.h.b16 %v241
    %v963 = vunpack.c.l.b16 %v242
    %v964 = vunpack.c.h.b16 %v242
    %v965 = vunpack.c.l.b16 %v243
    %v966 = vunpack.c.h.b16 %v243
    %v967 = vunpack.c.l.b16 %v244
    %v968 = vunpack.c.h.b16 %v244
    %v969 = vunpack.c.l.b16 %v245
    %v970 = vunpack.c.h.b16 %v245
    %v971 = vunpack.c.l.b16 %v246
    %v972 = vunpack.c.h.b16 %v246
    %v973 = vunpack.c.l.b16 %v247
    %v974 = vunpack.c.h.b16 %v247
    %v975 = vunpack.c.l.b16 %v248
    %v976 = vunpack.c.h.b16 %v248
    %v977 = vunpack.c.l.b16 %v249
    %v978 = vunpack.c.h.b16 %v249
    %v979 = vunpack.c.l.b16 %v250
    %v980 = vunpack.c.h.b16 %v250
    %v981 = vunpack.c.l.b16 %v251
    %v982 = vunpack.c.h.b16 %v251
    %v983 = vunpack.c.l.b16 %v252
    %v984 = vunpack.c.h.b16 %v252
    %v985 = vunpack.c.l.b16 %v253
    %v986 = vunpack.c.h.b16 %v253
    %v987 = vunpack.c.l.b16 %v254
    %v988 = vunpack.c.h.b16 %v254
    %v989 = vunpack.c.l.b16 %v255
    %v990 = vunpack.c.h.b16 %v255
    %v991 = vunpack.c.l.b16 %v256
    %v992 = vunpack.c.h.b16 %v256
    %v993 = vunpack.c.l.b16 %v257
    %v994 = vunpack.c.h.b16 %v257
    %v995 = vunpack.c.l.b16 %v258
    %v996 = vunpack.c.h.b16 %v258
    %v997 = vunpack.c.l.b16 %v259
    %v998 = vunpack.c.h.b16 %v259
    %v999 = vunpack.c.l.b16 %v260
    %v1000 = vunpack.c.h.b16 %v260
    %v1001 = vunpack.c.l.b16 %v261
    %v1002 = vunpack.c.h.b16 %v261
    %v1003 = vunpack.c.l.b16 %v262
    %v1004 = vunpack.c.h.b16 %v262
    %v1005 = vunpack.c.l.b16 %v263
    %v1006 = vunpack.c.h.b16 %v263
    %v1007 = vunpack.c.l.b16 %v264
    %v1008 = vunpack.c.h.b16 %v264
    %v1009 = vunpack.c.l.b16 %v265
    %v1010 = vunpack.c.h.b16 %v265
    %v1011 = vunpack.c.l.b16 %v266
    %v1012 = vunpack.c.h.b16 %v266
    %v1013 = vunpack.c.l.b16 %v267
    %v1014 = vunpack.c.h.b16 %v267
    %v1015 = vunpack.c.l.b16 %v268
    %v1016 = vunpack.c.h.b16 %v268
    %v1017 = vunpack.c.l.b16 %v269
    %v1018 = vunpack.c.h.b16 %v269
    %v1019 = vunpack.c.l.b16 %v270
    %v1020 = vunpack.c.h.b16 %v270
    %v1021 = vunpack.c.l.b16 %v271
    %v1022 = vunpack.c.h.b16 %v271
    %v1023 = vunpack.c.l.b16 %v272
    %v1024 = vunpack.c.h.b16 %v272
    %v1025 = vunpack.c.l.b16 %v273
    %v1026 = vunpack.c.h.b16 %v273
    %v1027 = vunpack.c.l.b16 %v274
    %v1028 = vunpack.c.h.b16 %v274
    %v1029 = vunpack.c.l.b16 %v275
    %v1030 = vunpack.c.h.b16 %v275
    %v1031 = vunpack.c.l.b16 %v276
    %v1032 = vunpack.c.h.b16 %v276
    %v1033 = vunpack.c.l.b16 %v277
    %v1034 = vunpack.c.h.b16 %v277
    %v1035 = vunpack.c.l.b16 %v278
    %v1036 = vunpack.c.h.b16 %v278
    %v1037 = vunpack.c.l.b16 %v279
    %v1038 = vunpack.c.h.b16 %v279
    %v1039 = vunpack.c.l.b16 %v280
    %v1040 = vunpack.c.h.b16 %v280
    %v1041 = vunpack.c.l.b16 %v281
    %v1042 = vunpack.c.h.b16 %v281
    %v1043 = vunpack.c.l.b16 %v282
    %v1044 = vunpack.c.h.b16 %v282
    %v1045 = vunpack.c.l.b16 %v283
    %v1046 = vunpack.c.h.b16 %v283
    %v1047 = vunpack.c.l.b16 %v284
    %v1048 = vunpack.c.h.b16 %v284
    %v1049 = vunpack.c.l.b16 %v285
    %v1050 = vunpack.c.h.b16 %v285
    %v1051 = vunpack.c.l.b16 %v286
    %v1052 = vunpack.c.h.b16 %v286
    %v1053 = vunpack.c.l.b16 %v287
    %v1054 = vunpack.c.h.b16 %v287
    %v1055 = vunpack.c.l.b16 %v288
    %v1056 = vunpack.c.h.b16 %v288
    %v1057 = vunpack.c.l.b16 %v289
    %v1058 = vunpack.c.h.b16 %v289
    %v1059 = vunpack.c.l.b16 %v290
    %v1060 = vunpack.c.h.b16 %v290
    %v1061 = vunpack.c.l.b16 %v291
    %v1062 = vunpack.c.h.b16 %v291
    %v1063 = vunpack.c.l.b16 %v292
    %v1064 = vunpack.c.h.b16 %v292
    %v1065 = vunpack.c.l.b16 %v293
    %v1066 = vunpack.c.h.b16 %v293
    %v1067 = vunpack.c.l.b16 %v294
    %v1068 = vunpack.c.h.b16 %v294
    %v1069 = vunpack.c.l.b16 %v295
    %v1070 = vunpack.c.h.b16 %v295
    %v1071 = vunpack.c.l.b16 %v296
    %v1072 = vunpack.c.h.b16 %v296
    %v1073 = vunpack.c.l.b16 %v297
    %v1074 = vunpack.c.h.b16 %v297
    %v1075 = vunpack.c.l.b16 %v298
    %v1076 = vunpack.c.h.b16 %v298
    %v1077 = vunpack.c.l.b16 %v299
    %v1078 = vunpack.c.h.b16 %v299
    %v1079 = vunpack.c.l.b16 %v300
    %v1080 = vunpack.c.h.b16 %v300
    %v1081 = vunpack.c.l.b16 %v301
    %v1082 = vunpack.c.h.b16 %v301
    %v1083 = vunpack.c.l.b16 %v302
    %v1084 = vunpack.c.h.b16 %v302
    %v1085 = vunpack.c.l.b16 %v303
    %v1086 = vunpack.c.h.b16 %v303
    %v1087 = vunpack.c.l.b16 %v304
    %v1088 = vunpack.c.h.b16 %v304
    %v1089 = vunpack.c.l.b16 %v305
    %v1090 = vunpack.c.h.b16 %v305
    %v1091 = vunpack.c.l.b16 %v306
    %v1092 = vunpack.c.h.b16 %v306
    %v1093 = vunpack.c.l.b16 %v307
    %v1094 = vunpack.c.h.b16 %v307
    %v1095 = vunpack.c.l.b16 %v308
    %v1096 = vunpack.c.h.b16 %v308
    %v1097 = vunpack.c.l.b16 %v309
    %v1098 = vunpack.c.h.b16 %v309
    %v1099 = vunpack.c.l.b16 %v310
    %v1100 = vunpack.c.h.b16 %v310
    %v1101 = vunpack.c.l.b16 %v311
    %v1102 = vunpack.c.h.b16 %v311
    %v1103 = vunpack.c.l.b16 %v312
    %v1104 = vunpack.c.h.b16 %v312
    %v1105 = vunpack.c.l.b16 %v313
    %v1106 = vunpack.c.h.b16 %v313
    %v1107 = vunpack.c.l.b16 %v314
    %v1108 = vunpack.c.h.b16 %v314
    %v1109 = vunpack.c.l.b16 %v315
    %v1110 = vunpack.c.h.b16 %v315
    %v1111 = vunpack.c.l.b16 %v316
    %v1112 = vunpack.c.h.b16 %v316
    %v1113 = vunpack.c.l.b16 %v317
    %v1114 = vunpack.c.h.b16 %v317
    %v1115 = vunpack.c.l.b16 %v318
    %v1116 = vunpack.c.h.b16 %v318
    %v1117 = vunpack.c.l.b16 %v319
    %v1118 = vunpack.c.h.b16 %v319
    %v1119 = vunpack.c.l.b16 %v320
    %v1120 = vunpack.c.h.b16 %v320
    %v1121 = vunpack.c.l.b16 %v321
    %v1122 = vunpack.c.h.b16 %v321
    %v1123 = vunpack.c.l.b16 %v322
    %v1124 = vunpack.c.h.b16 %v322
    %v1125 = vunpack.c.l.b16 %v323
    %v1126 = vunpack.c.h.b16 %v323
    %v1127 = vunpack.c.l.b16 %v324
    %v1128 = vunpack.c.h.b16 %v324
    %v1129 = vunpack.c.l.b16 %v325
    %v1130 = vunpack.c.h.b16 %v325
    %v1131 = vunpack.c.l.b16 %v326
    %v1132 = vunpack.c.h.b16 %v326
    %v1133 = vunpack.c.l.b16 %v327
    %v1134 = vunpack.c.h.b16 %v327
    %v1135 = vunpack.c.l.b16 %v328
    %v1136 = vunpack.c.h.b16 %v328
    %v1137 = vunpack.c.l.b16 %v329
    %v1138 = vunpack.c.h.b16 %v329
    %v1139 = vunpack.c.l.b16 %v330
    %v1140 = vunpack.c.h.b16 %v330
    %v1141 = vunpack.c.l.b16 %v331
    %v1142 = vunpack.c.h.b16 %v331
    %v1143 = vunpack.c.l.b16 %v332
    %v1144 = vunpack.c.h.b16 %v332
    %v1145 = vunpack.c.l.b16 %v333
    %v1146 = vunpack.c.h.b16 %v333
    %v1147 = vunpack.c.l.b16 %v334
    %v1148 = vunpack.c.h.b16 %v334
    %v1149 = vunpack.c.l.b16 %v335
    %v1150 = vunpack.c.h.b16 %v335
    %v1151 = vunpack.c.l.b16 %v336
    %v1152 = vunpack.c.h.b16 %v336
    %v1153 = vunpack.c.l.b16 %v337
    %v1154 = vunpack.c.h.b16 %v337
    %v1155 = vunpack.c.l.b16 %v338
    %v1156 = vunpack.c.h.b16 %v338
    %v1157 = vunpack.c.l.b16 %v339
    %v1158 = vunpack.c.h.b16 %v339
    %v1159 = vunpack.c.l.b16 %v340
    %v1160 = vunpack.c.h.b16 %v340
    %v1161 = vunpack.c.l.b16 %v341
    %v1162 = vunpack.c.h.b16 %v341
    %v1163 = vunpack.c.l.b16 %v342
    %v1164 = vunpack.c.h.b16 %v342
    %v1165 = vunpack.c.l.b16 %v343
    %v1166 = vunpack.c.h.b16 %v343
    %v1167 = vunpack.c.l.b16 %v344
    %v1168 = vunpack.c.h.b16 %v344
    %v1169 = vunpack.c.l.b16 %v345
    %v1170 = vunpack.c.h.b16 %v345
    %v1171 = vunpack.c.l.b16 %v346
    %v1172 = vunpack.c.h.b16 %v346
    %v1173 = vunpack.c.l.b16 %v347
    %v1174 = vunpack.c.h.b16 %v347
    %v1175 = vunpack.c.l.b16 %v348
    %v1176 = vunpack.c.h.b16 %v348
    %v1177 = vunpack.c.l.b16 %v349
    %v1178 = vunpack.c.h.b16 %v349
    %v1179 = vunpack.c.l.b16 %v350
    %v1180 = vunpack.c.h.b16 %v350
    %v1181 = vunpack.c.l.b16 %v351
    %v1182 = vunpack.c.h.b16 %v351
    %v1183 = vunpack.c.l.b16 %v352
    %v1184 = vunpack.c.h.b16 %v352
    %v1185 = vunpack.c.l.b16 %v353
    %v1186 = vunpack.c.h.b16 %v353
    %v1187 = vunpack.c.l.b16 %v354
    %v1188 = vunpack.c.h.b16 %v354
    %v1189 = vunpack.c.l.b16 %v355
    %v1190 = vunpack.c.h.b16 %v355
    %v1191 = vunpack.c.l.b16 %v356
    %v1192 = vunpack.c.h.b16 %v356
    %v1193 = vunpack.c.l.b16 %v357
    %v1194 = vunpack.c.h.b16 %v357
    %v1195 = vunpack.c.l.b16 %v358
    %v1196 = vunpack.c.h.b16 %v358
    %v1197 = vunpack.c.l.b16 %v359
    %v1198 = vunpack.c.h.b16 %v359
    %v1199 = vunpack.c.l.b16 %v360
    %v1200 = vunpack.c.h.b16 %v360
    %v1201 = vunpack.c.l.b16 %v361
    %v1202 = vunpack.c.h.b16 %v361
    %v1203 = vunpack.c.l.b16 %v362
    %v1204 = vunpack.c.h.b16 %v362
    %v1205 = vunpack.c.l.b16 %v363
    %v1206 = vunpack.c.h.b16 %v363
    %v1207 = vunpack.c.l.b16 %v364
    %v1208 = vunpack.c.h.b16 %v364
    %v1209 = vunpack.c.l.b16 %v365
    %v1210 = vunpack.c.h.b16 %v365
    %v1211 = vunpack.c.l.b16 %v366
    %v1212 = vunpack.c.h.b16 %v366
    %v1213 = vunpack.c.l.b16 %v367
    %v1214 = vunpack.c.h.b16 %v367
    %v1215 = vunpack.c.l.b16 %v368
    %v1216 = vunpack.c.h.b16 %v368
    %v1217 = vunpack.c.l.b16 %v369
    %v1218 = vunpack.c.h.b16 %v369
    %v1219 = vunpack.c.l.b16 %v370
    %v1220 = vunpack.c.h.b16 %v370
    %v1221 = vunpack.c.l.b16 %v371
    %v1222 = vunpack.c.h.b16 %v371
    %v1223 = vunpack.c.l.b16 %v372
    %v1224 = vunpack.c.h.b16 %v372
    %v1225 = vunpack.c.l.b16 %v373
    %v1226 = vunpack.c.h.b16 %v373
    %v1227 = vunpack.c.l.b16 %v374
    %v1228 = vunpack.c.h.b16 %v374
    %v1229 = vunpack.c.l.b16 %v375
    %v1230 = vunpack.c.h.b16 %v375
    %v1231 = vunpack.c.l.b16 %v376
    %v1232 = vunpack.c.h.b16 %v376
    %v1233 = vunpack.c.l.b16 %v377
    %v1234 = vunpack.c.h.b16 %v377
    %v1235 = vunpack.c.l.b16 %v378
    %v1236 = vunpack.c.h.b16 %v378
    %v1237 = vunpack.c.l.b16 %v379
    %v1238 = vunpack.c.h.b16 %v379
    %v1239 = vunpack.c.l.b16 %v380
    %v1240 = vunpack.c.h.b16 %v380
    %v1241 = vunpack.c.l.b16 %v381
    %v1242 = vunpack.c.h.b16 %v381
    %v1243 = vunpack.c.l.b16 %v382
    %v1244 = vunpack.c.h.b16 %v382
    %v1245 = vunpack.c.l.b16 %v383
    %v1246 = vunpack.c.h.b16 %v383
    %v1247 = vunpack.c.l.b16 %v384
    %v1248 = vunpack.c.h.b16 %v384
    %v1249 = vunpack.c.l.b16 %v385
    %v1250 = vunpack.c.h.b16 %v385
    %v1251 = vunpack.c.l.b16 %v386
    %v1252 = vunpack.c.h.b16 %v386
    %v1253 = vunpack.c.l.b16 %v387
    %v1254 = vunpack.c.h.b16 %v387
    %v1255 = vunpack.c.l.b16 %v388
    %v1256 = vunpack.c.h.b16 %v388
    %v1257 = vunpack.c.l.b16 %v389
    %v1258 = vunpack.c.h.b16 %v389
    %v1259 = vpack.c.b16 %v751, %v747
    %v1260 = vpack.c.b16 %v752, %v748
    %v1261 = vpack.c.b16 %v753, %v749
    %v1262 = vpack.c.b16 %v754, %v750
    %v1263 = vpack.c.b16 %v759, %v755
    %v1264 = vpack.c.b16 %v760, %v756
    %v1265 = vpack.c.b16 %v761, %v757
    %v1266 = vpack.c.b16 %v762, %v758
    %v1267 = vpack.c.b16 %v767, %v763
    %v1268 = vpack.c.b16 %v768, %v764
    %v1269 = vpack.c.b16 %v769, %v765
    %v1270 = vpack.c.b16 %v770, %v766
    %v1271 = vpack.c.b16 %v775, %v771
    %v1272 = vpack.c.b16 %v776, %v772
    %v1273 = vpack.c.b16 %v777, %v773
    %v1274 = vpack.c.b16 %v778, %v774
    %v1275 = vpack.c.b16 %v783, %v779
    %v1276 = vpack.c.b16 %v784, %v780
    %v1277 = vpack.c.b16 %v785, %v781
    %v1278 = vpack.c.b16 %v786, %v782
    %v1279 = vpack.c.b16 %v791, %v787
    %v1280 = vpack.c.b16 %v792, %v788
    %v1281 = vpack.c.b16 %v793, %v789
    %v1282 = vpack.c.b16 %v794, %v790
    %v1283 = vpack.c.b16 %v799, %v795
    %v1284 = vpack.c.b16 %v800, %v796
    %v1285 = vpack.c.b16 %v801, %v797
    %v1286 = vpack.c.b16 %v802, %v798
    %v1287 = vpack.c.b16 %v807, %v803
    %v1288 = vpack.c.b16 %v808, %v804
    %v1289 = vpack.c.b16 %v809, %v805
    %v1290 = vpack.c.b16 %v810, %v806
    %v1291 = vpack.c.b16 %v815, %v811
    %v1292 = vpack.c.b16 %v816, %v812
    %v1293 = vpack.c.b16 %v817, %v813
    %v1294 = vpack.c.b16 %v818, %v814
    %v1295 = vpack.c.b16 %v823, %v819
    %v1296 = vpack.c.b16 %v824, %v820
    %v1297 = vpack.c.b16 %v825, %v821
    %v1298 = vpack.c.b16 %v826, %v822
    %v1299 = vpack.c.b16 %v831, %v827
    %v1300 = vpack.c.b16 %v832, %v828
    %v1301 = vpack.c.b16 %v833, %v829
    %v1302 = vpack.c.b16 %v834, %v830
    %v1303 = vpack.c.b16 %v839, %v835
    %v1304 = vpack.c.b16 %v840, %v836
    %v1305 = vpack.c.b16 %v841, %v837
    %v1306 = vpack.c.b16 %v842, %v838
    %v1307 = vpack.c.b16 %v847, %v843
    %v1308 = vpack.c.b16 %v848, %v844
    %v1309 = vpack.c.b16 %v849, %v845
    %v1310 = vpack.c.b16 %v850, %v846
    %v1311 = vpack.c.b16 %v855, %v851
    %v1312 = vpack.c.b16 %v856, %v852
    %v1313 = vpack.c.b16 %v857, %v853
    %v1314 = vpack.c.b16 %v858, %v854
    %v1315 = vpack.c.b16 %v863, %v859
    %v1316 = vpack.c.b16 %v864, %v860
    %v1317 = vpack.c.b16 %v865, %v861
    %v1318 = vpack.c.b16 %v866, %v862
    %v1319 = vpack.c.b16 %v871, %v867
    %v1320 = vpack.c.b16 %v872, %v868
    %v1321 = vpack.c.b16 %v873, %v869
    %v1322 = vpack.c.b16 %v874, %v870
    %v1323 = vpack.c.b16 %v879, %v875
    %v1324 = vpack.c.b16 %v880, %v876
    %v1325 = vpack.c.b16 %v881, %v877
    %v1326 = vpack.c.b16 %v882, %v878
    %v1327 = vpack.c.b16 %v887, %v883
    %v1328 = vpack.c.b16 %v888, %v884
    %v1329 = vpack.c.b16 %v889, %v885
    %v1330 = vpack.c.b16 %v890, %v886
    %v1331 = vpack.c.b16 %v895, %v891
    %v1332 = vpack.c.b16 %v896, %v892
    %v1333 = vpack.c.b16 %v897, %v893
    %v1334 = vpack.c.b16 %v898, %v894
    %v1335 = vpack.c.b16 %v903, %v899
    %v1336 = vpack.c.b16 %v904, %v900
    %v1337 = vpack.c.b16 %v905, %v901
    %v1338 = vpack.c.b16 %v906, %v902
    %v1339 = vpack.c.b16 %v911, %v907
    %v1340 = vpack.c.b16 %v912, %v908
    %v1341 = vpack.c.b16 %v913, %v909
    %v1342 = vpack.c.b16 %v914, %v910
    %v1343 = vpack.c.b16 %v919, %v915
    %v1344 = vpack.c.b16 %v920, %v916
    %v1345 = vpack.c.b16 %v921, %v917
    %v1346 = vpack.c.b16 %v922, %v918
    %v1347 = vpack.c.b16 %v927, %v923
    %v1348 = vpack.c.b16 %v928, %v924
    %v1349 = vpack.c.b16 %v929, %v925
    %v1350 = vpack.c.b16 %v930, %v926
    %v1351 = vpack.c.b16 %v935, %v931
    %v1352 = vpack.c.b16 %v936, %v932
    %v1353 = vpack.c.b16 %v937, %v933
    %v1354 = vpack.c.b16 %v938, %v934
    %v1355 = vpack.c.b16 %v943, %v939
    %v1356 = vpack.c.b16 %v944, %v940
    %v1357 = vpack.c.b16 %v945, %v941
    %v1358 = vpack.c.b16 %v946, %v942
    %v1359 = vpack.c.b16 %v951, %v947
    %v1360 = vpack.c.b16 %v952, %v948
    %v1361 = vpack.c.b16 %v953, %v949
    %v1362 = vpack.c.b16 %v954, %v950
    %v1363 = vpack.c.b16 %v959, %v955
    %v1364 = vpack.c.b16 %v960, %v956
    %v1365 = vpack.c.b16 %v961, %v957
    %v1366 = vpack.c.b16 %v962, %v958
    %v1367 = vpack.c.b16 %v967, %v963
    %v1368 = vpack.c.b16 %v968, %v964
    %v1369 = vpack.c.b16 %v969, %v965
    %v1370 = vpack.c.b16 %v970, %v966
    %v1371 = vpack.c.b16 %v975, %v971
    %v1372 = vpack.c.b16 %v976, %v972
    %v1373 = vpack.c.b16 %v977, %v973
    %v1374 = vpack.c.b16 %v978, %v974
    %v1375 = vpack.c.b16 %v983, %v979
    %v1376 = vpack.c.b16 %v984, %v980
    %v1377 = vpack.c.b16 %v985, %v981
    %v1378 = vpack.c.b16 %v986, %v982
    %v1379 = vpack.c.b16 %v991, %v987
    %v1380 = vpack.c.b16 %v992, %v988
    %v1381 = vpack.c.b16 %v993, %v989
    %v1382 = vpack.c.b16 %v994, %v990
    %v1383 = vpack.c.b16 %v999, %v995
    %v1384 = vpack.c.b16 %v1000, %v996
    %v1385 = vpack.c.b16 %v1001, %v997
    %v1386 = vpack.c.b16 %v1002, %v998
    %v1387 = vpack.c.b16 %v1007, %v1003
    %v1388 = vpack.c.b16 %v1008, %v1004
    %v1389 = vpack.c.b16 %v1009, %v1005
    %v1390 = vpack.c.b16 %v1010, %v1006
    %v1391 = vpack.c.b16 %v1015, %v1011
    %v1392 = vpack.c.b16 %v1016, %v1012
    %v1393 = vpack.c.b16 %v1017, %v1013
    %v1394 = vpack.c.b16 %v1018, %v1014
    %v1395 = vpack.c.b16 %v1023, %v1019
    %v1396 = vpack.c.b16 %v1024, %v1020
    %v1397 = vpack.c.b16 %v1025, %v1021
    %v1398 = vpack.c.b16 %v1026, %v1022
    %v1399 = vpack.c.b16 %v1031, %v1027
    %v1400 = vpack.c.b16 %v1032, %v1028
    %v1401 = vpack.c.b16 %v1033, %v1029
    %v1402 = vpack.c.b16 %v1034, %v1030
    %v1403 = vpack.c.b16 %v1039, %v1035
    %v1404 = vpack.c.b16 %v1040, %v1036
    %v1405 = vpack.c.b16 %v1041, %v1037
    %v1406 = vpack.c.b16 %v1042, %v1038
    %v1407 = vpack.c.b16 %v1047, %v1043
    %v1408 = vpack.c.b16 %v1048, %v1044
    %v1409 = vpack.c.b16 %v1049, %v1045
    %v1410 = vpack.c.b16 %v1050, %v1046
    %v1411 = vpack.c.b16 %v1055, %v1051
    %v1412 = vpack.c.b16 %v1056, %v1052
    %v1413 = vpack.c.b16 %v1057, %v1053
    %v1414 = vpack.c.b16 %v1058, %v1054
    %v1415 = vpack.c.b16 %v1063, %v1059
    %v1416 = vpack.c.b16 %v1064, %v1060
    %v1417 = vpack.c.b16 %v1065, %v1061
    %v1418 = vpack.c.b16 %v1066, %v1062
    %v1419 = vpack.c.b16 %v1071, %v1067
    %v1420 = vpack.c.b16 %v1072, %v1068
    %v1421 = vpack.c.b16 %v1073, %v1069
    %v1422 = vpack.c.b16 %v1074, %v1070
    %v1423 = vpack.c.b16 %v1079, %v1075
    %v1424 = vpack.c.b16 %v1080, %v1076
    %v1425 = vpack.c.b16 %v1081, %v1077
    %v1426 = vpack.c.b16 %v1082, %v1078
    %v1427 = vpack.c.b16 %v1087, %v1083
    %v1428 = vpack.c.b16 %v1088, %v1084
    %v1429 = vpack.c.b16 %v1089, %v1085
    %v1430 = vpack.c.b16 %v1090, %v1086
    %v1431 = vpack.c.b16 %v1095, %v1091
    %v1432 = vpack.c.b16 %v1096, %v1092
    %v1433 = vpack.c.b16 %v1097, %v1093
    %v1434 = vpack.c.b16 %v1098, %v1094
    %v1435 = vpack.c.b16 %v1103, %v1099
    %v1436 = vpack.c.b16 %v1104, %v1100
    %v1437 = vpack.c.b16 %v1105, %v1101
    %v1438 = vpack.c.b16 %v1106, %v1102
    %v1439 = vpack.c.b16 %v1111, %v1107
    %v1440 = vpack.c.b16 %v1112, %v1108
    %v1441 = vpack.c.b16 %v1113, %v1109
    %v1442 = vpack.c.b16 %v1114, %v1110
    %v1443 = vpack.c.b16 %v1119, %v1115
    %v1444 = vpack.c.b16 %v1120, %v1116
    %v1445 = vpack.c.b16 %v1121, %v1117
    %v1446 = vpack.c.b16 %v1122, %v1118
    %v1447 = vpack.c.b16 %v1127, %v1123
    %v1448 = vpack.c.b16 %v1128, %v1124
    %v1449 = vpack.c.b16 %v1129, %v1125
    %v1450 = vpack.c.b16 %v1130, %v1126
    %v1451 = vpack.c.b16 %v1135, %v1131
    %v1452 = vpack.c.b16 %v1136, %v1132
    %v1453 = vpack.c.b16 %v1137, %v1133
    %v1454 = vpack.c.b16 %v1138, %v1134
    %v1455 = vpack.c.b16 %v1143, %v1139
    %v1456 = vpack.c.b16 %v1144, %v1140
    %v1457 = vpack.c.b16 %v1145, %v1141
    %v1458 = vpack.c.b16 %v1146, %v1142
    %v1459 = vpack.c.b16 %v1151, %v1147
    %v1460 = vpack.c.b16 %v1152, %v1148
    %v1461 = vpack.c.b16 %v1153, %v1149
    %v1462 = vpack.c.b16 %v1154, %v1150
    %v1463 = vpack.c.b16 %v1159, %v1155
    %v1464 = vpack.c.b16 %v1160, %v1156
    %v1465 = vpack.c.b16 %v1161, %v1157
    %v1466 = vpack.c.b16 %v1162, %v1158
    %v1467 = vpack.c.b16 %v1167, %v1163
    %v1468 = vpack.c.b16 %v1168, %v1164
    %v1469 = vpack.c.b16 %v1169, %v1165
    %v1470 = vpack.c.b16 %v1170, %v1166
    %v1471 = vpack.c.b16 %v1175, %v1171
    %v1472 = vpack.c.b16 %v1176, %v1172
    %v1473 = vpack.c.b16 %v1177, %v1173
    %v1474 = vpack.c.b16 %v1178, %v1174
    %v1475 = vpack.c.b16 %v1183, %v1179
    %v1476 = vpack.c.b16 %v1184, %v1180
    %v1477 = vpack.c.b16 %v1185, %v1181
    %v1478 = vpack.c.b16 %v1186, %v1182
    %v1479 = vpack.c.b16 %v1191, %v1187
    %v1480 = vpack.c.b16 %v1192, %v1188
    %v1481 = vpack.c.b16 %v1193, %v1189
    %v1482 = vpack.c.b16 %v1194, %v1190
    %v1483 = vpack.c.b16 %v1199, %v1195
    %v1484 = vpack.c.b16 %v1200, %v1196
    %v1485 = vpack.c.b16 %v1201, %v1197
    %v1486 = vpack.c.b16 %v1202, %v1198
    %v1487 = vpack.c.b16 %v1207, %v1203
    %v1488 = vpack.c.b16 %v1208, %v1204
    %v1489 = vpack.c.b16 %v1209, %v1205
    %v1490 = vpack.c.b16 %v1210, %v1206
    %v1491 = vpack.c.b16 %v1215, %v1211
    %v1492 = vpack.c.b16 %v1216, %v1212
    %v1493 = vpack.c.b16 %v1217, %v1213
    %v1494 = vpack.c.b16 %v1218, %v1214
    %v1495 = vpack.c.b16 %v1223, %v1219
    %v1496 = vpack.c.b16 %v1224, %v1220
    %v1497 = vpack.c.b16 %v1225, %v1221
    %v1498 = vpack.c.b16 %v1226, %v1222
    %v1499 = vpack.c.b16 %v1231, %v1227
    %v1500 = vpack.c.b16 %v1232, %v1228
    %v1501 = vpack.c.b16 %v1233, %v1229
    %v1502 = vpack.c.b16 %v1234, %v1230
    %v1503 = vpack.c.b16 %v1239, %v1235
    %v1504 = vpack.c.b16 %v1240, %v1236
    %v1505 = vpack.c.b16 %v1241, %v1237
    %v1506 = vpack.c.b16 %v1242, %v1238
    %v1507 = vpack.c.b16 %v1247, %v1243
    %v1508 = vpack.c.b16 %v1248, %v1244
    %v1509 = vpack.c.b16 %v1249, %v1245
    %v1510 = vpack.c.b16 %v1250, %v1246
    %v1511 = vpack.c.b16 %v1255, %v1251
    %v1512 = vpack.c.b16 %v1256, %v1252
    %v1513 = vpack.c.b16 %v1257, %v1253
    %v1514 = vpack.c.b16 %v1258, %v1254
    %1771 = vmatpush.bf16.msra.mxu0 %v1287
    %1772 = vmatpush.bf16.msra.mxu0 %v1283
    %1773 = vmatpush.bf16.msra.mxu0 %v1279
    %1774 = vmatpush.bf16.msra.mxu0 %v1275
    %1775 = vmatpush.bf16.msra.mxu0 %v1271
    %1776 = vmatpush.bf16.msra.mxu0 %v1267
    %1777 = vmatpush.bf16.msra.mxu0 %v1263
    %1778 = vmatpush.bf16.msra.mxu0 %v1259
    %1779 = vmatmul.bf16.gmra.mxu0 %v475
    %v1780 = vpop.f32.mrf.mxu0
    %v1781 = vadd.f32 %v456, %v1780
    %v1782 = vpop.f32.mrf.mxu0
    %1783 = vdwg.mxu0
    %1784 = vmatpush.bf16.msra.mxu0 %v1319
    %1785 = vmatpush.bf16.msra.mxu0 %v1315
    %1786 = vmatpush.bf16.msra.mxu0 %v1311
    %1787 = vmatpush.bf16.msra.mxu0 %v1307
    %1788 = vmatpush.bf16.msra.mxu0 %v1303
    %1789 = vmatpush.bf16.msra.mxu0 %v1299
    %1790 = vmatpush.bf16.msra.mxu0 %v1295
    %1791 = vmatpush.bf16.msra.mxu0 %v1291
    %1792 = vmatmul.bf16.gmra.mxu0 %v476
    %v1793 = vpop.f32.mrf.mxu0
    %v1794 = vadd.f32 %v1781, %v1793
    %v1795 = vpop.f32.mrf.mxu0
    %1796 = vdwg.mxu0
    %1797 = vmatpush.bf16.msra.mxu0 %v1351
    %1798 = vmatpush.bf16.msra.mxu0 %v1347
    %1799 = vmatpush.bf16.msra.mxu0 %v1343
    %1800 = vmatpush.bf16.msra.mxu0 %v1339
    %1801 = vmatpush.bf16.msra.mxu0 %v1335
    %1802 = vmatpush.bf16.msra.mxu0 %v1331
    %1803 = vmatpush.bf16.msra.mxu0 %v1327
    %1804 = vmatpush.bf16.msra.mxu0 %v1323
    %1805 = vmatmul.bf16.gmra.mxu0 %v477
    %v1806 = vpop.f32.mrf.mxu0
    %v1807 = vadd.f32 %v1794, %v1806
    %v1808 = vpop.f32.mrf.mxu0
    %1809 = vdwg.mxu0
    %1810 = vmatpush.bf16.msra.mxu0 %v1383
    %1811 = vmatpush.bf16.msra.mxu0 %v1379
    %1812 = vmatpush.bf16.msra.mxu0 %v1375
    %1813 = vmatpush.bf16.msra.mxu0 %v1371
    %1814 = vmatpush.bf16.msra.mxu0 %v1367
    %1815 = vmatpush.bf16.msra.mxu0 %v1363
    %1816 = vmatpush.bf16.msra.mxu0 %v1359
    %1817 = vmatpush.bf16.msra.mxu0 %v1355
    %1818 = vmatmul.bf16.gmra.mxu0 %v478
    %v1819 = vpop.f32.mrf.mxu0
    %v1820 = vadd.f32 %v1807, %v1819
    %v1821 = vpop.f32.mrf.mxu0
    %1822 = vdwg.mxu0
    %1823 = vmatpush.bf16.msra.mxu0 %v1415
    %1824 = vmatpush.bf16.msra.mxu0 %v1411
    %1825 = vmatpush.bf16.msra.mxu0 %v1407
    %1826 = vmatpush.bf16.msra.mxu0 %v1403
    %1827 = vmatpush.bf16.msra.mxu0 %v1399
    %1828 = vmatpush.bf16.msra.mxu0 %v1395
    %1829 = vmatpush.bf16.msra.mxu0 %v1391
    %1830 = vmatpush.bf16.msra.mxu0 %v1387
    %1831 = vmatmul.bf16.gmra.mxu0 %v479
    %v1832 = vpop.f32.mrf.mxu0
    %v1833 = vadd.f32 %v1820, %v1832
    %v1834 = vpop.f32.mrf.mxu0
    %1835 = vdwg.mxu0
    %1836 = vmatpush.bf16.msra.mxu0 %v1447
    %1837 = vmatpush.bf16.msra.mxu0 %v1443
    %1838 = vmatpush.bf16.msra.mxu0 %v1439
    %1839 = vmatpush.bf16.msra.mxu0 %v1435
    %1840 = vmatpush.bf16.msra.mxu0 %v1431
    %1841 = vmatpush.bf16.msra.mxu0 %v1427
    %1842 = vmatpush.bf16.msra.mxu0 %v1423
    %1843 = vmatpush.bf16.msra.mxu0 %v1419
    %1844 = vmatmul.bf16.gmra.mxu0 %v480
    %v1845 = vpop.f32.mrf.mxu0
    %v1846 = vadd.f32 %v1833, %v1845
    %v1847 = vpop.f32.mrf.mxu0
    %1848 = vdwg.mxu0
    %1849 = vmatpush.bf16.msra.mxu0 %v1479
    %1850 = vmatpush.bf16.msra.mxu0 %v1475
    %1851 = vmatpush.bf16.msra.mxu0 %v1471
    %1852 = vmatpush.bf16.msra.mxu0 %v1467
    %1853 = vmatpush.bf16.msra.mxu0 %v1463
    %1854 = vmatpush.bf16.msra.mxu0 %v1459
    %1855 = vmatpush.bf16.msra.mxu0 %v1455
    %1856 = vmatpush.bf16.msra.mxu0 %v1451
    %1857 = vmatmul.bf16.gmra.mxu0 %v481
    %v1858 = vpop.f32.mrf.mxu0
    %v1859 = vadd.f32 %v1846, %v1858
    %v1860 = vpop.f32.mrf.mxu0
    %1861 = vdwg.mxu0
    %1862 = vmatpush.bf16.msra.mxu0 %v1511
    %1863 = vmatpush.bf16.msra.mxu0 %v1507
    %1864 = vmatpush.bf16.msra.mxu0 %v1503
    %1865 = vmatpush.bf16.msra.mxu0 %v1499
    %1866 = vmatpush.bf16.msra.mxu0 %v1495
    %1867 = vmatpush.bf16.msra.mxu0 %v1491
    %1868 = vmatpush.bf16.msra.mxu0 %v1487
    %1869 = vmatpush.bf16.msra.mxu0 %v1483
    %1870 = vmatmul.bf16.gmra.mxu0 %v482
    %v1871 = vpop.f32.mrf.mxu0
    %v1872 = vadd.f32 %v1859, %v1871
    %v1873 = vpop.f32.mrf.mxu0
    %1874 = vdwg.mxu0
    %1875 = vmatpush.bf16.msra.mxu0 %v1288
    %1876 = vmatpush.bf16.msra.mxu0 %v1284
    %1877 = vmatpush.bf16.msra.mxu0 %v1280
    %1878 = vmatpush.bf16.msra.mxu0 %v1276
    %1879 = vmatpush.bf16.msra.mxu0 %v1272
    %1880 = vmatpush.bf16.msra.mxu0 %v1268
    %1881 = vmatpush.bf16.msra.mxu0 %v1264
    %1882 = vmatpush.bf16.msra.mxu0 %v1260
    %1883 = vmatmul.bf16.gmra.mxu0 %v475
    %v1884 = vpop.f32.mrf.mxu0
    %v1885 = vadd.f32 %v457, %v1884
    %v1886 = vpop.f32.mrf.mxu0
    %1887 = vdwg.mxu0
    %1888 = vmatpush.bf16.msra.mxu0 %v1320
    %1889 = vmatpush.bf16.msra.mxu0 %v1316
    %1890 = vmatpush.bf16.msra.mxu0 %v1312
    %1891 = vmatpush.bf16.msra.mxu0 %v1308
    %1892 = vmatpush.bf16.msra.mxu0 %v1304
    %1893 = vmatpush.bf16.msra.mxu0 %v1300
    %1894 = vmatpush.bf16.msra.mxu0 %v1296
    %1895 = vmatpush.bf16.msra.mxu0 %v1292
    %1896 = vmatmul.bf16.gmra.mxu0 %v476
    %v1897 = vpop.f32.mrf.mxu0
    %v1898 = vadd.f32 %v1885, %v1897
    %v1899 = vpop.f32.mrf.mxu0
    %1900 = vdwg.mxu0
    %1901 = vmatpush.bf16.msra.mxu0 %v1352
    %1902 = vmatpush.bf16.msra.mxu0 %v1348
    %1903 = vmatpush.bf16.msra.mxu0 %v1344
    %1904 = vmatpush.bf16.msra.mxu0 %v1340
    %1905 = vmatpush.bf16.msra.mxu0 %v1336
    %1906 = vmatpush.bf16.msra.mxu0 %v1332
    %1907 = vmatpush.bf16.msra.mxu0 %v1328
    %1908 = vmatpush.bf16.msra.mxu0 %v1324
    %1909 = vmatmul.bf16.gmra.mxu0 %v477
    %v1910 = vpop.f32.mrf.mxu0
    %v1911 = vadd.f32 %v1898, %v1910
    %v1912 = vpop.f32.mrf.mxu0
    %1913 = vdwg.mxu0
    %1914 = vmatpush.bf16.msra.mxu0 %v1384
    %1915 = vmatpush.bf16.msra.mxu0 %v1380
    %1916 = vmatpush.bf16.msra.mxu0 %v1376
    %1917 = vmatpush.bf16.msra.mxu0 %v1372
    %1918 = vmatpush.bf16.msra.mxu0 %v1368
    %1919 = vmatpush.bf16.msra.mxu0 %v1364
    %1920 = vmatpush.bf16.msra.mxu0 %v1360
    %1921 = vmatpush.bf16.msra.mxu0 %v1356
    %1922 = vmatmul.bf16.gmra.mxu0 %v478
    %v1923 = vpop.f32.mrf.mxu0
    %v1924 = vadd.f32 %v1911, %v1923
    %v1925 = vpop.f32.mrf.mxu0
    %1926 = vdwg.mxu0
    %1927 = vmatpush.bf16.msra.mxu0 %v1416
    %1928 = vmatpush.bf16.msra.mxu0 %v1412
    %1929 = vmatpush.bf16.msra.mxu0 %v1408
    %1930 = vmatpush.bf16.msra.mxu0 %v1404
    %1931 = vmatpush.bf16.msra.mxu0 %v1400
    %1932 = vmatpush.bf16.msra.mxu0 %v1396
    %1933 = vmatpush.bf16.msra.mxu0 %v1392
    %1934 = vmatpush.bf16.msra.mxu0 %v1388
    %1935 = vmatmul.bf16.gmra.mxu0 %v479
    %v1936 = vpop.f32.mrf.mxu0
    %v1937 = vadd.f32 %v1924, %v1936
    %v1938 = vpop.f32.mrf.mxu0
    %1939 = vdwg.mxu0
    %1940 = vmatpush.bf16.msra.mxu0 %v1448
    %1941 = vmatpush.bf16.msra.mxu0 %v1444
    %1942 = vmatpush.bf16.msra.mxu0 %v1440
    %1943 = vmatpush.bf16.msra.mxu0 %v1436
    %1944 = vmatpush.bf16.msra.mxu0 %v1432
    %1945 = vmatpush.bf16.msra.mxu0 %v1428
    %1946 = vmatpush.bf16.msra.mxu0 %v1424
    %1947 = vmatpush.bf16.msra.mxu0 %v1420
    %1948 = vmatmul.bf16.gmra.mxu0 %v480
    %v1949 = vpop.f32.mrf.mxu0
    %v1950 = vadd.f32 %v1937, %v1949
    %v1951 = vpop.f32.mrf.mxu0
    %1952 = vdwg.mxu0
    %1953 = vmatpush.bf16.msra.mxu0 %v1480
    %1954 = vmatpush.bf16.msra.mxu0 %v1476
    %1955 = vmatpush.bf16.msra.mxu0 %v1472
    %1956 = vmatpush.bf16.msra.mxu0 %v1468
    %1957 = vmatpush.bf16.msra.mxu0 %v1464
    %1958 = vmatpush.bf16.msra.mxu0 %v1460
    %1959 = vmatpush.bf16.msra.mxu0 %v1456
    %1960 = vmatpush.bf16.msra.mxu0 %v1452
    %1961 = vmatmul.bf16.gmra.mxu0 %v481
    %v1962 = vpop.f32.mrf.mxu0
    %v1963 = vadd.f32 %v1950, %v1962
    %v1964 = vpop.f32.mrf.mxu0
    %1965 = vdwg.mxu0
    %1966 = vmatpush.bf16.msra.mxu0 %v1512
    %1967 = vmatpush.bf16.msra.mxu0 %v1508
    %1968 = vmatpush.bf16.msra.mxu0 %v1504
    %1969 = vmatpush.bf16.msra.mxu0 %v1500
    %1970 = vmatpush.bf16.msra.mxu0 %v1496
    %1971 = vmatpush.bf16.msra.mxu0 %v1492
    %1972 = vmatpush.bf16.msra.mxu0 %v1488
    %1973 = vmatpush.bf16.msra.mxu0 %v1484
    %1974 = vmatmul.bf16.gmra.mxu0 %v482
    %v1975 = vpop.f32.mrf.mxu0
    %v1976 = vadd.f32 %v1963, %v1975
    %v1977 = vpop.f32.mrf.mxu0
    %1978 = vdwg.mxu0
    %1979 = vmatpush.bf16.msra.mxu0 %v1289
    %1980 = vmatpush.bf16.msra.mxu0 %v1285
    %1981 = vmatpush.bf16.msra.mxu0 %v1281
    %1982 = vmatpush.bf16.msra.mxu0 %v1277
    %1983 = vmatpush.bf16.msra.mxu0 %v1273
    %1984 = vmatpush.bf16.msra.mxu0 %v1269
    %1985 = vmatpush.bf16.msra.mxu0 %v1265
    %1986 = vmatpush.bf16.msra.mxu0 %v1261
    %1987 = vmatmul.bf16.gmra.mxu0 %v475
    %v1988 = vpop.f32.mrf.mxu0
    %v1989 = vadd.f32 %v458, %v1988
    %v1990 = vpop.f32.mrf.mxu0
    %1991 = vdwg.mxu0
    %1992 = vmatpush.bf16.msra.mxu0 %v1321
    %1993 = vmatpush.bf16.msra.mxu0 %v1317
    %1994 = vmatpush.bf16.msra.mxu0 %v1313
    %1995 = vmatpush.bf16.msra.mxu0 %v1309
    %1996 = vmatpush.bf16.msra.mxu0 %v1305
    %1997 = vmatpush.bf16.msra.mxu0 %v1301
    %1998 = vmatpush.bf16.msra.mxu0 %v1297
    %1999 = vmatpush.bf16.msra.mxu0 %v1293
    %2000 = vmatmul.bf16.gmra.mxu0 %v476
    %v2001 = vpop.f32.mrf.mxu0
    %v2002 = vadd.f32 %v1989, %v2001
    %v2003 = vpop.f32.mrf.mxu0
    %2004 = vdwg.mxu0
    %2005 = vmatpush.bf16.msra.mxu0 %v1353
    %2006 = vmatpush.bf16.msra.mxu0 %v1349
    %2007 = vmatpush.bf16.msra.mxu0 %v1345
    %2008 = vmatpush.bf16.msra.mxu0 %v1341
    %2009 = vmatpush.bf16.msra.mxu0 %v1337
    %2010 = vmatpush.bf16.msra.mxu0 %v1333
    %2011 = vmatpush.bf16.msra.mxu0 %v1329
    %2012 = vmatpush.bf16.msra.mxu0 %v1325
    %2013 = vmatmul.bf16.gmra.mxu0 %v477
    %v2014 = vpop.f32.mrf.mxu0
    %v2015 = vadd.f32 %v2002, %v2014
    %v2016 = vpop.f32.mrf.mxu0
    %2017 = vdwg.mxu0
    %2018 = vmatpush.bf16.msra.mxu0 %v1385
    %2019 = vmatpush.bf16.msra.mxu0 %v1381
    %2020 = vmatpush.bf16.msra.mxu0 %v1377
    %2021 = vmatpush.bf16.msra.mxu0 %v1373
    %2022 = vmatpush.bf16.msra.mxu0 %v1369
    %2023 = vmatpush.bf16.msra.mxu0 %v1365
    %2024 = vmatpush.bf16.msra.mxu0 %v1361
    %2025 = vmatpush.bf16.msra.mxu0 %v1357
    %2026 = vmatmul.bf16.gmra.mxu0 %v478
    %v2027 = vpop.f32.mrf.mxu0
    %v2028 = vadd.f32 %v2015, %v2027
    %v2029 = vpop.f32.mrf.mxu0
    %2030 = vdwg.mxu0
    %2031 = vmatpush.bf16.msra.mxu0 %v1417
    %2032 = vmatpush.bf16.msra.mxu0 %v1413
    %2033 = vmatpush.bf16.msra.mxu0 %v1409
    %2034 = vmatpush.bf16.msra.mxu0 %v1405
    %2035 = vmatpush.bf16.msra.mxu0 %v1401
    %2036 = vmatpush.bf16.msra.mxu0 %v1397
    %2037 = vmatpush.bf16.msra.mxu0 %v1393
    %2038 = vmatpush.bf16.msra.mxu0 %v1389
    %2039 = vmatmul.bf16.gmra.mxu0 %v479
    %v2040 = vpop.f32.mrf.mxu0
    %v2041 = vadd.f32 %v2028, %v2040
    %v2042 = vpop.f32.mrf.mxu0
    %2043 = vdwg.mxu0
    %2044 = vmatpush.bf16.msra.mxu0 %v1449
    %2045 = vmatpush.bf16.msra.mxu0 %v1445
    %2046 = vmatpush.bf16.msra.mxu0 %v1441
    %2047 = vmatpush.bf16.msra.mxu0 %v1437
    %2048 = vmatpush.bf16.msra.mxu0 %v1433
    %2049 = vmatpush.bf16.msra.mxu0 %v1429
    %2050 = vmatpush.bf16.msra.mxu0 %v1425
    %2051 = vmatpush.bf16.msra.mxu0 %v1421
    %2052 = vmatmul.bf16.gmra.mxu0 %v480
    %v2053 = vpop.f32.mrf.mxu0
    %v2054 = vadd.f32 %v2041, %v2053
    %v2055 = vpop.f32.mrf.mxu0
    %2056 = vdwg.mxu0
    %2057 = vmatpush.bf16.msra.mxu0 %v1481
    %2058 = vmatpush.bf16.msra.mxu0 %v1477
    %2059 = vmatpush.bf16.msra.mxu0 %v1473
    %2060 = vmatpush.bf16.msra.mxu0 %v1469
    %2061 = vmatpush.bf16.msra.mxu0 %v1465
    %2062 = vmatpush.bf16.msra.mxu0 %v1461
    %2063 = vmatpush.bf16.msra.mxu0 %v1457
    %2064 = vmatpush.bf16.msra.mxu0 %v1453
    %2065 = vmatmul.bf16.gmra.mxu0 %v481
    %v2066 = vpop.f32.mrf.mxu0
    %v2067 = vadd.f32 %v2054, %v2066
    %v2068 = vpop.f32.mrf.mxu0
    %2069 = vdwg.mxu0
    %2070 = vmatpush.bf16.msra.mxu0 %v1513
    %2071 = vmatpush.bf16.msra.mxu0 %v1509
    %2072 = vmatpush.bf16.msra.mxu0 %v1505
    %2073 = vmatpush.bf16.msra.mxu0 %v1501
    %2074 = vmatpush.bf16.msra.mxu0 %v1497
    %2075 = vmatpush.bf16.msra.mxu0 %v1493
    %2076 = vmatpush.bf16.msra.mxu0 %v1489
    %2077 = vmatpush.bf16.msra.mxu0 %v1485
    %2078 = vmatmul.bf16.gmra.mxu0 %v482
    %v2079 = vpop.f32.mrf.mxu0
    %v2080 = vadd.f32 %v2067, %v2079
    %v2081 = vpop.f32.mrf.mxu0
    %2082 = vdwg.mxu0
    %2083 = vmatpush.bf16.msra.mxu0 %v1290
    %2084 = vmatpush.bf16.msra.mxu0 %v1286
    %2085 = vmatpush.bf16.msra.mxu0 %v1282
    %2086 = vmatpush.bf16.msra.mxu0 %v1278
    %2087 = vmatpush.bf16.msra.mxu0 %v1274
    %2088 = vmatpush.bf16.msra.mxu0 %v1270
    %2089 = vmatpush.bf16.msra.mxu0 %v1266
    %2090 = vmatpush.bf16.msra.mxu0 %v1262
    %2091 = vmatmul.bf16.gmra.mxu0 %v475
    %v2092 = vpop.f32.mrf.mxu0
    %v2093 = vadd.f32 %v459, %v2092
    %v2094 = vpop.f32.mrf.mxu0
    %2095 = vdwg.mxu0
    %2096 = vmatpush.bf16.msra.mxu0 %v1322
    %2097 = vmatpush.bf16.msra.mxu0 %v1318
    %2098 = vmatpush.bf16.msra.mxu0 %v1314
    %2099 = vmatpush.bf16.msra.mxu0 %v1310
    %2100 = vmatpush.bf16.msra.mxu0 %v1306
    %2101 = vmatpush.bf16.msra.mxu0 %v1302
    %2102 = vmatpush.bf16.msra.mxu0 %v1298
    %2103 = vmatpush.bf16.msra.mxu0 %v1294
    %2104 = vmatmul.bf16.gmra.mxu0 %v476
    %v2105 = vpop.f32.mrf.mxu0
    %v2106 = vadd.f32 %v2093, %v2105
    %v2107 = vpop.f32.mrf.mxu0
    %2108 = vdwg.mxu0
    %2109 = vmatpush.bf16.msra.mxu0 %v1354
    %2110 = vmatpush.bf16.msra.mxu0 %v1350
    %2111 = vmatpush.bf16.msra.mxu0 %v1346
    %2112 = vmatpush.bf16.msra.mxu0 %v1342
    %2113 = vmatpush.bf16.msra.mxu0 %v1338
    %2114 = vmatpush.bf16.msra.mxu0 %v1334
    %2115 = vmatpush.bf16.msra.mxu0 %v1330
    %2116 = vmatpush.bf16.msra.mxu0 %v1326
    %2117 = vmatmul.bf16.gmra.mxu0 %v477
    %v2118 = vpop.f32.mrf.mxu0
    %v2119 = vadd.f32 %v2106, %v2118
    %v2120 = vpop.f32.mrf.mxu0
    %2121 = vdwg.mxu0
    %2122 = vmatpush.bf16.msra.mxu0 %v1386
    %2123 = vmatpush.bf16.msra.mxu0 %v1382
    %2124 = vmatpush.bf16.msra.mxu0 %v1378
    %2125 = vmatpush.bf16.msra.mxu0 %v1374
    %2126 = vmatpush.bf16.msra.mxu0 %v1370
    %2127 = vmatpush.bf16.msra.mxu0 %v1366
    %2128 = vmatpush.bf16.msra.mxu0 %v1362
    %2129 = vmatpush.bf16.msra.mxu0 %v1358
    %2130 = vmatmul.bf16.gmra.mxu0 %v478
    %v2131 = vpop.f32.mrf.mxu0
    %v2132 = vadd.f32 %v2119, %v2131
    %v2133 = vpop.f32.mrf.mxu0
    %2134 = vdwg.mxu0
    %2135 = vmatpush.bf16.msra.mxu0 %v1418
    %2136 = vmatpush.bf16.msra.mxu0 %v1414
    %2137 = vmatpush.bf16.msra.mxu0 %v1410
    %2138 = vmatpush.bf16.msra.mxu0 %v1406
    %2139 = vmatpush.bf16.msra.mxu0 %v1402
    %2140 = vmatpush.bf16.msra.mxu0 %v1398
    %2141 = vmatpush.bf16.msra.mxu0 %v1394
    %2142 = vmatpush.bf16.msra.mxu0 %v1390
    %2143 = vmatmul.bf16.gmra.mxu0 %v479
    %v2144 = vpop.f32.mrf.mxu0
    %v2145 = vadd.f32 %v2132, %v2144
    %v2146 = vpop.f32.mrf.mxu0
    %2147 = vdwg.mxu0
    %2148 = vmatpush.bf16.msra.mxu0 %v1450
    %2149 = vmatpush.bf16.msra.mxu0 %v1446
    %2150 = vmatpush.bf16.msra.mxu0 %v1442
    %2151 = vmatpush.bf16.msra.mxu0 %v1438
    %2152 = vmatpush.bf16.msra.mxu0 %v1434
    %2153 = vmatpush.bf16.msra.mxu0 %v1430
    %2154 = vmatpush.bf16.msra.mxu0 %v1426
    %2155 = vmatpush.bf16.msra.mxu0 %v1422
    %2156 = vmatmul.bf16.gmra.mxu0 %v480
    %v2157 = vpop.f32.mrf.mxu0
    %v2158 = vadd.f32 %v2145, %v2157
    %v2159 = vpop.f32.mrf.mxu0
    %2160 = vdwg.mxu0
    %2161 = vmatpush.bf16.msra.mxu0 %v1482
    %2162 = vmatpush.bf16.msra.mxu0 %v1478
    %2163 = vmatpush.bf16.msra.mxu0 %v1474
    %2164 = vmatpush.bf16.msra.mxu0 %v1470
    %2165 = vmatpush.bf16.msra.mxu0 %v1466
    %2166 = vmatpush.bf16.msra.mxu0 %v1462
    %2167 = vmatpush.bf16.msra.mxu0 %v1458
    %2168 = vmatpush.bf16.msra.mxu0 %v1454
    %2169 = vmatmul.bf16.gmra.mxu0 %v481
    %v2170 = vpop.f32.mrf.mxu0
    %v2171 = vadd.f32 %v2158, %v2170
    %v2172 = vpop.f32.mrf.mxu0
    %2173 = vdwg.mxu0
    %2174 = vmatpush.bf16.msra.mxu0 %v1514
    %2175 = vmatpush.bf16.msra.mxu0 %v1510
    %2176 = vmatpush.bf16.msra.mxu0 %v1506
    %2177 = vmatpush.bf16.msra.mxu0 %v1502
    %2178 = vmatpush.bf16.msra.mxu0 %v1498
    %2179 = vmatpush.bf16.msra.mxu0 %v1494
    %2180 = vmatpush.bf16.msra.mxu0 %v1490
    %2181 = vmatpush.bf16.msra.mxu0 %v1486
    %2182 = vmatmul.bf16.gmra.mxu0 %v482
    %v2183 = vpop.f32.mrf.mxu0
    %v2184 = vadd.f32 %v2171, %v2183
    %v2185 = vpop.f32.mrf.mxu0
    %2186 = vdwg.mxu0
    %v2187 = vmax.f32 %v1872, 0.0
    %v2188 = vmax.f32 %v1976, 0.0
    %v2189 = vmax.f32 %v2080, 0.0
    %v2190 = vmax.f32 %v2184, 0.0
    %v2191 = vpack.c.bf16 %v2188, %v2187
    %v2192 = vpack.c.bf16 %v2190, %v2189
    %v2194 = vunpack.c.l.b16 %v2191
    %v2195 = vunpack.c.h.b16 %v2191
    %v2196 = vpack.c.b16 %v2194, %v2194
    %v2197 = vpack.c.b16 %v2195, %v2195
    %v2232 = vunpack.c.l.b16 %v390
    %v2233 = vunpack.c.l.b16 %v391
    %v2234 = vunpack.c.l.b16 %v392
    %v2235 = vunpack.c.l.b16 %v393
    %v2236 = vunpack.c.l.b16 %v394
    %v2237 = vunpack.c.l.b16 %v395
    %v2238 = vunpack.c.l.b16 %v396
    %v2239 = vunpack.c.l.b16 %v397
    %v2240 = vunpack.c.l.b16 %v398
    %v2241 = vunpack.c.l.b16 %v399
    %v2242 = vunpack.c.l.b16 %v400
    %v2243 = vunpack.c.l.b16 %v401
    %v2244 = vunpack.c.l.b16 %v402
    %v2245 = vunpack.c.l.b16 %v403
    %v2246 = vunpack.c.l.b16 %v404
    %v2247 = vunpack.c.l.b16 %v405
    %v2248 = vunpack.c.l.b16 %v406
    %v2249 = vunpack.c.l.b16 %v407
    %v2250 = vunpack.c.l.b16 %v408
    %v2251 = vunpack.c.l.b16 %v409
    %v2252 = vunpack.c.l.b16 %v410
    %v2253 = vunpack.c.l.b16 %v411
    %v2254 = vunpack.c.l.b16 %v412
    %v2255 = vunpack.c.l.b16 %v413
    %v2256 = vunpack.c.l.b16 %v414
    %v2257 = vunpack.c.l.b16 %v415
    %v2258 = vunpack.c.l.b16 %v416
    %v2259 = vunpack.c.l.b16 %v417
    %v2260 = vunpack.c.l.b16 %v418
    %v2261 = vunpack.c.l.b16 %v419
    %v2262 = vunpack.c.l.b16 %v420
    %v2263 = vunpack.c.l.b16 %v421
    %v2264 = vpack.c.b16 %v2233, %v2232
    %v2265 = vpack.c.b16 %v2235, %v2234
    %v2266 = vpack.c.b16 %v2237, %v2236
    %v2267 = vpack.c.b16 %v2239, %v2238
    %v2268 = vpack.c.b16 %v2241, %v2240
    %v2269 = vpack.c.b16 %v2243, %v2242
    %v2270 = vpack.c.b16 %v2245, %v2244
    %v2271 = vpack.c.b16 %v2247, %v2246
    %v2272 = vpack.c.b16 %v2249, %v2248
    %v2273 = vpack.c.b16 %v2251, %v2250
    %v2274 = vpack.c.b16 %v2253, %v2252
    %v2275 = vpack.c.b16 %v2255, %v2254
    %v2276 = vpack.c.b16 %v2257, %v2256
    %v2277 = vpack.c.b16 %v2259, %v2258
    %v2278 = vpack.c.b16 %v2261, %v2260
    %v2279 = vpack.c.b16 %v2263, %v2262
    %2296 = vmatpush.bf16.msra.mxu0 %v2271
    %2297 = vmatpush.bf16.msra.mxu0 %v2270
    %2298 = vmatpush.bf16.msra.mxu0 %v2269
    %2299 = vmatpush.bf16.msra.mxu0 %v2268
    %2300 = vmatpush.bf16.msra.mxu0 %v2267
    %2301 = vmatpush.bf16.msra.mxu0 %v2266
    %2302 = vmatpush.bf16.msra.mxu0 %v2265
    %2303 = vmatpush.bf16.msra.mxu0 %v2264
    %2304 = vmatmul.bf16.gmra.mxu0 %v2196
    %v2305 = vpop.f32.mrf.mxu0
    %v2306 = vadd.f32 %v466, %v2305
    %v2307 = vpop.f32.mrf.mxu0
    %2308 = vdwg.mxu0
    %2309 = vmatpush.bf16.msra.mxu0 %v2279
    %2310 = vmatpush.bf16.msra.mxu0 %v2278
    %2311 = vmatpush.bf16.msra.mxu0 %v2277
    %2312 = vmatpush.bf16.msra.mxu0 %v2276
    %2313 = vmatpush.bf16.msra.mxu0 %v2275
    %2314 = vmatpush.bf16.msra.mxu0 %v2274
    %2315 = vmatpush.bf16.msra.mxu0 %v2273
    %2316 = vmatpush.bf16.msra.mxu0 %v2272
    %2317 = vmatmul.bf16.gmra.mxu0 %v2197
    %v2318 = vpop.f32.mrf.mxu0
    %v2319 = vadd.f32 %v2306, %v2318
    %v2320 = vpop.f32.mrf.mxu0
    %2321 = vdwg.mxu0
    %v2323 = vunpack.c.l.b16 %v2192
    %v2324 = vunpack.c.h.b16 %v2192
    %v2325 = vpack.c.b16 %v2323, %v2323
    %v2326 = vpack.c.b16 %v2324, %v2324
    %v2361 = vunpack.c.l.b16 %v422
    %v2362 = vunpack.c.l.b16 %v423
    %v2363 = vunpack.c.l.b16 %v424
    %v2364 = vunpack.c.l.b16 %v425
    %v2365 = vunpack.c.l.b16 %v426
    %v2366 = vunpack.c.l.b16 %v427
    %v2367 = vunpack.c.l.b16 %v428
    %v2368 = vunpack.c.l.b16 %v429
    %v2369 = vunpack.c.l.b16 %v430
    %v2370 = vunpack.c.l.b16 %v431
    %v2371 = vunpack.c.l.b16 %v432
    %v2372 = vunpack.c.l.b16 %v433
    %v2373 = vunpack.c.l.b16 %v434
    %v2374 = vunpack.c.l.b16 %v435
    %v2375 = vunpack.c.l.b16 %v436
    %v2376 = vunpack.c.l.b16 %v437
    %v2377 = vunpack.c.l.b16 %v438
    %v2378 = vunpack.c.l.b16 %v439
    %v2379 = vunpack.c.l.b16 %v440
    %v2380 = vunpack.c.l.b16 %v441
    %v2381 = vunpack.c.l.b16 %v442
    %v2382 = vunpack.c.l.b16 %v443
    %v2383 = vunpack.c.l.b16 %v444
    %v2384 = vunpack.c.l.b16 %v445
    %v2385 = vunpack.c.l.b16 %v446
    %v2386 = vunpack.c.l.b16 %v447
    %v2387 = vunpack.c.l.b16 %v448
    %v2388 = vunpack.c.l.b16 %v449
    %v2389 = vunpack.c.l.b16 %v450
    %v2390 = vunpack.c.l.b16 %v451
    %v2391 = vunpack.c.l.b16 %v452
    %v2392 = vunpack.c.l.b16 %v453
    %v2393 = vpack.c.b16 %v2362, %v2361
    %v2394 = vpack.c.b16 %v2364, %v2363
    %v2395 = vpack.c.b16 %v2366, %v2365
    %v2396 = vpack.c.b16 %v2368, %v2367
    %v2397 = vpack.c.b16 %v2370, %v2369
    %v2398 = vpack.c.b16 %v2372, %v2371
    %v2399 = vpack.c.b16 %v2374, %v2373
    %v2400 = vpack.c.b16 %v2376, %v2375
    %v2401 = vpack.c.b16 %v2378, %v2377
    %v2402 = vpack.c.b16 %v2380, %v2379
    %v2403 = vpack.c.b16 %v2382, %v2381
    %v2404 = vpack.c.b16 %v2384, %v2383
    %v2405 = vpack.c.b16 %v2386, %v2385
    %v2406 = vpack.c.b16 %v2388, %v2387
    %v2407 = vpack.c.b16 %v2390, %v2389
    %v2408 = vpack.c.b16 %v2392, %v2391
    %2425 = vmatpush.bf16.msra.mxu0 %v2400
    %2426 = vmatpush.bf16.msra.mxu0 %v2399
    %2427 = vmatpush.bf16.msra.mxu0 %v2398
    %2428 = vmatpush.bf16.msra.mxu0 %v2397
    %2429 = vmatpush.bf16.msra.mxu0 %v2396
    %2430 = vmatpush.bf16.msra.mxu0 %v2395
    %2431 = vmatpush.bf16.msra.mxu0 %v2394
    %2432 = vmatpush.bf16.msra.mxu0 %v2393
    %2433 = vmatmul.bf16.gmra.mxu0 %v2325
    %v2434 = vpop.f32.mrf.mxu0
    %v2435 = vadd.f32 %v470, %v2434
    %v2436 = vpop.f32.mrf.mxu0
    %2437 = vdwg.mxu0
    %2438 = vmatpush.bf16.msra.mxu0 %v2408
    %2439 = vmatpush.bf16.msra.mxu0 %v2407
    %2440 = vmatpush.bf16.msra.mxu0 %v2406
    %2441 = vmatpush.bf16.msra.mxu0 %v2405
    %2442 = vmatpush.bf16.msra.mxu0 %v2404
    %2443 = vmatpush.bf16.msra.mxu0 %v2403
    %2444 = vmatpush.bf16.msra.mxu0 %v2402
    %2445 = vmatpush.bf16.msra.mxu0 %v2401
    %2446 = vmatmul.bf16.gmra.mxu0 %v2326
    %v2447 = vpop.f32.mrf.mxu0
    %v2448 = vadd.f32 %v2435, %v2447
    %v2449 = vpop.f32.mrf.mxu0
    %2450 = vdwg.mxu0
    %v2451 = vmul.f32 %v2319, %v2319
    %vm2452 = vcmask 1041408
    %v2453 = vsel %vm2452, %v2451, 0.0
    %2454 = vadd.xlane.f32.xlu0 %v2453
    %v2455 = vpop.xlane.xlu0 %2454
    %v2456 = vmax.f32 %v2455, 1e-24
    %v2457 = vrsqrt.pop %v2456
    %v2458 = vmul.f32 %v2457, %v2456
    %v2459 = vmul.f32 %v2458, %v2457
    %v2460 = vmul.f32 0.5, %v2459
    %v2461 = vsub.f32 1.5, %v2460
    %v2462 = vmul.f32 %v2457, %v2461
    %vm2463 = vweird.f32 %v2456
    %vm2464 = vweird.f32 %v2457
    %vm2465 = vmor %vm2463, %vm2464
    %v2466 = vsel %vm2465, %v2457, %v2462
    %v2467 = vmul.f32 %v2448, %v2448
    %v2468 = vsel %vm2452, %v2467, 0.0
    %2469 = vadd.xlane.f32.xlu0 %v2468
    %v2470 = vpop.xlane.xlu0 %2469
    %v2471 = vmax.f32 %v2470, 1e-24
    %v2472 = vrsqrt.pop %v2471
    %v2473 = vmul.f32 %v2472, %v2471
    %v2474 = vmul.f32 %v2473, %v2472
    %v2475 = vmul.f32 0.5, %v2474
    %v2476 = vsub.f32 1.5, %v2475
    %v2477 = vmul.f32 %v2472, %v2476
    %vm2478 = vweird.f32 %v2471
    %vm2479 = vweird.f32 %v2472
    %vm2480 = vmor %vm2478, %vm2479
    %v2481 = vsel %vm2480, %v2472, %v2477
    %v2482 = vmul.f32 %v2319, %v2466
    %v2483 = vmul.f32 %v2448, %v2481
    %2484 = vst [vmem:[#allocation14] sm:$0x3] %v2482
    %2485 = vst [vmem:[#allocation14 + $0x2] sm:$0x3] %v2483
    %v2486 = vld [vmem:[#allocation5] sm:$0xff]
    %2488 = vst [vmem:[#allocation1] ss:$9 sm:$0xff] %v2486
    %v2489 = vld [vmem:[#allocation1] sm:$0xff]
    %v2490 = vld [vmem:[#allocation1 + $0x9] sm:$0xff]
    %v2491 = vld [vmem:[#allocation1 + $0x12] sm:$0xff]
    %v2492 = vld [vmem:[#allocation1 + $0x1b] sm:$0xff]
    %v2493 = vld [vmem:[#allocation1 + $0x24] sm:$0xff]
    %v2494 = vld [vmem:[#allocation1 + $0x2d] sm:$0xff]
    %v2495 = vld [vmem:[#allocation1 + $0x36] sm:$0xff]
    %v2496 = vld [vmem:[#allocation1 + $0x3f] sm:$0xff]
    %2505 = vmatpush.bf16.msra.mxu0 %v1287
    %2506 = vmatpush.bf16.msra.mxu0 %v1283
    %2507 = vmatpush.bf16.msra.mxu0 %v1279
    %2508 = vmatpush.bf16.msra.mxu0 %v1275
    %2509 = vmatpush.bf16.msra.mxu0 %v1271
    %2510 = vmatpush.bf16.msra.mxu0 %v1267
    %2511 = vmatpush.bf16.msra.mxu0 %v1263
    %2512 = vmatpush.bf16.msra.mxu0 %v1259
    %2513 = vmatmul.bf16.gmra.mxu0 %v2489
    %v2514 = vpop.f32.mrf.mxu0
    %v2515 = vadd.f32 %v456, %v2514
    %v2516 = vpop.f32.mrf.mxu0
    %2517 = vdwg.mxu0
    %2518 = vmatpush.bf16.msra.mxu0 %v1319
    %2519 = vmatpush.bf16.msra.mxu0 %v1315
    %2520 = vmatpush.bf16.msra.mxu0 %v1311
    %2521 = vmatpush.bf16.msra.mxu0 %v1307
    %2522 = vmatpush.bf16.msra.mxu0 %v1303
    %2523 = vmatpush.bf16.msra.mxu0 %v1299
    %2524 = vmatpush.bf16.msra.mxu0 %v1295
    %2525 = vmatpush.bf16.msra.mxu0 %v1291
    %2526 = vmatmul.bf16.gmra.mxu0 %v2490
    %v2527 = vpop.f32.mrf.mxu0
    %v2528 = vadd.f32 %v2515, %v2527
    %v2529 = vpop.f32.mrf.mxu0
    %2530 = vdwg.mxu0
    %2531 = vmatpush.bf16.msra.mxu0 %v1351
    %2532 = vmatpush.bf16.msra.mxu0 %v1347
    %2533 = vmatpush.bf16.msra.mxu0 %v1343
    %2534 = vmatpush.bf16.msra.mxu0 %v1339
    %2535 = vmatpush.bf16.msra.mxu0 %v1335
    %2536 = vmatpush.bf16.msra.mxu0 %v1331
    %2537 = vmatpush.bf16.msra.mxu0 %v1327
    %2538 = vmatpush.bf16.msra.mxu0 %v1323
    %2539 = vmatmul.bf16.gmra.mxu0 %v2491
    %v2540 = vpop.f32.mrf.mxu0
    %v2541 = vadd.f32 %v2528, %v2540
    %v2542 = vpop.f32.mrf.mxu0
    %2543 = vdwg.mxu0
    %2544 = vmatpush.bf16.msra.mxu0 %v1383
    %2545 = vmatpush.bf16.msra.mxu0 %v1379
    %2546 = vmatpush.bf16.msra.mxu0 %v1375
    %2547 = vmatpush.bf16.msra.mxu0 %v1371
    %2548 = vmatpush.bf16.msra.mxu0 %v1367
    %2549 = vmatpush.bf16.msra.mxu0 %v1363
    %2550 = vmatpush.bf16.msra.mxu0 %v1359
    %2551 = vmatpush.bf16.msra.mxu0 %v1355
    %2552 = vmatmul.bf16.gmra.mxu0 %v2492
    %v2553 = vpop.f32.mrf.mxu0
    %v2554 = vadd.f32 %v2541, %v2553
    %v2555 = vpop.f32.mrf.mxu0
    %2556 = vdwg.mxu0
    %2557 = vmatpush.bf16.msra.mxu0 %v1415
    %2558 = vmatpush.bf16.msra.mxu0 %v1411
    %2559 = vmatpush.bf16.msra.mxu0 %v1407
    %2560 = vmatpush.bf16.msra.mxu0 %v1403
    %2561 = vmatpush.bf16.msra.mxu0 %v1399
    %2562 = vmatpush.bf16.msra.mxu0 %v1395
    %2563 = vmatpush.bf16.msra.mxu0 %v1391
    %2564 = vmatpush.bf16.msra.mxu0 %v1387
    %2565 = vmatmul.bf16.gmra.mxu0 %v2493
    %v2566 = vpop.f32.mrf.mxu0
    %v2567 = vadd.f32 %v2554, %v2566
    %v2568 = vpop.f32.mrf.mxu0
    %2569 = vdwg.mxu0
    %2570 = vmatpush.bf16.msra.mxu0 %v1447
    %2571 = vmatpush.bf16.msra.mxu0 %v1443
    %2572 = vmatpush.bf16.msra.mxu0 %v1439
    %2573 = vmatpush.bf16.msra.mxu0 %v1435
    %2574 = vmatpush.bf16.msra.mxu0 %v1431
    %2575 = vmatpush.bf16.msra.mxu0 %v1427
    %2576 = vmatpush.bf16.msra.mxu0 %v1423
    %2577 = vmatpush.bf16.msra.mxu0 %v1419
    %2578 = vmatmul.bf16.gmra.mxu0 %v2494
    %v2579 = vpop.f32.mrf.mxu0
    %v2580 = vadd.f32 %v2567, %v2579
    %v2581 = vpop.f32.mrf.mxu0
    %2582 = vdwg.mxu0
    %2583 = vmatpush.bf16.msra.mxu0 %v1479
    %2584 = vmatpush.bf16.msra.mxu0 %v1475
    %2585 = vmatpush.bf16.msra.mxu0 %v1471
    %2586 = vmatpush.bf16.msra.mxu0 %v1467
    %2587 = vmatpush.bf16.msra.mxu0 %v1463
    %2588 = vmatpush.bf16.msra.mxu0 %v1459
    %2589 = vmatpush.bf16.msra.mxu0 %v1455
    %2590 = vmatpush.bf16.msra.mxu0 %v1451
    %2591 = vmatmul.bf16.gmra.mxu0 %v2495
    %v2592 = vpop.f32.mrf.mxu0
    %v2593 = vadd.f32 %v2580, %v2592
    %v2594 = vpop.f32.mrf.mxu0
    %2595 = vdwg.mxu0
    %2596 = vmatpush.bf16.msra.mxu0 %v1511
    %2597 = vmatpush.bf16.msra.mxu0 %v1507
    %2598 = vmatpush.bf16.msra.mxu0 %v1503
    %2599 = vmatpush.bf16.msra.mxu0 %v1499
    %2600 = vmatpush.bf16.msra.mxu0 %v1495
    %2601 = vmatpush.bf16.msra.mxu0 %v1491
    %2602 = vmatpush.bf16.msra.mxu0 %v1487
    %2603 = vmatpush.bf16.msra.mxu0 %v1483
    %2604 = vmatmul.bf16.gmra.mxu0 %v2496
    %v2605 = vpop.f32.mrf.mxu0
    %v2606 = vadd.f32 %v2593, %v2605
    %v2607 = vpop.f32.mrf.mxu0
    %2608 = vdwg.mxu0
    %2609 = vmatpush.bf16.msra.mxu0 %v1288
    %2610 = vmatpush.bf16.msra.mxu0 %v1284
    %2611 = vmatpush.bf16.msra.mxu0 %v1280
    %2612 = vmatpush.bf16.msra.mxu0 %v1276
    %2613 = vmatpush.bf16.msra.mxu0 %v1272
    %2614 = vmatpush.bf16.msra.mxu0 %v1268
    %2615 = vmatpush.bf16.msra.mxu0 %v1264
    %2616 = vmatpush.bf16.msra.mxu0 %v1260
    %2617 = vmatmul.bf16.gmra.mxu0 %v2489
    %v2618 = vpop.f32.mrf.mxu0
    %v2619 = vadd.f32 %v457, %v2618
    %v2620 = vpop.f32.mrf.mxu0
    %2621 = vdwg.mxu0
    %2622 = vmatpush.bf16.msra.mxu0 %v1320
    %2623 = vmatpush.bf16.msra.mxu0 %v1316
    %2624 = vmatpush.bf16.msra.mxu0 %v1312
    %2625 = vmatpush.bf16.msra.mxu0 %v1308
    %2626 = vmatpush.bf16.msra.mxu0 %v1304
    %2627 = vmatpush.bf16.msra.mxu0 %v1300
    %2628 = vmatpush.bf16.msra.mxu0 %v1296
    %2629 = vmatpush.bf16.msra.mxu0 %v1292
    %2630 = vmatmul.bf16.gmra.mxu0 %v2490
    %v2631 = vpop.f32.mrf.mxu0
    %v2632 = vadd.f32 %v2619, %v2631
    %v2633 = vpop.f32.mrf.mxu0
    %2634 = vdwg.mxu0
    %2635 = vmatpush.bf16.msra.mxu0 %v1352
    %2636 = vmatpush.bf16.msra.mxu0 %v1348
    %2637 = vmatpush.bf16.msra.mxu0 %v1344
    %2638 = vmatpush.bf16.msra.mxu0 %v1340
    %2639 = vmatpush.bf16.msra.mxu0 %v1336
    %2640 = vmatpush.bf16.msra.mxu0 %v1332
    %2641 = vmatpush.bf16.msra.mxu0 %v1328
    %2642 = vmatpush.bf16.msra.mxu0 %v1324
    %2643 = vmatmul.bf16.gmra.mxu0 %v2491
    %v2644 = vpop.f32.mrf.mxu0
    %v2645 = vadd.f32 %v2632, %v2644
    %v2646 = vpop.f32.mrf.mxu0
    %2647 = vdwg.mxu0
    %2648 = vmatpush.bf16.msra.mxu0 %v1384
    %2649 = vmatpush.bf16.msra.mxu0 %v1380
    %2650 = vmatpush.bf16.msra.mxu0 %v1376
    %2651 = vmatpush.bf16.msra.mxu0 %v1372
    %2652 = vmatpush.bf16.msra.mxu0 %v1368
    %2653 = vmatpush.bf16.msra.mxu0 %v1364
    %2654 = vmatpush.bf16.msra.mxu0 %v1360
    %2655 = vmatpush.bf16.msra.mxu0 %v1356
    %2656 = vmatmul.bf16.gmra.mxu0 %v2492
    %v2657 = vpop.f32.mrf.mxu0
    %v2658 = vadd.f32 %v2645, %v2657
    %v2659 = vpop.f32.mrf.mxu0
    %2660 = vdwg.mxu0
    %2661 = vmatpush.bf16.msra.mxu0 %v1416
    %2662 = vmatpush.bf16.msra.mxu0 %v1412
    %2663 = vmatpush.bf16.msra.mxu0 %v1408
    %2664 = vmatpush.bf16.msra.mxu0 %v1404
    %2665 = vmatpush.bf16.msra.mxu0 %v1400
    %2666 = vmatpush.bf16.msra.mxu0 %v1396
    %2667 = vmatpush.bf16.msra.mxu0 %v1392
    %2668 = vmatpush.bf16.msra.mxu0 %v1388
    %2669 = vmatmul.bf16.gmra.mxu0 %v2493
    %v2670 = vpop.f32.mrf.mxu0
    %v2671 = vadd.f32 %v2658, %v2670
    %v2672 = vpop.f32.mrf.mxu0
    %2673 = vdwg.mxu0
    %2674 = vmatpush.bf16.msra.mxu0 %v1448
    %2675 = vmatpush.bf16.msra.mxu0 %v1444
    %2676 = vmatpush.bf16.msra.mxu0 %v1440
    %2677 = vmatpush.bf16.msra.mxu0 %v1436
    %2678 = vmatpush.bf16.msra.mxu0 %v1432
    %2679 = vmatpush.bf16.msra.mxu0 %v1428
    %2680 = vmatpush.bf16.msra.mxu0 %v1424
    %2681 = vmatpush.bf16.msra.mxu0 %v1420
    %2682 = vmatmul.bf16.gmra.mxu0 %v2494
    %v2683 = vpop.f32.mrf.mxu0
    %v2684 = vadd.f32 %v2671, %v2683
    %v2685 = vpop.f32.mrf.mxu0
    %2686 = vdwg.mxu0
    %2687 = vmatpush.bf16.msra.mxu0 %v1480
    %2688 = vmatpush.bf16.msra.mxu0 %v1476
    %2689 = vmatpush.bf16.msra.mxu0 %v1472
    %2690 = vmatpush.bf16.msra.mxu0 %v1468
    %2691 = vmatpush.bf16.msra.mxu0 %v1464
    %2692 = vmatpush.bf16.msra.mxu0 %v1460
    %2693 = vmatpush.bf16.msra.mxu0 %v1456
    %2694 = vmatpush.bf16.msra.mxu0 %v1452
    %2695 = vmatmul.bf16.gmra.mxu0 %v2495
    %v2696 = vpop.f32.mrf.mxu0
    %v2697 = vadd.f32 %v2684, %v2696
    %v2698 = vpop.f32.mrf.mxu0
    %2699 = vdwg.mxu0
    %2700 = vmatpush.bf16.msra.mxu0 %v1512
    %2701 = vmatpush.bf16.msra.mxu0 %v1508
    %2702 = vmatpush.bf16.msra.mxu0 %v1504
    %2703 = vmatpush.bf16.msra.mxu0 %v1500
    %2704 = vmatpush.bf16.msra.mxu0 %v1496
    %2705 = vmatpush.bf16.msra.mxu0 %v1492
    %2706 = vmatpush.bf16.msra.mxu0 %v1488
    %2707 = vmatpush.bf16.msra.mxu0 %v1484
    %2708 = vmatmul.bf16.gmra.mxu0 %v2496
    %v2709 = vpop.f32.mrf.mxu0
    %v2710 = vadd.f32 %v2697, %v2709
    %v2711 = vpop.f32.mrf.mxu0
    %2712 = vdwg.mxu0
    %2713 = vmatpush.bf16.msra.mxu0 %v1289
    %2714 = vmatpush.bf16.msra.mxu0 %v1285
    %2715 = vmatpush.bf16.msra.mxu0 %v1281
    %2716 = vmatpush.bf16.msra.mxu0 %v1277
    %2717 = vmatpush.bf16.msra.mxu0 %v1273
    %2718 = vmatpush.bf16.msra.mxu0 %v1269
    %2719 = vmatpush.bf16.msra.mxu0 %v1265
    %2720 = vmatpush.bf16.msra.mxu0 %v1261
    %2721 = vmatmul.bf16.gmra.mxu0 %v2489
    %v2722 = vpop.f32.mrf.mxu0
    %v2723 = vadd.f32 %v458, %v2722
    %v2724 = vpop.f32.mrf.mxu0
    %2725 = vdwg.mxu0
    %2726 = vmatpush.bf16.msra.mxu0 %v1321
    %2727 = vmatpush.bf16.msra.mxu0 %v1317
    %2728 = vmatpush.bf16.msra.mxu0 %v1313
    %2729 = vmatpush.bf16.msra.mxu0 %v1309
    %2730 = vmatpush.bf16.msra.mxu0 %v1305
    %2731 = vmatpush.bf16.msra.mxu0 %v1301
    %2732 = vmatpush.bf16.msra.mxu0 %v1297
    %2733 = vmatpush.bf16.msra.mxu0 %v1293
    %2734 = vmatmul.bf16.gmra.mxu0 %v2490
    %v2735 = vpop.f32.mrf.mxu0
    %v2736 = vadd.f32 %v2723, %v2735
    %v2737 = vpop.f32.mrf.mxu0
    %2738 = vdwg.mxu0
    %2739 = vmatpush.bf16.msra.mxu0 %v1353
    %2740 = vmatpush.bf16.msra.mxu0 %v1349
    %2741 = vmatpush.bf16.msra.mxu0 %v1345
    %2742 = vmatpush.bf16.msra.mxu0 %v1341
    %2743 = vmatpush.bf16.msra.mxu0 %v1337
    %2744 = vmatpush.bf16.msra.mxu0 %v1333
    %2745 = vmatpush.bf16.msra.mxu0 %v1329
    %2746 = vmatpush.bf16.msra.mxu0 %v1325
    %2747 = vmatmul.bf16.gmra.mxu0 %v2491
    %v2748 = vpop.f32.mrf.mxu0
    %v2749 = vadd.f32 %v2736, %v2748
    %v2750 = vpop.f32.mrf.mxu0
    %2751 = vdwg.mxu0
    %2752 = vmatpush.bf16.msra.mxu0 %v1385
    %2753 = vmatpush.bf16.msra.mxu0 %v1381
    %2754 = vmatpush.bf16.msra.mxu0 %v1377
    %2755 = vmatpush.bf16.msra.mxu0 %v1373
    %2756 = vmatpush.bf16.msra.mxu0 %v1369
    %2757 = vmatpush.bf16.msra.mxu0 %v1365
    %2758 = vmatpush.bf16.msra.mxu0 %v1361
    %2759 = vmatpush.bf16.msra.mxu0 %v1357
    %2760 = vmatmul.bf16.gmra.mxu0 %v2492
    %v2761 = vpop.f32.mrf.mxu0
    %v2762 = vadd.f32 %v2749, %v2761
    %v2763 = vpop.f32.mrf.mxu0
    %2764 = vdwg.mxu0
    %2765 = vmatpush.bf16.msra.mxu0 %v1417
    %2766 = vmatpush.bf16.msra.mxu0 %v1413
    %2767 = vmatpush.bf16.msra.mxu0 %v1409
    %2768 = vmatpush.bf16.msra.mxu0 %v1405
    %2769 = vmatpush.bf16.msra.mxu0 %v1401
    %2770 = vmatpush.bf16.msra.mxu0 %v1397
    %2771 = vmatpush.bf16.msra.mxu0 %v1393
    %2772 = vmatpush.bf16.msra.mxu0 %v1389
    %2773 = vmatmul.bf16.gmra.mxu0 %v2493
    %v2774 = vpop.f32.mrf.mxu0
    %v2775 = vadd.f32 %v2762, %v2774
    %v2776 = vpop.f32.mrf.mxu0
    %2777 = vdwg.mxu0
    %2778 = vmatpush.bf16.msra.mxu0 %v1449
    %2779 = vmatpush.bf16.msra.mxu0 %v1445
    %2780 = vmatpush.bf16.msra.mxu0 %v1441
    %2781 = vmatpush.bf16.msra.mxu0 %v1437
    %2782 = vmatpush.bf16.msra.mxu0 %v1433
    %2783 = vmatpush.bf16.msra.mxu0 %v1429
    %2784 = vmatpush.bf16.msra.mxu0 %v1425
    %2785 = vmatpush.bf16.msra.mxu0 %v1421
    %2786 = vmatmul.bf16.gmra.mxu0 %v2494
    %v2787 = vpop.f32.mrf.mxu0
    %v2788 = vadd.f32 %v2775, %v2787
    %v2789 = vpop.f32.mrf.mxu0
    %2790 = vdwg.mxu0
    %2791 = vmatpush.bf16.msra.mxu0 %v1481
    %2792 = vmatpush.bf16.msra.mxu0 %v1477
    %2793 = vmatpush.bf16.msra.mxu0 %v1473
    %2794 = vmatpush.bf16.msra.mxu0 %v1469
    %2795 = vmatpush.bf16.msra.mxu0 %v1465
    %2796 = vmatpush.bf16.msra.mxu0 %v1461
    %2797 = vmatpush.bf16.msra.mxu0 %v1457
    %2798 = vmatpush.bf16.msra.mxu0 %v1453
    %2799 = vmatmul.bf16.gmra.mxu0 %v2495
    %v2800 = vpop.f32.mrf.mxu0
    %v2801 = vadd.f32 %v2788, %v2800
    %v2802 = vpop.f32.mrf.mxu0
    %2803 = vdwg.mxu0
    %2804 = vmatpush.bf16.msra.mxu0 %v1513
    %2805 = vmatpush.bf16.msra.mxu0 %v1509
    %2806 = vmatpush.bf16.msra.mxu0 %v1505
    %2807 = vmatpush.bf16.msra.mxu0 %v1501
    %2808 = vmatpush.bf16.msra.mxu0 %v1497
    %2809 = vmatpush.bf16.msra.mxu0 %v1493
    %2810 = vmatpush.bf16.msra.mxu0 %v1489
    %2811 = vmatpush.bf16.msra.mxu0 %v1485
    %2812 = vmatmul.bf16.gmra.mxu0 %v2496
    %v2813 = vpop.f32.mrf.mxu0
    %v2814 = vadd.f32 %v2801, %v2813
    %v2815 = vpop.f32.mrf.mxu0
    %2816 = vdwg.mxu0
    %2817 = vmatpush.bf16.msra.mxu0 %v1290
    %2818 = vmatpush.bf16.msra.mxu0 %v1286
    %2819 = vmatpush.bf16.msra.mxu0 %v1282
    %2820 = vmatpush.bf16.msra.mxu0 %v1278
    %2821 = vmatpush.bf16.msra.mxu0 %v1274
    %2822 = vmatpush.bf16.msra.mxu0 %v1270
    %2823 = vmatpush.bf16.msra.mxu0 %v1266
    %2824 = vmatpush.bf16.msra.mxu0 %v1262
    %2825 = vmatmul.bf16.gmra.mxu0 %v2489
    %v2826 = vpop.f32.mrf.mxu0
    %v2827 = vadd.f32 %v459, %v2826
    %v2828 = vpop.f32.mrf.mxu0
    %2829 = vdwg.mxu0
    %2830 = vmatpush.bf16.msra.mxu0 %v1322
    %2831 = vmatpush.bf16.msra.mxu0 %v1318
    %2832 = vmatpush.bf16.msra.mxu0 %v1314
    %2833 = vmatpush.bf16.msra.mxu0 %v1310
    %2834 = vmatpush.bf16.msra.mxu0 %v1306
    %2835 = vmatpush.bf16.msra.mxu0 %v1302
    %2836 = vmatpush.bf16.msra.mxu0 %v1298
    %2837 = vmatpush.bf16.msra.mxu0 %v1294
    %2838 = vmatmul.bf16.gmra.mxu0 %v2490
    %v2839 = vpop.f32.mrf.mxu0
    %v2840 = vadd.f32 %v2827, %v2839
    %v2841 = vpop.f32.mrf.mxu0
    %2842 = vdwg.mxu0
    %2843 = vmatpush.bf16.msra.mxu0 %v1354
    %2844 = vmatpush.bf16.msra.mxu0 %v1350
    %2845 = vmatpush.bf16.msra.mxu0 %v1346
    %2846 = vmatpush.bf16.msra.mxu0 %v1342
    %2847 = vmatpush.bf16.msra.mxu0 %v1338
    %2848 = vmatpush.bf16.msra.mxu0 %v1334
    %2849 = vmatpush.bf16.msra.mxu0 %v1330
    %2850 = vmatpush.bf16.msra.mxu0 %v1326
    %2851 = vmatmul.bf16.gmra.mxu0 %v2491
    %v2852 = vpop.f32.mrf.mxu0
    %v2853 = vadd.f32 %v2840, %v2852
    %v2854 = vpop.f32.mrf.mxu0
    %2855 = vdwg.mxu0
    %2856 = vmatpush.bf16.msra.mxu0 %v1386
    %2857 = vmatpush.bf16.msra.mxu0 %v1382
    %2858 = vmatpush.bf16.msra.mxu0 %v1378
    %2859 = vmatpush.bf16.msra.mxu0 %v1374
    %2860 = vmatpush.bf16.msra.mxu0 %v1370
    %2861 = vmatpush.bf16.msra.mxu0 %v1366
    %2862 = vmatpush.bf16.msra.mxu0 %v1362
    %2863 = vmatpush.bf16.msra.mxu0 %v1358
    %2864 = vmatmul.bf16.gmra.mxu0 %v2492
    %v2865 = vpop.f32.mrf.mxu0
    %v2866 = vadd.f32 %v2853, %v2865
    %v2867 = vpop.f32.mrf.mxu0
    %2868 = vdwg.mxu0
    %2869 = vmatpush.bf16.msra.mxu0 %v1418
    %2870 = vmatpush.bf16.msra.mxu0 %v1414
    %2871 = vmatpush.bf16.msra.mxu0 %v1410
    %2872 = vmatpush.bf16.msra.mxu0 %v1406
    %2873 = vmatpush.bf16.msra.mxu0 %v1402
    %2874 = vmatpush.bf16.msra.mxu0 %v1398
    %2875 = vmatpush.bf16.msra.mxu0 %v1394
    %2876 = vmatpush.bf16.msra.mxu0 %v1390
    %2877 = vmatmul.bf16.gmra.mxu0 %v2493
    %v2878 = vpop.f32.mrf.mxu0
    %v2879 = vadd.f32 %v2866, %v2878
    %v2880 = vpop.f32.mrf.mxu0
    %2881 = vdwg.mxu0
    %2882 = vmatpush.bf16.msra.mxu0 %v1450
    %2883 = vmatpush.bf16.msra.mxu0 %v1446
    %2884 = vmatpush.bf16.msra.mxu0 %v1442
    %2885 = vmatpush.bf16.msra.mxu0 %v1438
    %2886 = vmatpush.bf16.msra.mxu0 %v1434
    %2887 = vmatpush.bf16.msra.mxu0 %v1430
    %2888 = vmatpush.bf16.msra.mxu0 %v1426
    %2889 = vmatpush.bf16.msra.mxu0 %v1422
    %2890 = vmatmul.bf16.gmra.mxu0 %v2494
    %v2891 = vpop.f32.mrf.mxu0
    %v2892 = vadd.f32 %v2879, %v2891
    %v2893 = vpop.f32.mrf.mxu0
    %2894 = vdwg.mxu0
    %2895 = vmatpush.bf16.msra.mxu0 %v1482
    %2896 = vmatpush.bf16.msra.mxu0 %v1478
    %2897 = vmatpush.bf16.msra.mxu0 %v1474
    %2898 = vmatpush.bf16.msra.mxu0 %v1470
    %2899 = vmatpush.bf16.msra.mxu0 %v1466
    %2900 = vmatpush.bf16.msra.mxu0 %v1462
    %2901 = vmatpush.bf16.msra.mxu0 %v1458
    %2902 = vmatpush.bf16.msra.mxu0 %v1454
    %2903 = vmatmul.bf16.gmra.mxu0 %v2495
    %v2904 = vpop.f32.mrf.mxu0
    %v2905 = vadd.f32 %v2892, %v2904
    %v2906 = vpop.f32.mrf.mxu0
    %2907 = vdwg.mxu0
    %2908 = vmatpush.bf16.msra.mxu0 %v1514
    %2909 = vmatpush.bf16.msra.mxu0 %v1510
    %2910 = vmatpush.bf16.msra.mxu0 %v1506
    %2911 = vmatpush.bf16.msra.mxu0 %v1502
    %2912 = vmatpush.bf16.msra.mxu0 %v1498
    %2913 = vmatpush.bf16.msra.mxu0 %v1494
    %2914 = vmatpush.bf16.msra.mxu0 %v1490
    %2915 = vmatpush.bf16.msra.mxu0 %v1486
    %2916 = vmatmul.bf16.gmra.mxu0 %v2496
    %v2917 = vpop.f32.mrf.mxu0
    %v2918 = vadd.f32 %v2905, %v2917
    %v2919 = vpop.f32.mrf.mxu0
    %2920 = vdwg.mxu0
    %v2921 = vmax.f32 %v2606, 0.0
    %v2922 = vmax.f32 %v2710, 0.0
    %v2923 = vmax.f32 %v2814, 0.0
    %v2924 = vmax.f32 %v2918, 0.0
    %v2925 = vpack.c.bf16 %v2922, %v2921
    %v2926 = vpack.c.bf16 %v2924, %v2923
    %v2928 = vunpack.c.l.b16 %v2925
    %v2929 = vunpack.c.h.b16 %v2925
    %v2930 = vpack.c.b16 %v2928, %v2928
    %v2931 = vpack.c.b16 %v2929, %v2929
    %2934 = vmatpush.bf16.msra.mxu0 %v2271
    %2935 = vmatpush.bf16.msra.mxu0 %v2270
    %2936 = vmatpush.bf16.msra.mxu0 %v2269
    %2937 = vmatpush.bf16.msra.mxu0 %v2268
    %2938 = vmatpush.bf16.msra.mxu0 %v2267
    %2939 = vmatpush.bf16.msra.mxu0 %v2266
    %2940 = vmatpush.bf16.msra.mxu0 %v2265
    %2941 = vmatpush.bf16.msra.mxu0 %v2264
    %2942 = vmatmul.bf16.gmra.mxu0 %v2930
    %v2943 = vpop.f32.mrf.mxu0
    %v2944 = vadd.f32 %v466, %v2943
    %v2945 = vpop.f32.mrf.mxu0
    %2946 = vdwg.mxu0
    %2947 = vmatpush.bf16.msra.mxu0 %v2279
    %2948 = vmatpush.bf16.msra.mxu0 %v2278
    %2949 = vmatpush.bf16.msra.mxu0 %v2277
    %2950 = vmatpush.bf16.msra.mxu0 %v2276
    %2951 = vmatpush.bf16.msra.mxu0 %v2275
    %2952 = vmatpush.bf16.msra.mxu0 %v2274
    %2953 = vmatpush.bf16.msra.mxu0 %v2273
    %2954 = vmatpush.bf16.msra.mxu0 %v2272
    %2955 = vmatmul.bf16.gmra.mxu0 %v2931
    %v2956 = vpop.f32.mrf.mxu0
    %v2957 = vadd.f32 %v2944, %v2956
    %v2958 = vpop.f32.mrf.mxu0
    %2959 = vdwg.mxu0
    %v2961 = vunpack.c.l.b16 %v2926
    %v2962 = vunpack.c.h.b16 %v2926
    %v2963 = vpack.c.b16 %v2961, %v2961
    %v2964 = vpack.c.b16 %v2962, %v2962
    %2967 = vmatpush.bf16.msra.mxu0 %v2400
    %2968 = vmatpush.bf16.msra.mxu0 %v2399
    %2969 = vmatpush.bf16.msra.mxu0 %v2398
    %2970 = vmatpush.bf16.msra.mxu0 %v2397
    %2971 = vmatpush.bf16.msra.mxu0 %v2396
    %2972 = vmatpush.bf16.msra.mxu0 %v2395
    %2973 = vmatpush.bf16.msra.mxu0 %v2394
    %2974 = vmatpush.bf16.msra.mxu0 %v2393
    %2975 = vmatmul.bf16.gmra.mxu0 %v2963
    %v2976 = vpop.f32.mrf.mxu0
    %v2977 = vadd.f32 %v470, %v2976
    %v2978 = vpop.f32.mrf.mxu0
    %2979 = vdwg.mxu0
    %2980 = vmatpush.bf16.msra.mxu0 %v2408
    %2981 = vmatpush.bf16.msra.mxu0 %v2407
    %2982 = vmatpush.bf16.msra.mxu0 %v2406
    %2983 = vmatpush.bf16.msra.mxu0 %v2405
    %2984 = vmatpush.bf16.msra.mxu0 %v2404
    %2985 = vmatpush.bf16.msra.mxu0 %v2403
    %2986 = vmatpush.bf16.msra.mxu0 %v2402
    %2987 = vmatpush.bf16.msra.mxu0 %v2401
    %2988 = vmatmul.bf16.gmra.mxu0 %v2964
    %v2989 = vpop.f32.mrf.mxu0
    %v2990 = vadd.f32 %v2977, %v2989
    %v2991 = vpop.f32.mrf.mxu0
    %2992 = vdwg.mxu0
    %v2993 = vmul.f32 %v2957, %v2957
    %v2994 = vsel %vm2452, %v2993, 0.0
    %2995 = vadd.xlane.f32.xlu0 %v2994
    %v2996 = vpop.xlane.xlu0 %2995
    %v2997 = vmax.f32 %v2996, 1e-24
    %v2998 = vrsqrt.pop %v2997
    %v2999 = vmul.f32 %v2998, %v2997
    %v3000 = vmul.f32 %v2999, %v2998
    %v3001 = vmul.f32 0.5, %v3000
    %v3002 = vsub.f32 1.5, %v3001
    %v3003 = vmul.f32 %v2998, %v3002
    %vm3004 = vweird.f32 %v2997
    %vm3005 = vweird.f32 %v2998
    %vm3006 = vmor %vm3004, %vm3005
    %v3007 = vsel %vm3006, %v2998, %v3003
    %v3008 = vmul.f32 %v2990, %v2990
    %v3009 = vsel %vm2452, %v3008, 0.0
    %3010 = vadd.xlane.f32.xlu0 %v3009
    %v3011 = vpop.xlane.xlu0 %3010
    %v3012 = vmax.f32 %v3011, 1e-24
    %v3013 = vrsqrt.pop %v3012
    %v3014 = vmul.f32 %v3013, %v3012
    %v3015 = vmul.f32 %v3014, %v3013
    %v3016 = vmul.f32 0.5, %v3015
    %v3017 = vsub.f32 1.5, %v3016
    %v3018 = vmul.f32 %v3013, %v3017
    %vm3019 = vweird.f32 %v3012
    %vm3020 = vweird.f32 %v3013
    %vm3021 = vmor %vm3019, %vm3020
    %v3022 = vsel %vm3021, %v3013, %v3018
    %v3023 = vmul.f32 %v2957, %v3007
    %v3024 = vmul.f32 %v2990, %v3022
    %s3025 = scalar_lea.vmem [#allocation14], 4
    %3026 = vst [vmem:[%s3025] sm:$0x3] %v3023
    %3027 = vst [vmem:[%s3025 + $0x2] sm:$0x3] %v3024
    %v3028 = vld [vmem:[#allocation7] sm:$0xff]
    %3030 = vst [vmem:[#allocation1] ss:$9 sm:$0xff] %v3028
    %v3031 = vld [vmem:[#allocation1] sm:$0xff]
    %v3032 = vld [vmem:[#allocation1 + $0x9] sm:$0xff]
    %v3033 = vld [vmem:[#allocation1 + $0x12] sm:$0xff]
    %v3034 = vld [vmem:[#allocation1 + $0x1b] sm:$0xff]
    %v3035 = vld [vmem:[#allocation1 + $0x24] sm:$0xff]
    %v3036 = vld [vmem:[#allocation1 + $0x2d] sm:$0xff]
    %v3037 = vld [vmem:[#allocation1 + $0x36] sm:$0xff]
    %v3038 = vld [vmem:[#allocation1 + $0x3f] sm:$0xff]
    %3047 = vmatpush.bf16.msra.mxu0 %v1287
    %3048 = vmatpush.bf16.msra.mxu0 %v1283
    %3049 = vmatpush.bf16.msra.mxu0 %v1279
    %3050 = vmatpush.bf16.msra.mxu0 %v1275
    %3051 = vmatpush.bf16.msra.mxu0 %v1271
    %3052 = vmatpush.bf16.msra.mxu0 %v1267
    %3053 = vmatpush.bf16.msra.mxu0 %v1263
    %3054 = vmatpush.bf16.msra.mxu0 %v1259
    %3055 = vmatmul.bf16.gmra.mxu0 %v3031
    %v3056 = vpop.f32.mrf.mxu0
    %v3057 = vadd.f32 %v456, %v3056
    %v3058 = vpop.f32.mrf.mxu0
    %3059 = vdwg.mxu0
    %3060 = vmatpush.bf16.msra.mxu0 %v1319
    %3061 = vmatpush.bf16.msra.mxu0 %v1315
    %3062 = vmatpush.bf16.msra.mxu0 %v1311
    %3063 = vmatpush.bf16.msra.mxu0 %v1307
    %3064 = vmatpush.bf16.msra.mxu0 %v1303
    %3065 = vmatpush.bf16.msra.mxu0 %v1299
    %3066 = vmatpush.bf16.msra.mxu0 %v1295
    %3067 = vmatpush.bf16.msra.mxu0 %v1291
    %3068 = vmatmul.bf16.gmra.mxu0 %v3032
    %v3069 = vpop.f32.mrf.mxu0
    %v3070 = vadd.f32 %v3057, %v3069
    %v3071 = vpop.f32.mrf.mxu0
    %3072 = vdwg.mxu0
    %3073 = vmatpush.bf16.msra.mxu0 %v1351
    %3074 = vmatpush.bf16.msra.mxu0 %v1347
    %3075 = vmatpush.bf16.msra.mxu0 %v1343
    %3076 = vmatpush.bf16.msra.mxu0 %v1339
    %3077 = vmatpush.bf16.msra.mxu0 %v1335
    %3078 = vmatpush.bf16.msra.mxu0 %v1331
    %3079 = vmatpush.bf16.msra.mxu0 %v1327
    %3080 = vmatpush.bf16.msra.mxu0 %v1323
    %3081 = vmatmul.bf16.gmra.mxu0 %v3033
    %v3082 = vpop.f32.mrf.mxu0
    %v3083 = vadd.f32 %v3070, %v3082
    %v3084 = vpop.f32.mrf.mxu0
    %3085 = vdwg.mxu0
    %3086 = vmatpush.bf16.msra.mxu0 %v1383
    %3087 = vmatpush.bf16.msra.mxu0 %v1379
    %3088 = vmatpush.bf16.msra.mxu0 %v1375
    %3089 = vmatpush.bf16.msra.mxu0 %v1371
    %3090 = vmatpush.bf16.msra.mxu0 %v1367
    %3091 = vmatpush.bf16.msra.mxu0 %v1363
    %3092 = vmatpush.bf16.msra.mxu0 %v1359
    %3093 = vmatpush.bf16.msra.mxu0 %v1355
    %3094 = vmatmul.bf16.gmra.mxu0 %v3034
    %v3095 = vpop.f32.mrf.mxu0
    %v3096 = vadd.f32 %v3083, %v3095
    %v3097 = vpop.f32.mrf.mxu0
    %3098 = vdwg.mxu0
    %3099 = vmatpush.bf16.msra.mxu0 %v1415
    %3100 = vmatpush.bf16.msra.mxu0 %v1411
    %3101 = vmatpush.bf16.msra.mxu0 %v1407
    %3102 = vmatpush.bf16.msra.mxu0 %v1403
    %3103 = vmatpush.bf16.msra.mxu0 %v1399
    %3104 = vmatpush.bf16.msra.mxu0 %v1395
    %3105 = vmatpush.bf16.msra.mxu0 %v1391
    %3106 = vmatpush.bf16.msra.mxu0 %v1387
    %3107 = vmatmul.bf16.gmra.mxu0 %v3035
    %v3108 = vpop.f32.mrf.mxu0
    %v3109 = vadd.f32 %v3096, %v3108
    %v3110 = vpop.f32.mrf.mxu0
    %3111 = vdwg.mxu0
    %3112 = vmatpush.bf16.msra.mxu0 %v1447
    %3113 = vmatpush.bf16.msra.mxu0 %v1443
    %3114 = vmatpush.bf16.msra.mxu0 %v1439
    %3115 = vmatpush.bf16.msra.mxu0 %v1435
    %3116 = vmatpush.bf16.msra.mxu0 %v1431
    %3117 = vmatpush.bf16.msra.mxu0 %v1427
    %3118 = vmatpush.bf16.msra.mxu0 %v1423
    %3119 = vmatpush.bf16.msra.mxu0 %v1419
    %3120 = vmatmul.bf16.gmra.mxu0 %v3036
    %v3121 = vpop.f32.mrf.mxu0
    %v3122 = vadd.f32 %v3109, %v3121
    %v3123 = vpop.f32.mrf.mxu0
    %3124 = vdwg.mxu0
    %3125 = vmatpush.bf16.msra.mxu0 %v1479
    %3126 = vmatpush.bf16.msra.mxu0 %v1475
    %3127 = vmatpush.bf16.msra.mxu0 %v1471
    %3128 = vmatpush.bf16.msra.mxu0 %v1467
    %3129 = vmatpush.bf16.msra.mxu0 %v1463
    %3130 = vmatpush.bf16.msra.mxu0 %v1459
    %3131 = vmatpush.bf16.msra.mxu0 %v1455
    %3132 = vmatpush.bf16.msra.mxu0 %v1451
    %3133 = vmatmul.bf16.gmra.mxu0 %v3037
    %v3134 = vpop.f32.mrf.mxu0
    %v3135 = vadd.f32 %v3122, %v3134
    %v3136 = vpop.f32.mrf.mxu0
    %3137 = vdwg.mxu0
    %3138 = vmatpush.bf16.msra.mxu0 %v1511
    %3139 = vmatpush.bf16.msra.mxu0 %v1507
    %3140 = vmatpush.bf16.msra.mxu0 %v1503
    %3141 = vmatpush.bf16.msra.mxu0 %v1499
    %3142 = vmatpush.bf16.msra.mxu0 %v1495
    %3143 = vmatpush.bf16.msra.mxu0 %v1491
    %3144 = vmatpush.bf16.msra.mxu0 %v1487
    %3145 = vmatpush.bf16.msra.mxu0 %v1483
    %3146 = vmatmul.bf16.gmra.mxu0 %v3038
    %v3147 = vpop.f32.mrf.mxu0
    %v3148 = vadd.f32 %v3135, %v3147
    %v3149 = vpop.f32.mrf.mxu0
    %3150 = vdwg.mxu0
    %3151 = vmatpush.bf16.msra.mxu0 %v1288
    %3152 = vmatpush.bf16.msra.mxu0 %v1284
    %3153 = vmatpush.bf16.msra.mxu0 %v1280
    %3154 = vmatpush.bf16.msra.mxu0 %v1276
    %3155 = vmatpush.bf16.msra.mxu0 %v1272
    %3156 = vmatpush.bf16.msra.mxu0 %v1268
    %3157 = vmatpush.bf16.msra.mxu0 %v1264
    %3158 = vmatpush.bf16.msra.mxu0 %v1260
    %3159 = vmatmul.bf16.gmra.mxu0 %v3031
    %v3160 = vpop.f32.mrf.mxu0
    %v3161 = vadd.f32 %v457, %v3160
    %v3162 = vpop.f32.mrf.mxu0
    %3163 = vdwg.mxu0
    %3164 = vmatpush.bf16.msra.mxu0 %v1320
    %3165 = vmatpush.bf16.msra.mxu0 %v1316
    %3166 = vmatpush.bf16.msra.mxu0 %v1312
    %3167 = vmatpush.bf16.msra.mxu0 %v1308
    %3168 = vmatpush.bf16.msra.mxu0 %v1304
    %3169 = vmatpush.bf16.msra.mxu0 %v1300
    %3170 = vmatpush.bf16.msra.mxu0 %v1296
    %3171 = vmatpush.bf16.msra.mxu0 %v1292
    %3172 = vmatmul.bf16.gmra.mxu0 %v3032
    %v3173 = vpop.f32.mrf.mxu0
    %v3174 = vadd.f32 %v3161, %v3173
    %v3175 = vpop.f32.mrf.mxu0
    %3176 = vdwg.mxu0
    %3177 = vmatpush.bf16.msra.mxu0 %v1352
    %3178 = vmatpush.bf16.msra.mxu0 %v1348
    %3179 = vmatpush.bf16.msra.mxu0 %v1344
    %3180 = vmatpush.bf16.msra.mxu0 %v1340
    %3181 = vmatpush.bf16.msra.mxu0 %v1336
    %3182 = vmatpush.bf16.msra.mxu0 %v1332
    %3183 = vmatpush.bf16.msra.mxu0 %v1328
    %3184 = vmatpush.bf16.msra.mxu0 %v1324
    %3185 = vmatmul.bf16.gmra.mxu0 %v3033
    %v3186 = vpop.f32.mrf.mxu0
    %v3187 = vadd.f32 %v3174, %v3186
    %v3188 = vpop.f32.mrf.mxu0
    %3189 = vdwg.mxu0
    %3190 = vmatpush.bf16.msra.mxu0 %v1384
    %3191 = vmatpush.bf16.msra.mxu0 %v1380
    %3192 = vmatpush.bf16.msra.mxu0 %v1376
    %3193 = vmatpush.bf16.msra.mxu0 %v1372
    %3194 = vmatpush.bf16.msra.mxu0 %v1368
    %3195 = vmatpush.bf16.msra.mxu0 %v1364
    %3196 = vmatpush.bf16.msra.mxu0 %v1360
    %3197 = vmatpush.bf16.msra.mxu0 %v1356
    %3198 = vmatmul.bf16.gmra.mxu0 %v3034
    %v3199 = vpop.f32.mrf.mxu0
    %v3200 = vadd.f32 %v3187, %v3199
    %v3201 = vpop.f32.mrf.mxu0
    %3202 = vdwg.mxu0
    %3203 = vmatpush.bf16.msra.mxu0 %v1416
    %3204 = vmatpush.bf16.msra.mxu0 %v1412
    %3205 = vmatpush.bf16.msra.mxu0 %v1408
    %3206 = vmatpush.bf16.msra.mxu0 %v1404
    %3207 = vmatpush.bf16.msra.mxu0 %v1400
    %3208 = vmatpush.bf16.msra.mxu0 %v1396
    %3209 = vmatpush.bf16.msra.mxu0 %v1392
    %3210 = vmatpush.bf16.msra.mxu0 %v1388
    %3211 = vmatmul.bf16.gmra.mxu0 %v3035
    %v3212 = vpop.f32.mrf.mxu0
    %v3213 = vadd.f32 %v3200, %v3212
    %v3214 = vpop.f32.mrf.mxu0
    %3215 = vdwg.mxu0
    %3216 = vmatpush.bf16.msra.mxu0 %v1448
    %3217 = vmatpush.bf16.msra.mxu0 %v1444
    %3218 = vmatpush.bf16.msra.mxu0 %v1440
    %3219 = vmatpush.bf16.msra.mxu0 %v1436
    %3220 = vmatpush.bf16.msra.mxu0 %v1432
    %3221 = vmatpush.bf16.msra.mxu0 %v1428
    %3222 = vmatpush.bf16.msra.mxu0 %v1424
    %3223 = vmatpush.bf16.msra.mxu0 %v1420
    %3224 = vmatmul.bf16.gmra.mxu0 %v3036
    %v3225 = vpop.f32.mrf.mxu0
    %v3226 = vadd.f32 %v3213, %v3225
    %v3227 = vpop.f32.mrf.mxu0
    %3228 = vdwg.mxu0
    %3229 = vmatpush.bf16.msra.mxu0 %v1480
    %3230 = vmatpush.bf16.msra.mxu0 %v1476
    %3231 = vmatpush.bf16.msra.mxu0 %v1472
    %3232 = vmatpush.bf16.msra.mxu0 %v1468
    %3233 = vmatpush.bf16.msra.mxu0 %v1464
    %3234 = vmatpush.bf16.msra.mxu0 %v1460
    %3235 = vmatpush.bf16.msra.mxu0 %v1456
    %3236 = vmatpush.bf16.msra.mxu0 %v1452
    %3237 = vmatmul.bf16.gmra.mxu0 %v3037
    %v3238 = vpop.f32.mrf.mxu0
    %v3239 = vadd.f32 %v3226, %v3238
    %v3240 = vpop.f32.mrf.mxu0
    %3241 = vdwg.mxu0
    %3242 = vmatpush.bf16.msra.mxu0 %v1512
    %3243 = vmatpush.bf16.msra.mxu0 %v1508
    %3244 = vmatpush.bf16.msra.mxu0 %v1504
    %3245 = vmatpush.bf16.msra.mxu0 %v1500
    %3246 = vmatpush.bf16.msra.mxu0 %v1496
    %3247 = vmatpush.bf16.msra.mxu0 %v1492
    %3248 = vmatpush.bf16.msra.mxu0 %v1488
    %3249 = vmatpush.bf16.msra.mxu0 %v1484
    %3250 = vmatmul.bf16.gmra.mxu0 %v3038
    %v3251 = vpop.f32.mrf.mxu0
    %v3252 = vadd.f32 %v3239, %v3251
    %v3253 = vpop.f32.mrf.mxu0
    %3254 = vdwg.mxu0
    %3255 = vmatpush.bf16.msra.mxu0 %v1289
    %3256 = vmatpush.bf16.msra.mxu0 %v1285
    %3257 = vmatpush.bf16.msra.mxu0 %v1281
    %3258 = vmatpush.bf16.msra.mxu0 %v1277
    %3259 = vmatpush.bf16.msra.mxu0 %v1273
    %3260 = vmatpush.bf16.msra.mxu0 %v1269
    %3261 = vmatpush.bf16.msra.mxu0 %v1265
    %3262 = vmatpush.bf16.msra.mxu0 %v1261
    %3263 = vmatmul.bf16.gmra.mxu0 %v3031
    %v3264 = vpop.f32.mrf.mxu0
    %v3265 = vadd.f32 %v458, %v3264
    %v3266 = vpop.f32.mrf.mxu0
    %3267 = vdwg.mxu0
    %3268 = vmatpush.bf16.msra.mxu0 %v1321
    %3269 = vmatpush.bf16.msra.mxu0 %v1317
    %3270 = vmatpush.bf16.msra.mxu0 %v1313
    %3271 = vmatpush.bf16.msra.mxu0 %v1309
    %3272 = vmatpush.bf16.msra.mxu0 %v1305
    %3273 = vmatpush.bf16.msra.mxu0 %v1301
    %3274 = vmatpush.bf16.msra.mxu0 %v1297
    %3275 = vmatpush.bf16.msra.mxu0 %v1293
    %3276 = vmatmul.bf16.gmra.mxu0 %v3032
    %v3277 = vpop.f32.mrf.mxu0
    %v3278 = vadd.f32 %v3265, %v3277
    %v3279 = vpop.f32.mrf.mxu0
    %3280 = vdwg.mxu0
    %3281 = vmatpush.bf16.msra.mxu0 %v1353
    %3282 = vmatpush.bf16.msra.mxu0 %v1349
    %3283 = vmatpush.bf16.msra.mxu0 %v1345
    %3284 = vmatpush.bf16.msra.mxu0 %v1341
    %3285 = vmatpush.bf16.msra.mxu0 %v1337
    %3286 = vmatpush.bf16.msra.mxu0 %v1333
    %3287 = vmatpush.bf16.msra.mxu0 %v1329
    %3288 = vmatpush.bf16.msra.mxu0 %v1325
    %3289 = vmatmul.bf16.gmra.mxu0 %v3033
    %v3290 = vpop.f32.mrf.mxu0
    %v3291 = vadd.f32 %v3278, %v3290
    %v3292 = vpop.f32.mrf.mxu0
    %3293 = vdwg.mxu0
    %3294 = vmatpush.bf16.msra.mxu0 %v1385
    %3295 = vmatpush.bf16.msra.mxu0 %v1381
    %3296 = vmatpush.bf16.msra.mxu0 %v1377
    %3297 = vmatpush.bf16.msra.mxu0 %v1373
    %3298 = vmatpush.bf16.msra.mxu0 %v1369
    %3299 = vmatpush.bf16.msra.mxu0 %v1365
    %3300 = vmatpush.bf16.msra.mxu0 %v1361
    %3301 = vmatpush.bf16.msra.mxu0 %v1357
    %3302 = vmatmul.bf16.gmra.mxu0 %v3034
    %v3303 = vpop.f32.mrf.mxu0
    %v3304 = vadd.f32 %v3291, %v3303
    %v3305 = vpop.f32.mrf.mxu0
    %3306 = vdwg.mxu0
    %3307 = vmatpush.bf16.msra.mxu0 %v1417
    %3308 = vmatpush.bf16.msra.mxu0 %v1413
    %3309 = vmatpush.bf16.msra.mxu0 %v1409
    %3310 = vmatpush.bf16.msra.mxu0 %v1405
    %3311 = vmatpush.bf16.msra.mxu0 %v1401
    %3312 = vmatpush.bf16.msra.mxu0 %v1397
    %3313 = vmatpush.bf16.msra.mxu0 %v1393
    %3314 = vmatpush.bf16.msra.mxu0 %v1389
    %3315 = vmatmul.bf16.gmra.mxu0 %v3035
    %v3316 = vpop.f32.mrf.mxu0
    %v3317 = vadd.f32 %v3304, %v3316
    %v3318 = vpop.f32.mrf.mxu0
    %3319 = vdwg.mxu0
    %3320 = vmatpush.bf16.msra.mxu0 %v1449
    %3321 = vmatpush.bf16.msra.mxu0 %v1445
    %3322 = vmatpush.bf16.msra.mxu0 %v1441
    %3323 = vmatpush.bf16.msra.mxu0 %v1437
    %3324 = vmatpush.bf16.msra.mxu0 %v1433
    %3325 = vmatpush.bf16.msra.mxu0 %v1429
    %3326 = vmatpush.bf16.msra.mxu0 %v1425
    %3327 = vmatpush.bf16.msra.mxu0 %v1421
    %3328 = vmatmul.bf16.gmra.mxu0 %v3036
    %v3329 = vpop.f32.mrf.mxu0
    %v3330 = vadd.f32 %v3317, %v3329
    %v3331 = vpop.f32.mrf.mxu0
    %3332 = vdwg.mxu0
    %3333 = vmatpush.bf16.msra.mxu0 %v1481
    %3334 = vmatpush.bf16.msra.mxu0 %v1477
    %3335 = vmatpush.bf16.msra.mxu0 %v1473
    %3336 = vmatpush.bf16.msra.mxu0 %v1469
    %3337 = vmatpush.bf16.msra.mxu0 %v1465
    %3338 = vmatpush.bf16.msra.mxu0 %v1461
    %3339 = vmatpush.bf16.msra.mxu0 %v1457
    %3340 = vmatpush.bf16.msra.mxu0 %v1453
    %3341 = vmatmul.bf16.gmra.mxu0 %v3037
    %v3342 = vpop.f32.mrf.mxu0
    %v3343 = vadd.f32 %v3330, %v3342
    %v3344 = vpop.f32.mrf.mxu0
    %3345 = vdwg.mxu0
    %3346 = vmatpush.bf16.msra.mxu0 %v1513
    %3347 = vmatpush.bf16.msra.mxu0 %v1509
    %3348 = vmatpush.bf16.msra.mxu0 %v1505
    %3349 = vmatpush.bf16.msra.mxu0 %v1501
    %3350 = vmatpush.bf16.msra.mxu0 %v1497
    %3351 = vmatpush.bf16.msra.mxu0 %v1493
    %3352 = vmatpush.bf16.msra.mxu0 %v1489
    %3353 = vmatpush.bf16.msra.mxu0 %v1485
    %3354 = vmatmul.bf16.gmra.mxu0 %v3038
    %v3355 = vpop.f32.mrf.mxu0
    %v3356 = vadd.f32 %v3343, %v3355
    %v3357 = vpop.f32.mrf.mxu0
    %3358 = vdwg.mxu0
    %3359 = vmatpush.bf16.msra.mxu0 %v1290
    %3360 = vmatpush.bf16.msra.mxu0 %v1286
    %3361 = vmatpush.bf16.msra.mxu0 %v1282
    %3362 = vmatpush.bf16.msra.mxu0 %v1278
    %3363 = vmatpush.bf16.msra.mxu0 %v1274
    %3364 = vmatpush.bf16.msra.mxu0 %v1270
    %3365 = vmatpush.bf16.msra.mxu0 %v1266
    %3366 = vmatpush.bf16.msra.mxu0 %v1262
    %3367 = vmatmul.bf16.gmra.mxu0 %v3031
    %v3368 = vpop.f32.mrf.mxu0
    %v3369 = vadd.f32 %v459, %v3368
    %v3370 = vpop.f32.mrf.mxu0
    %3371 = vdwg.mxu0
    %3372 = vmatpush.bf16.msra.mxu0 %v1322
    %3373 = vmatpush.bf16.msra.mxu0 %v1318
    %3374 = vmatpush.bf16.msra.mxu0 %v1314
    %3375 = vmatpush.bf16.msra.mxu0 %v1310
    %3376 = vmatpush.bf16.msra.mxu0 %v1306
    %3377 = vmatpush.bf16.msra.mxu0 %v1302
    %3378 = vmatpush.bf16.msra.mxu0 %v1298
    %3379 = vmatpush.bf16.msra.mxu0 %v1294
    %3380 = vmatmul.bf16.gmra.mxu0 %v3032
    %v3381 = vpop.f32.mrf.mxu0
    %v3382 = vadd.f32 %v3369, %v3381
    %v3383 = vpop.f32.mrf.mxu0
    %3384 = vdwg.mxu0
    %3385 = vmatpush.bf16.msra.mxu0 %v1354
    %3386 = vmatpush.bf16.msra.mxu0 %v1350
    %3387 = vmatpush.bf16.msra.mxu0 %v1346
    %3388 = vmatpush.bf16.msra.mxu0 %v1342
    %3389 = vmatpush.bf16.msra.mxu0 %v1338
    %3390 = vmatpush.bf16.msra.mxu0 %v1334
    %3391 = vmatpush.bf16.msra.mxu0 %v1330
    %3392 = vmatpush.bf16.msra.mxu0 %v1326
    %3393 = vmatmul.bf16.gmra.mxu0 %v3033
    %v3394 = vpop.f32.mrf.mxu0
    %v3395 = vadd.f32 %v3382, %v3394
    %v3396 = vpop.f32.mrf.mxu0
    %3397 = vdwg.mxu0
    %3398 = vmatpush.bf16.msra.mxu0 %v1386
    %3399 = vmatpush.bf16.msra.mxu0 %v1382
    %3400 = vmatpush.bf16.msra.mxu0 %v1378
    %3401 = vmatpush.bf16.msra.mxu0 %v1374
    %3402 = vmatpush.bf16.msra.mxu0 %v1370
    %3403 = vmatpush.bf16.msra.mxu0 %v1366
    %3404 = vmatpush.bf16.msra.mxu0 %v1362
    %3405 = vmatpush.bf16.msra.mxu0 %v1358
    %3406 = vmatmul.bf16.gmra.mxu0 %v3034
    %v3407 = vpop.f32.mrf.mxu0
    %v3408 = vadd.f32 %v3395, %v3407
    %v3409 = vpop.f32.mrf.mxu0
    %3410 = vdwg.mxu0
    %3411 = vmatpush.bf16.msra.mxu0 %v1418
    %3412 = vmatpush.bf16.msra.mxu0 %v1414
    %3413 = vmatpush.bf16.msra.mxu0 %v1410
    %3414 = vmatpush.bf16.msra.mxu0 %v1406
    %3415 = vmatpush.bf16.msra.mxu0 %v1402
    %3416 = vmatpush.bf16.msra.mxu0 %v1398
    %3417 = vmatpush.bf16.msra.mxu0 %v1394
    %3418 = vmatpush.bf16.msra.mxu0 %v1390
    %3419 = vmatmul.bf16.gmra.mxu0 %v3035
    %v3420 = vpop.f32.mrf.mxu0
    %v3421 = vadd.f32 %v3408, %v3420
    %v3422 = vpop.f32.mrf.mxu0
    %3423 = vdwg.mxu0
    %3424 = vmatpush.bf16.msra.mxu0 %v1450
    %3425 = vmatpush.bf16.msra.mxu0 %v1446
    %3426 = vmatpush.bf16.msra.mxu0 %v1442
    %3427 = vmatpush.bf16.msra.mxu0 %v1438
    %3428 = vmatpush.bf16.msra.mxu0 %v1434
    %3429 = vmatpush.bf16.msra.mxu0 %v1430
    %3430 = vmatpush.bf16.msra.mxu0 %v1426
    %3431 = vmatpush.bf16.msra.mxu0 %v1422
    %3432 = vmatmul.bf16.gmra.mxu0 %v3036
    %v3433 = vpop.f32.mrf.mxu0
    %v3434 = vadd.f32 %v3421, %v3433
    %v3435 = vpop.f32.mrf.mxu0
    %3436 = vdwg.mxu0
    %3437 = vmatpush.bf16.msra.mxu0 %v1482
    %3438 = vmatpush.bf16.msra.mxu0 %v1478
    %3439 = vmatpush.bf16.msra.mxu0 %v1474
    %3440 = vmatpush.bf16.msra.mxu0 %v1470
    %3441 = vmatpush.bf16.msra.mxu0 %v1466
    %3442 = vmatpush.bf16.msra.mxu0 %v1462
    %3443 = vmatpush.bf16.msra.mxu0 %v1458
    %3444 = vmatpush.bf16.msra.mxu0 %v1454
    %3445 = vmatmul.bf16.gmra.mxu0 %v3037
    %v3446 = vpop.f32.mrf.mxu0
    %v3447 = vadd.f32 %v3434, %v3446
    %v3448 = vpop.f32.mrf.mxu0
    %3449 = vdwg.mxu0
    %3450 = vmatpush.bf16.msra.mxu0 %v1514
    %3451 = vmatpush.bf16.msra.mxu0 %v1510
    %3452 = vmatpush.bf16.msra.mxu0 %v1506
    %3453 = vmatpush.bf16.msra.mxu0 %v1502
    %3454 = vmatpush.bf16.msra.mxu0 %v1498
    %3455 = vmatpush.bf16.msra.mxu0 %v1494
    %3456 = vmatpush.bf16.msra.mxu0 %v1490
    %3457 = vmatpush.bf16.msra.mxu0 %v1486
    %3458 = vmatmul.bf16.gmra.mxu0 %v3038
    %v3459 = vpop.f32.mrf.mxu0
    %v3460 = vadd.f32 %v3447, %v3459
    %v3461 = vpop.f32.mrf.mxu0
    %3462 = vdwg.mxu0
    %v3463 = vmax.f32 %v3148, 0.0
    %v3464 = vmax.f32 %v3252, 0.0
    %v3465 = vmax.f32 %v3356, 0.0
    %v3466 = vmax.f32 %v3460, 0.0
    %v3467 = vpack.c.bf16 %v3464, %v3463
    %v3468 = vpack.c.bf16 %v3466, %v3465
    %v3470 = vunpack.c.l.b16 %v3467
    %v3471 = vunpack.c.h.b16 %v3467
    %v3472 = vpack.c.b16 %v3470, %v3470
    %v3473 = vpack.c.b16 %v3471, %v3471
    %3476 = vmatpush.bf16.msra.mxu0 %v2271
    %3477 = vmatpush.bf16.msra.mxu0 %v2270
    %3478 = vmatpush.bf16.msra.mxu0 %v2269
    %3479 = vmatpush.bf16.msra.mxu0 %v2268
    %3480 = vmatpush.bf16.msra.mxu0 %v2267
    %3481 = vmatpush.bf16.msra.mxu0 %v2266
    %3482 = vmatpush.bf16.msra.mxu0 %v2265
    %3483 = vmatpush.bf16.msra.mxu0 %v2264
    %3484 = vmatmul.bf16.gmra.mxu0 %v3472
    %v3485 = vpop.f32.mrf.mxu0
    %v3486 = vadd.f32 %v466, %v3485
    %v3487 = vpop.f32.mrf.mxu0
    %3488 = vdwg.mxu0
    %3489 = vmatpush.bf16.msra.mxu0 %v2279
    %3490 = vmatpush.bf16.msra.mxu0 %v2278
    %3491 = vmatpush.bf16.msra.mxu0 %v2277
    %3492 = vmatpush.bf16.msra.mxu0 %v2276
    %3493 = vmatpush.bf16.msra.mxu0 %v2275
    %3494 = vmatpush.bf16.msra.mxu0 %v2274
    %3495 = vmatpush.bf16.msra.mxu0 %v2273
    %3496 = vmatpush.bf16.msra.mxu0 %v2272
    %3497 = vmatmul.bf16.gmra.mxu0 %v3473
    %v3498 = vpop.f32.mrf.mxu0
    %v3499 = vadd.f32 %v3486, %v3498
    %v3500 = vpop.f32.mrf.mxu0
    %3501 = vdwg.mxu0
    %v3503 = vunpack.c.l.b16 %v3468
    %v3504 = vunpack.c.h.b16 %v3468
    %v3505 = vpack.c.b16 %v3503, %v3503
    %v3506 = vpack.c.b16 %v3504, %v3504
    %3509 = vmatpush.bf16.msra.mxu0 %v2400
    %3510 = vmatpush.bf16.msra.mxu0 %v2399
    %3511 = vmatpush.bf16.msra.mxu0 %v2398
    %3512 = vmatpush.bf16.msra.mxu0 %v2397
    %3513 = vmatpush.bf16.msra.mxu0 %v2396
    %3514 = vmatpush.bf16.msra.mxu0 %v2395
    %3515 = vmatpush.bf16.msra.mxu0 %v2394
    %3516 = vmatpush.bf16.msra.mxu0 %v2393
    %3517 = vmatmul.bf16.gmra.mxu0 %v3505
    %v3518 = vpop.f32.mrf.mxu0
    %v3519 = vadd.f32 %v470, %v3518
    %v3520 = vpop.f32.mrf.mxu0
    %3521 = vdwg.mxu0
    %3522 = vmatpush.bf16.msra.mxu0 %v2408
    %3523 = vmatpush.bf16.msra.mxu0 %v2407
    %3524 = vmatpush.bf16.msra.mxu0 %v2406
    %3525 = vmatpush.bf16.msra.mxu0 %v2405
    %3526 = vmatpush.bf16.msra.mxu0 %v2404
    %3527 = vmatpush.bf16.msra.mxu0 %v2403
    %3528 = vmatpush.bf16.msra.mxu0 %v2402
    %3529 = vmatpush.bf16.msra.mxu0 %v2401
    %3530 = vmatmul.bf16.gmra.mxu0 %v3506
    %v3531 = vpop.f32.mrf.mxu0
    %v3532 = vadd.f32 %v3519, %v3531
    %v3533 = vpop.f32.mrf.mxu0
    %3534 = vdwg.mxu0
    %v3535 = vmul.f32 %v3499, %v3499
    %v3536 = vsel %vm2452, %v3535, 0.0
    %3537 = vadd.xlane.f32.xlu0 %v3536
    %v3538 = vpop.xlane.xlu0 %3537
    %v3539 = vmax.f32 %v3538, 1e-24
    %v3540 = vrsqrt.pop %v3539
    %v3541 = vmul.f32 %v3540, %v3539
    %v3542 = vmul.f32 %v3541, %v3540
    %v3543 = vmul.f32 0.5, %v3542
    %v3544 = vsub.f32 1.5, %v3543
    %v3545 = vmul.f32 %v3540, %v3544
    %vm3546 = vweird.f32 %v3539
    %vm3547 = vweird.f32 %v3540
    %vm3548 = vmor %vm3546, %vm3547
    %v3549 = vsel %vm3548, %v3540, %v3545
    %v3550 = vmul.f32 %v3532, %v3532
    %v3551 = vsel %vm2452, %v3550, 0.0
    %3552 = vadd.xlane.f32.xlu0 %v3551
    %v3553 = vpop.xlane.xlu0 %3552
    %v3554 = vmax.f32 %v3553, 1e-24
    %v3555 = vrsqrt.pop %v3554
    %v3556 = vmul.f32 %v3555, %v3554
    %v3557 = vmul.f32 %v3556, %v3555
    %v3558 = vmul.f32 0.5, %v3557
    %v3559 = vsub.f32 1.5, %v3558
    %v3560 = vmul.f32 %v3555, %v3559
    %vm3561 = vweird.f32 %v3554
    %vm3562 = vweird.f32 %v3555
    %vm3563 = vmor %vm3561, %vm3562
    %v3564 = vsel %vm3563, %v3555, %v3560
    %v3565 = vmul.f32 %v3499, %v3549
    %v3566 = vmul.f32 %v3532, %v3564
    %s3567 = scalar_lea.vmem [#allocation14], 8
    %3568 = vst [vmem:[%s3567] sm:$0x3] %v3565
    %3569 = vst [vmem:[%s3567 + $0x2] sm:$0x3] %v3566
    // Predicated region
    $region66: #{tpu_custom_call.1} parent=1 // pred_check
      _
    $region67: #{tpu_custom_call.1} parent=1 // pred_check_branch
      %3571 = sbr.rel (0) target = $region69
    $region68: #{tpu_custom_call.1} parent=1 // pred_region
      %3573 = vsyncadd [#allocation4], 0
      %s3574 = sshll.u32 [#allocation14], 4
      %s3575 = int_to_ptr.vmem [resolvable:$true] %s3574
      %s3576 = sshll.u32 %s9, 4
      %s3577 = int_to_ptr.hbm [resolvable:$true] %s3576
      %3582 = dma.vmem_to_hbm [thread:$0]  %s3575, 192, %s3577, [#allocation4], 64, 64, 4
    $region69: #{tpu_custom_call.1} parent=1 // pred_fallthru
      _
    // Predicated region
    $region70: #{tpu_custom_call.1} parent=1 // pred_check
      _
    $region71: #{tpu_custom_call.1} parent=1 // pred_check_branch
      %3584 = sbr.rel (0) target = $region73
    $region72: #{tpu_custom_call.1} parent=1 // pred_region
      %3586 = dma.done [#allocation4], 192
    $region73: #{tpu_custom_call.1} parent=1 // pred_fallthru
      _
    %3587 = vsyncpa [#allocation3], 1
    %3588 = vsyncpa [#allocation6], 1
    %3589 = vsyncpa [#allocation9], 1
    %3590 = vsyncpa [#allocation12], 1
    %3591 = vsyncpa [#allocation4], 1

</llo_original>
